<compile_context>
chip_gen: v6e
topology: v6e:2x2x1
jax: 0.10.0
libtpu: 0.0.40
codegen_flags: <defaults>
</compile_context>

<pallas_src>
import numpy as np
import jax
import jax.numpy as jnp
from jax import lax
from jax.experimental import pallas as pl
from jax.experimental.pallas import tpu as pltpu


# ----------------------------- config -------------------------------------
class Config:
    HIDDEN = 32
    LSTM = False          # Env LSTM branch disabled (see TODO below)
    INEQ = True
    NPOP = 4
    ENT_DIM_GLOBAL = 150  # = 6 * 5 * 5 for a (B,3,7,7) global state


# TODO(synk): the nn.LSTM branch of Env (config.LSTM=True) is not implemented
# as a Pallas kernel; this script uses config.LSTM=False (pure conv+fc path).


# ----------------------------- fused kernel --------------------------------
def _qnet_fused_kernel(xs_ref, xg_ref, iq_ref,
                       mcs_ref, bcs_ref, mcg_ref, bcg_ref,
                       w1s_ref, w1g_ref, wiq_ref, b1_ref,
                       wfc_ref, bfc_ref, wq_ref, bq_ref, out_ref):
    """Entire QNet forward, everything resident in VMEM.

    Env(state)/Env(global): relu(conv) -> flatten -> relu(fc1)
        (conv is a dense matmul whose columns are already in torch's
         channel-major .view(B,-1) order; see prepare_qnet_params)
    fc_ineq:                relu(Linear(NPOP, h))
    torch.cat + fc:         the three branch fc1 weights are zero-padded into
                            block columns of width 3h, so `feat` IS the concat
                            and fc is a single (B,3h)@(3h,h) matmul.
    QNet head:              Linear(h, outDim)
    """
    f32 = jnp.float32

    # conv-as-dense-linear for both Env branches (bias already expanded per
    # flattened output element).
    cs = jnp.maximum(
        jnp.dot(xs_ref[...], mcs_ref[...], preferred_element_type=f32)
        + bcs_ref[...], 0.0)
    cg = jnp.maximum(
        jnp.dot(xg_ref[...], mcg_ref[...], preferred_element_type=f32)
        + bcg_ref[...], 0.0)

    # fc1(state) | fc1(global) | fc_ineq produced directly as one (B, 3h)
    # activation via block-column (zero-padded) weights -> no in-kernel concat.
    feat = jnp.maximum(
        jnp.dot(cs, w1s_ref[...], preferred_element_type=f32)
        + jnp.dot(cg, w1g_ref[...], preferred_element_type=f32)
        + jnp.dot(iq_ref[...], wiq_ref[...], preferred_element_type=f32)
        + b1_ref[...], 0.0)

    # fc: single (B, 3h) @ (3h, h) matmul (was three K=32 matmuls before).
    z = jnp.maximum(
        jnp.dot(feat, wfc_ref[...], preferred_element_type=f32)
        + bfc_ref[...], 0.0)

    # QNet head
    out_ref[...] = (jnp.dot(z, wq_ref[...], preferred_element_type=f32)
                    + bq_ref[...])


# ----------------------------- parameter prep (one-time, host) -------------
def _conv_as_dense(conv_w, conv_b, in_shape):
    """Fold a VALID conv into a dense (C*H*W, Co*Ho*Wo) matrix + bias row.

    Column order matches torch's `relu(conv(x)).view(B, -1)` channel-major
    flatten, so fc1 can use its original (unpermuted) weights and the kernel
    needs no im2col, transpose or reshape.  Built once from the conv applied
    to an identity basis (conv is linear), so indexing is correct by
    construction.
    """
    C, H, W = in_shape
    basis = jnp.eye(C * H * W, dtype=jnp.float32).reshape(C * H * W, C, H, W)
    cols = lax.conv_general_dilated(
        basis, conv_w, window_strides=(1, 1), padding="VALID",
        dimension_numbers=("NCHW", "OIHW", "NCHW"))
    Co, Ho, Wo = cols.shape[1], cols.shape[2], cols.shape[3]
    m = cols.reshape(C * H * W, Co * Ho * Wo)
    b = jnp.repeat(conv_b, Ho * Wo).reshape(1, Co * Ho * Wo)
    return m, b


def prepare_qnet_params(params, state_shape, global_shape):
    """One-time transform from torch-layout params to kernel-ready layout."""
    h = params["w1s"].shape[1]
    out_dim = params["wq"].shape[1]
    f32 = jnp.float32

    m_s, b_s = _conv_as_dense(params["conv_w"], params["conv_b"], state_shape)
    m_g, b_g = _conv_as_dense(params["conv_w_g"], params["conv_b_g"], global_shape)

    # Block-column (zero-padded) fc1/fc_ineq weights implementing torch.cat
    # order (stim, gstim, ineq_h) -> columns [0:h], [h:2h], [2h:3h].
    z = lambda n, m: jnp.zeros((n, m), f32)
    w1s_w = jnp.concatenate([params["w1s"], z(params["w1s"].shape[0], 2 * h)], axis=1)
    w1g_w = jnp.concatenate([z(params["w1g"].shape[0], h), params["w1g"],
                             z(params["w1g"].shape[0], h)], axis=1)
    wiq_w = jnp.concatenate([z(params["wiq"].shape[0], 2 * h), params["wiq"]], axis=1)
    b1_w = jnp.concatenate([params["b1s"], params["b1g"], params["biq"]]).reshape(1, 3 * h)

    # NOTE: for a large-batch / MXU-bound deployment on v6e/v7x these weights
    # could be stored in bf16 (keep preferred_element_type=f32); kept f32 here
    # for exact parity at tiny batch.
    return {
        "conv_m_s": m_s, "conv_b_s": b_s,
        "conv_m_g": m_g, "conv_b_g": b_g,
        "w1s_w": w1s_w, "w1g_w": w1g_w, "wiq_w": wiq_w, "b1_w": b1_w,
        "wfc": params["wfc"], "bfc": params["bfc"].reshape(1, h),
        "wq": params["wq"], "bq": params["bq"].reshape(1, out_dim),
    }


# ----------------------------- forward --------------------------------------
def qnet_forward(prep, state, global_state, actions, ineq):
    del actions  # use_actions=False in this configuration
    B = state.shape[0]
    h = prep["wfc"].shape[1]
    out_dim = prep["wq"].shape[1]

    # Free, layout-preserving flattens of contiguous NCHW inputs.
    xs = state.reshape(B, -1)
    xg = global_state.reshape(B, -1)

    # Advisory cost estimate for the surrounding XLA schedule.
    mm = [(B, prep["conv_m_s"].shape[0], prep["conv_m_s"].shape[1]),
          (B, prep["conv_m_g"].shape[0], prep["conv_m_g"].shape[1]),
          (B, prep["w1s_w"].shape[0], 3 * h),
          (B, prep["w1g_w"].shape[0], 3 * h),
          (B, prep["wiq_w"].shape[0], 3 * h),
          (B, 3 * h, h),
          (B, h, out_dim)]
    flops = int(sum(2 * m * k * n for m, k, n in mm))
    nbytes = int(4 * (sum(int(np.prod(v.shape)) for v in prep.values())
                      + xs.size + xg.size + ineq.size + B * out_dim))
    cost = pl.CostEstimate(flops=flops, transcendentals=0, bytes_accessed=nbytes)

    # Whole arrays resident in VMEM; total footprint ~3 MiB, so no grid/tiling
    # is needed on any generation.  For large B, switch to a row-block grid
    # over the batch with dimension_semantics=("parallel",) so v7x's two
    # TensorCores split it.
    vmem = pl.BlockSpec(memory_space=pltpu.MemorySpace.VMEM)

    return pl.pallas_call(
        _qnet_fused_kernel,
        out_shape=jax.ShapeDtypeStruct((B, out_dim), jnp.float32),
        in_specs=[vmem] * 15,
        out_specs=vmem,
        cost_estimate=cost,
    )(xs, xg, ineq,
      prep["conv_m_s"], prep["conv_b_s"], prep["conv_m_g"], prep["conv_b_g"],
      prep["w1s_w"], prep["w1g_w"], prep["wiq_w"], prep["b1_w"],
      prep["wfc"], prep["bfc"], prep["wq"], prep["bq"])


# ----------------------------- reference (plain JAX) ------------------------
def qnet_reference(params, state, global_state, actions, ineq):
    def env(x, wc, bc, w1, b1):
        y = lax.conv_general_dilated(
            x, wc, window_strides=(1, 1), padding="VALID",
            dimension_numbers=("NCHW", "OIHW", "NCHW")) + bc[None, :, None, None]
        y = jnp.maximum(y, 0.0).reshape(x.shape[0], -1)
        return jnp.maximum(y @ w1 + b1, 0.0)

    stim = env(state, params["conv_w"], params["conv_b"], params["w1s"], params["b1s"])
    gstim = env(global_state, params["conv_w_g"], params["conv_b_g"],
                params["w1g"], params["b1g"])
    iqh = jnp.maximum(ineq @ params["wiq"] + params["biq"], 0.0)
    x = jnp.concatenate([stim, gstim, iqh], axis=1)
    x = jnp.maximum(x @ params["wfc"] + params["bfc"], 0.0)
    return x @ params["wq"] + params["bq"]


# ----------------------------- main -----------------------------------------
if __name__ == "__main__":
    cfg = Config()
    h = cfg.HIDDEN
    action_size, out_dim = 8, 8
    B = 2

    key = jax.random.PRNGKey(0)
    ks = jax.random.split(key, 20)

    def w(k, shape, scale=0.05):
        return (scale * jax.random.normal(k, shape)).astype(jnp.float32)

    params = {
        # envNet: Conv2d(3,6,3x3) + Linear(1014, h)   (1014 = 6*13*13 -> 15x15 input)
        "conv_w": w(ks[0], (6, 3, 3, 3)),
        "conv_b": w(ks[1], (6,)),
        "w1s": w(ks[2], (1014, h)),
        "b1s": w(ks[3], (h,)),
        # envNetGlobal: Conv2d(3,6,3x3) + Linear(ENT_DIM_GLOBAL, h)  (150 = 6*5*5 -> 7x7 input)
        "conv_w_g": w(ks[4], (6, 3, 3, 3)),
        "conv_b_g": w(ks[5], (6,)),
        "w1g": w(ks[6], (cfg.ENT_DIM_GLOBAL, h)),
        "b1g": w(ks[7], (h,)),
        # fc_ineq: Linear(NPOP, h)
        "wiq": w(ks[8], (cfg.NPOP, h)),
        "biq": w(ks[9], (h,)),
        # fc: Linear(3h, h)    (2 env branches + INEQ, use_actions=False)
        "wfc": w(ks[10], (3 * h, h)),
        "bfc": w(ks[11], (h,)),
        # QNet head: Linear(h, outDim)
        "wq": w(ks[12], (h, out_dim)),
        "bq": w(ks[13], (out_dim,)),
    }

    state = jax.random.normal(ks[14], (B, 3, 15, 15), dtype=jnp.float32)
    global_state = jax.random.normal(ks[15], (B, 3, 7, 7), dtype=jnp.float32)
    actions = jax.random.normal(ks[16], (B, (cfg.NPOP - 1) * action_size),
                                dtype=jnp.float32)  # unused (use_actions=False)
    ineq = jax.random.normal(ks[17], (B, cfg.NPOP), dtype=jnp.float32)

    # One-time host-side parameter transform (conv -> dense matrix, block
    # weights for the concat), then a single fused pallas_call per forward.
    prep = prepare_qnet_params(params, state.shape[1:], global_state.shape[1:])

    out = jax.block_until_ready(
        jax.jit(qnet_forward)(prep, state, global_state, actions, ineq))

    ref = jax.block_until_ready(
        qnet_reference(params, state, global_state, actions, ineq))

    assert out.shape == (B, out_dim), out.shape
    assert np.allclose(np.asarray(out), np.asarray(ref), atol=1e-4, rtol=1e-4), (
        np.max(np.abs(np.asarray(out) - np.asarray(ref))))
    print("KERNEL_OK")
</pallas_src>

<mosaic_0001>
module attributes {stable_mosaic.version = 11 : i64} {
  func.func @_qnet_fused_kernel(%arg0: memref<2x675xf32, #tpu.memory_space<vmem>>, %arg1: memref<2x147xf32, #tpu.memory_space<vmem>>, %arg2: memref<2x4xf32, #tpu.memory_space<vmem>>, %arg3: memref<675x1014xf32, #tpu.memory_space<vmem>>, %arg4: memref<1x1014xf32, #tpu.memory_space<vmem>>, %arg5: memref<147x150xf32, #tpu.memory_space<vmem>>, %arg6: memref<1x150xf32, #tpu.memory_space<vmem>>, %arg7: memref<1014x96xf32, #tpu.memory_space<vmem>>, %arg8: memref<150x96xf32, #tpu.memory_space<vmem>>, %arg9: memref<4x96xf32, #tpu.memory_space<vmem>>, %arg10: memref<1x96xf32, #tpu.memory_space<vmem>>, %arg11: memref<96x32xf32, #tpu.memory_space<vmem>>, %arg12: memref<1x32xf32, #tpu.memory_space<vmem>>, %arg13: memref<32x8xf32, #tpu.memory_space<vmem>>, %arg14: memref<1x8xf32, #tpu.memory_space<vmem>>, %arg15: memref<2x8xf32, #tpu.memory_space<vmem>>) attributes {dimension_semantics = [], scalar_prefetch = 0 : i64, scratch_operands = 0 : i64, tpu.core_type = #tpu.core_type<tc>} {
    %c0 = arith.constant 0 : index
    %c0_0 = arith.constant 0 : index
    %0 = vector.load %arg0[%c0, %c0_0] : memref<2x675xf32, #tpu.memory_space<vmem>>, vector<2x675xf32>
    %c0_1 = arith.constant 0 : index
    %c0_2 = arith.constant 0 : index
    %1 = vector.load %arg3[%c0_1, %c0_2] : memref<675x1014xf32, #tpu.memory_space<vmem>>, vector<675x1014xf32>
    %cst = arith.constant dense<0.000000e+00> : vector<2x1014xf32>
    %2 = tpu.matmul %0, %1, %cst {dimension_numbers = #tpu.dot_dimension_numbers<[1], [0], [0], [1], [0, 0, 1, 1], [], []>} : vector<2x675xf32>, vector<675x1014xf32>, vector<2x1014xf32> -> vector<2x1014xf32>
    %c0_3 = arith.constant 0 : index
    %c0_4 = arith.constant 0 : index
    %3 = vector.load %arg4[%c0_3, %c0_4] : memref<1x1014xf32, #tpu.memory_space<vmem>>, vector<1x1014xf32>
    %4 = vector.broadcast %3 : vector<1x1014xf32> to vector<2x1014xf32>
    %5 = arith.addf %2, %4 : vector<2x1014xf32>
    %cst_5 = arith.constant 0.000000e+00 : f32
    %6 = vector.broadcast %cst_5 : f32 to vector<2x1014xf32>
    %7 = arith.maximumf %5, %6 : vector<2x1014xf32>
    %c0_6 = arith.constant 0 : index
    %c0_7 = arith.constant 0 : index
    %8 = vector.load %arg1[%c0_6, %c0_7] : memref<2x147xf32, #tpu.memory_space<vmem>>, vector<2x147xf32>
    %c0_8 = arith.constant 0 : index
    %c0_9 = arith.constant 0 : index
    %9 = vector.load %arg5[%c0_8, %c0_9] : memref<147x150xf32, #tpu.memory_space<vmem>>, vector<147x150xf32>
    %cst_10 = arith.constant dense<0.000000e+00> : vector<2x150xf32>
    %10 = tpu.matmul %8, %9, %cst_10 {dimension_numbers = #tpu.dot_dimension_numbers<[1], [0], [0], [1], [0, 0, 1, 1], [], []>} : vector<2x147xf32>, vector<147x150xf32>, vector<2x150xf32> -> vector<2x150xf32>
    %c0_11 = arith.constant 0 : index
    %c0_12 = arith.constant 0 : index
    %11 = vector.load %arg6[%c0_11, %c0_12] : memref<1x150xf32, #tpu.memory_space<vmem>>, vector<1x150xf32>
    %12 = vector.broadcast %11 : vector<1x150xf32> to vector<2x150xf32>
    %13 = arith.addf %10, %12 : vector<2x150xf32>
    %cst_13 = arith.constant 0.000000e+00 : f32
    %14 = vector.broadcast %cst_13 : f32 to vector<2x150xf32>
    %15 = arith.maximumf %13, %14 : vector<2x150xf32>
    %c0_14 = arith.constant 0 : index
    %c0_15 = arith.constant 0 : index
    %16 = vector.load %arg7[%c0_14, %c0_15] : memref<1014x96xf32, #tpu.memory_space<vmem>>, vector<1014x96xf32>
    %cst_16 = arith.constant dense<0.000000e+00> : vector<2x96xf32>
    %17 = tpu.matmul %7, %16, %cst_16 {dimension_numbers = #tpu.dot_dimension_numbers<[1], [0], [0], [1], [0, 0, 1, 1], [], []>} : vector<2x1014xf32>, vector<1014x96xf32>, vector<2x96xf32> -> vector<2x96xf32>
    %c0_17 = arith.constant 0 : index
    %c0_18 = arith.constant 0 : index
    %18 = vector.load %arg8[%c0_17, %c0_18] : memref<150x96xf32, #tpu.memory_space<vmem>>, vector<150x96xf32>
    %cst_19 = arith.constant dense<0.000000e+00> : vector<2x96xf32>
    %19 = tpu.matmul %15, %18, %cst_19 {dimension_numbers = #tpu.dot_dimension_numbers<[1], [0], [0], [1], [0, 0, 1, 1], [], []>} : vector<2x150xf32>, vector<150x96xf32>, vector<2x96xf32> -> vector<2x96xf32>
    %20 = arith.addf %17, %19 : vector<2x96xf32>
    %c0_20 = arith.constant 0 : index
    %c0_21 = arith.constant 0 : index
    %21 = vector.load %arg2[%c0_20, %c0_21] : memref<2x4xf32, #tpu.memory_space<vmem>>, vector<2x4xf32>
    %c0_22 = arith.constant 0 : index
    %c0_23 = arith.constant 0 : index
    %22 = vector.load %arg9[%c0_22, %c0_23] : memref<4x96xf32, #tpu.memory_space<vmem>>, vector<4x96xf32>
    %cst_24 = arith.constant dense<0.000000e+00> : vector<2x96xf32>
    %23 = tpu.matmul %21, %22, %cst_24 {dimension_numbers = #tpu.dot_dimension_numbers<[1], [0], [0], [1], [0, 0, 1, 1], [], []>} : vector<2x4xf32>, vector<4x96xf32>, vector<2x96xf32> -> vector<2x96xf32>
    %24 = arith.addf %20, %23 : vector<2x96xf32>
    %c0_25 = arith.constant 0 : index
    %c0_26 = arith.constant 0 : index
    %25 = vector.load %arg10[%c0_25, %c0_26] : memref<1x96xf32, #tpu.memory_space<vmem>>, vector<1x96xf32>
    %26 = vector.broadcast %25 : vector<1x96xf32> to vector<2x96xf32>
    %27 = arith.addf %24, %26 : vector<2x96xf32>
    %cst_27 = arith.constant 0.000000e+00 : f32
    %28 = vector.broadcast %cst_27 : f32 to vector<2x96xf32>
    %29 = arith.maximumf %27, %28 : vector<2x96xf32>
    %c0_28 = arith.constant 0 : index
    %c0_29 = arith.constant 0 : index
    %30 = vector.load %arg11[%c0_28, %c0_29] : memref<96x32xf32, #tpu.memory_space<vmem>>, vector<96x32xf32>
    %cst_30 = arith.constant dense<0.000000e+00> : vector<2x32xf32>
    %31 = tpu.matmul %29, %30, %cst_30 {dimension_numbers = #tpu.dot_dimension_numbers<[1], [0], [0], [1], [0, 0, 1, 1], [], []>} : vector<2x96xf32>, vector<96x32xf32>, vector<2x32xf32> -> vector<2x32xf32>
    %c0_31 = arith.constant 0 : index
    %c0_32 = arith.constant 0 : index
    %32 = vector.load %arg12[%c0_31, %c0_32] : memref<1x32xf32, #tpu.memory_space<vmem>>, vector<1x32xf32>
    %33 = vector.broadcast %32 : vector<1x32xf32> to vector<2x32xf32>
    %34 = arith.addf %31, %33 : vector<2x32xf32>
    %cst_33 = arith.constant 0.000000e+00 : f32
    %35 = vector.broadcast %cst_33 : f32 to vector<2x32xf32>
    %36 = arith.maximumf %34, %35 : vector<2x32xf32>
    %c0_34 = arith.constant 0 : index
    %c0_35 = arith.constant 0 : index
    %37 = vector.load %arg13[%c0_34, %c0_35] : memref<32x8xf32, #tpu.memory_space<vmem>>, vector<32x8xf32>
    %cst_36 = arith.constant dense<0.000000e+00> : vector<2x8xf32>
    %38 = tpu.matmul %36, %37, %cst_36 {dimension_numbers = #tpu.dot_dimension_numbers<[1], [0], [0], [1], [0, 0, 1, 1], [], []>} : vector<2x32xf32>, vector<32x8xf32>, vector<2x8xf32> -> vector<2x8xf32>
    %c0_37 = arith.constant 0 : index
    %c0_38 = arith.constant 0 : index
    %39 = vector.load %arg14[%c0_37, %c0_38] : memref<1x8xf32, #tpu.memory_space<vmem>>, vector<1x8xf32>
    %40 = vector.broadcast %39 : vector<1x8xf32> to vector<2x8xf32>
    %41 = arith.addf %38, %40 : vector<2x8xf32>
    %c0_39 = arith.constant 0 : index
    %c0_40 = arith.constant 0 : index
    %42 = vector.load %arg15[%c0_39, %c0_40] : memref<2x8xf32, #tpu.memory_space<vmem>>, vector<2x8xf32>
    tpu.vector_store %arg15[%c0_39, %c0_40], %41 {strides = array<i32>} : memref<2x8xf32, #tpu.memory_space<vmem>>, vector<2x8xf32>,
    return
  }
}

</mosaic_0001>

<llo_original>
// kernel: qnet_forward.1
$region0: #{qnet_forward.1}
  #allocation0 [shape = 'u32[]', space=smem, size = 0x4, offset = 0x4, fixed_abs, tag = 'smem constant byte address 0x4 - core index']
  #allocation1 [shape = 'u32[144,128]{1,0:T(1,128)}', space=vmem, size = 0x12000, scoped, tag = 'internal scratch']
  %s0 = inlined_call_operand.vmem [shape: f32[2,675], index: 0, kind: input, shape index: {}]
  %s1 = inlined_call_operand.vmem [shape: f32[2,147], index: 1, kind: input, shape index: {}]
  %s2 = inlined_call_operand.hbm [shape: f32[2,4], index: 2, kind: input, shape index: {}]
  %s3 = inlined_call_operand.hbm [shape: f32[675,1014], index: 3, kind: input, shape index: {}]
  %s4 = inlined_call_operand.hbm [shape: f32[1,1014], index: 4, kind: input, shape index: {}]
  %s5 = inlined_call_operand.hbm [shape: f32[147,150], index: 5, kind: input, shape index: {}]
  %s6 = inlined_call_operand.hbm [shape: f32[1,150], index: 6, kind: input, shape index: {}]
  %s7 = inlined_call_operand.vmem [shape: f32[1014,96], index: 7, kind: input, shape index: {}]
  %s8 = inlined_call_operand.hbm [shape: f32[150,96], index: 8, kind: input, shape index: {}]
  %s9 = inlined_call_operand.hbm [shape: f32[4,96], index: 9, kind: input, shape index: {}]
  %s10 = inlined_call_operand.hbm [shape: f32[1,96], index: 10, kind: input, shape index: {}]
  %s11 = inlined_call_operand.vmem [shape: f32[96,32], index: 11, kind: input, shape index: {}]
  %s12 = inlined_call_operand.hbm [shape: f32[1,32], index: 12, kind: input, shape index: {}]
  %s13 = inlined_call_operand.vmem [shape: f32[32,8], index: 13, kind: input, shape index: {}]
  %s14 = inlined_call_operand.hbm [shape: f32[1,8], index: 14, kind: input, shape index: {}]
  %s15 = inlined_call_operand.hbm [shape: f32[2,8], index: 15, kind: output, shape index: {}]
  %s16 = sld [smem:[#allocation0]]
  $region110: #{qnet_forward.1} parent=0
    _
  %s18 = ssub.s32 1, %s16
  %s19 = scalar_select 0, %s18, %s16
  $region1: #{qnet_forward.1} parent=0
    #allocation2 [shape = 'u8[1024]{0}', space=vmem, size = 0x400, scoped, tag = 'input window, operand 2, single buffered']
    #allocation3 [shape = 's32[1]{0}', space=sflag, size = 0x4, scoped, tag = 'scoped memory for qnet_forward.1']
    #allocation4 [shape = 's32[1]{0}', space=sflag, size = 0x4, scoped, tag = 'scoped memory for qnet_forward.1']
    #allocation5 [shape = 'u8[2785280]{0}', space=vmem, size = 0x2a8000, scoped, tag = 'input window, operand 3, single buffered']
    #allocation6 [shape = 's32[1]{0}', space=sflag, size = 0x4, scoped, tag = 'scoped memory for qnet_forward.1']
    #allocation7 [shape = 'u8[4096]{0}', space=vmem, size = 0x1000, scoped, tag = 'input window, operand 4, single buffered']
    #allocation8 [shape = 'u8[155648]{0}', space=vmem, size = 0x26000, scoped, tag = 'input window, operand 5, single buffered']
    #allocation9 [shape = 's32[1]{0}', space=sflag, size = 0x4, scoped, tag = 'scoped memory for qnet_forward.1']
    #allocation10 [shape = 'u8[1024]{0}', space=vmem, size = 0x400, scoped, tag = 'input window, operand 6, single buffered']
    #allocation11 [shape = 'u8[77824]{0}', space=vmem, size = 0x13000, scoped, tag = 'input window, operand 8, single buffered']
    #allocation12 [shape = 's32[1]{0}', space=sflag, size = 0x4, scoped, tag = 'scoped memory for qnet_forward.1']
    #allocation13 [shape = 'u8[2048]{0}', space=vmem, size = 0x800, scoped, tag = 'input window, operand 9, single buffered']
    #allocation14 [shape = 'u8[512]{0}', space=vmem, size = 0x400, scoped, tag = 'input window, operand 10, single buffered']
    #allocation15 [shape = 's32[1]{0}', space=sflag, size = 0x4, scoped, tag = 'scoped memory for qnet_forward.1']
    #allocation16 [shape = 'u8[512]{0}', space=vmem, size = 0x400, scoped, tag = 'input window, operand 12, single buffered']
    #allocation17 [shape = 'u8[512]{0}', space=vmem, size = 0x400, scoped, tag = 'input window, operand 14, single buffered']
    #allocation18 [shape = 's32[1]{0}', space=sflag, size = 0x4, scoped, tag = 'scoped memory for qnet_forward.1']
    #allocation19 [shape = 'u8[1024]{0}', space=vmem, size = 0x400, scoped, tag = 'output window, operand 0, single buffered']
    %20 = vsyncpa [#allocation3], 0
    %21 = vsyncpa [#allocation6], 0
    %22 = vsyncpa [#allocation9], 0
    %23 = vsyncpa [#allocation12], 0
    %24 = vsyncpa [#allocation15], 0
    %25 = vsyncpa [#allocation18], 0
    %26 = vsyncpa [#allocation4], 0
    // Predicated region
    $region2: #{qnet_forward.1} parent=1 // pred_check
      _
    $region3: #{qnet_forward.1} parent=1 // pred_check_branch
      %28 = sbr.rel (0) target = $region5
    $region4: #{qnet_forward.1} parent=1 // pred_region
      _
    $region5: #{qnet_forward.1} parent=1 // pred_fallthru
      _
    // Predicated region
    $region6: #{qnet_forward.1} parent=1 // pred_check
      _
    $region7: #{qnet_forward.1} parent=1 // pred_check_branch
      %30 = sbr.rel (0) target = $region9
    $region8: #{qnet_forward.1} parent=1 // pred_region
      _
    $region9: #{qnet_forward.1} parent=1 // pred_fallthru
      _
    // Predicated region
    $region10: #{qnet_forward.1} parent=1 // pred_check
      _
    $region11: #{qnet_forward.1} parent=1 // pred_check_branch
      %32 = sbr.rel (0) target = $region13
    $region12: #{qnet_forward.1} parent=1 // pred_region
      %s34 = ssub.s32 32, 32
      %35 = vsyncadd [#allocation3], %s34
      %s37 = sshll.u32 [#allocation2], 4
      %s38 = int_to_ptr.vmem [resolvable:$true] %s37
      %40 = dma.hbm_to_vmem [thread:$0]  %s2, 32, %s38, [#allocation3]
    $region13: #{qnet_forward.1} parent=1 // pred_fallthru
      _
    // Predicated region
    $region14: #{qnet_forward.1} parent=1 // pred_check
      _
    $region15: #{qnet_forward.1} parent=1 // pred_check_branch
      %42 = sbr.rel (0) target = $region17
    $region16: #{qnet_forward.1} parent=1 // pred_region
      %s44 = ssub.s32 87040, 87040
      %45 = vsyncadd [#allocation6], %s44
      %s46 = sshll.u32 [#allocation5], 4
      %s47 = int_to_ptr.vmem [resolvable:$true] %s46
      %52 = dma.hbm_to_vmem [thread:$0]  %s3, 87040, %s47, [#allocation6], 1024, 1024, 64
    $region17: #{qnet_forward.1} parent=1 // pred_fallthru
      _
    // Predicated region
    $region18: #{qnet_forward.1} parent=1 // pred_check
      _
    $region19: #{qnet_forward.1} parent=1 // pred_check_branch
      %54 = sbr.rel (0) target = $region21
    $region20: #{qnet_forward.1} parent=1 // pred_region
      %s56 = ssub.s32 128, 128
      %57 = vsyncadd [#allocation6], %s56
      %s59 = sshll.u32 [#allocation7], 4
      %s60 = int_to_ptr.vmem [resolvable:$true] %s59
      %62 = dma.hbm_to_vmem [thread:$0]  %s4, 128, %s60, [#allocation6]
    $region21: #{qnet_forward.1} parent=1 // pred_fallthru
      _
    // Predicated region
    $region22: #{qnet_forward.1} parent=1 // pred_check
      _
    $region23: #{qnet_forward.1} parent=1 // pred_check_branch
      %64 = sbr.rel (0) target = $region25
    $region24: #{qnet_forward.1} parent=1 // pred_region
      %s66 = ssub.s32 4864, 4864
      %67 = vsyncadd [#allocation9], %s66
      %s68 = sshll.u32 [#allocation8], 4
      %s69 = int_to_ptr.vmem [resolvable:$true] %s68
      %74 = dma.hbm_to_vmem [thread:$0]  %s5, 4864, %s69, [#allocation9], 256, 256, 16
    $region25: #{qnet_forward.1} parent=1 // pred_fallthru
      _
    // Predicated region
    $region26: #{qnet_forward.1} parent=1 // pred_check
      _
    $region27: #{qnet_forward.1} parent=1 // pred_check_branch
      %76 = sbr.rel (0) target = $region29
    $region28: #{qnet_forward.1} parent=1 // pred_region
      %s78 = ssub.s32 32, 32
      %79 = vsyncadd [#allocation9], %s78
      %s81 = sshll.u32 [#allocation10], 4
      %s82 = int_to_ptr.vmem [resolvable:$true] %s81
      %84 = dma.hbm_to_vmem [thread:$0]  %s6, 32, %s82, [#allocation9]
    $region29: #{qnet_forward.1} parent=1 // pred_fallthru
      _
    // Predicated region
    $region30: #{qnet_forward.1} parent=1 // pred_check
      _
    $region31: #{qnet_forward.1} parent=1 // pred_check_branch
      %86 = sbr.rel (0) target = $region33
    $region32: #{qnet_forward.1} parent=1 // pred_region
      _
    $region33: #{qnet_forward.1} parent=1 // pred_fallthru
      _
    // Predicated region
    $region34: #{qnet_forward.1} parent=1 // pred_check
      _
    $region35: #{qnet_forward.1} parent=1 // pred_check_branch
      %88 = sbr.rel (0) target = $region37
    $region36: #{qnet_forward.1} parent=1 // pred_region
      %s90 = ssub.s32 2432, 2432
      %91 = vsyncadd [#allocation12], %s90
      %s92 = sshll.u32 [#allocation11], 4
      %s93 = int_to_ptr.vmem [resolvable:$true] %s92
      %98 = dma.hbm_to_vmem [thread:$0]  %s8, 2432, %s93, [#allocation12], 128, 128, 8
    $region37: #{qnet_forward.1} parent=1 // pred_fallthru
      _
    // Predicated region
    $region38: #{qnet_forward.1} parent=1 // pred_check
      _
    $region39: #{qnet_forward.1} parent=1 // pred_check_branch
      %100 = sbr.rel (0) target = $region41
    $region40: #{qnet_forward.1} parent=1 // pred_region
      %s102 = ssub.s32 64, 64
      %103 = vsyncadd [#allocation12], %s102
      %s105 = sshll.u32 [#allocation13], 4
      %s106 = int_to_ptr.vmem [resolvable:$true] %s105
      %108 = dma.hbm_to_vmem [thread:$0]  %s9, 64, %s106, [#allocation12]
    $region41: #{qnet_forward.1} parent=1 // pred_fallthru
      _
    // Predicated region
    $region42: #{qnet_forward.1} parent=1 // pred_check
      _
    $region43: #{qnet_forward.1} parent=1 // pred_check_branch
      %110 = sbr.rel (0) target = $region45
    $region44: #{qnet_forward.1} parent=1 // pred_region
      %s112 = ssub.s32 16, 16
      %113 = vsyncadd [#allocation15], %s112
      %s115 = sshll.u32 [#allocation14], 4
      %s116 = int_to_ptr.vmem [resolvable:$true] %s115
      %118 = dma.hbm_to_vmem [thread:$0]  %s10, 16, %s116, [#allocation15]
    $region45: #{qnet_forward.1} parent=1 // pred_fallthru
      _
    // Predicated region
    $region46: #{qnet_forward.1} parent=1 // pred_check
      _
    $region47: #{qnet_forward.1} parent=1 // pred_check_branch
      %120 = sbr.rel (0) target = $region49
    $region48: #{qnet_forward.1} parent=1 // pred_region
      _
    $region49: #{qnet_forward.1} parent=1 // pred_fallthru
      _
    // Predicated region
    $region50: #{qnet_forward.1} parent=1 // pred_check
      _
    $region51: #{qnet_forward.1} parent=1 // pred_check_branch
      %122 = sbr.rel (0) target = $region53
    $region52: #{qnet_forward.1} parent=1 // pred_region
      %s124 = ssub.s32 16, 16
      %125 = vsyncadd [#allocation15], %s124
      %s127 = sshll.u32 [#allocation16], 4
      %s128 = int_to_ptr.vmem [resolvable:$true] %s127
      %130 = dma.hbm_to_vmem [thread:$0]  %s12, 16, %s128, [#allocation15]
    $region53: #{qnet_forward.1} parent=1 // pred_fallthru
      _
    // Predicated region
    $region54: #{qnet_forward.1} parent=1 // pred_check
      _
    $region55: #{qnet_forward.1} parent=1 // pred_check_branch
      %132 = sbr.rel (0) target = $region57
    $region56: #{qnet_forward.1} parent=1 // pred_region
      _
    $region57: #{qnet_forward.1} parent=1 // pred_fallthru
      _
    // Predicated region
    $region58: #{qnet_forward.1} parent=1 // pred_check
      _
    $region59: #{qnet_forward.1} parent=1 // pred_check_branch
      %134 = sbr.rel (0) target = $region61
    $region60: #{qnet_forward.1} parent=1 // pred_region
      %s136 = ssub.s32 16, 16
      %137 = vsyncadd [#allocation18], %s136
      %s139 = sshll.u32 [#allocation17], 4
      %s140 = int_to_ptr.vmem [resolvable:$true] %s139
      %142 = dma.hbm_to_vmem [thread:$0]  %s14, 16, %s140, [#allocation18]
    $region61: #{qnet_forward.1} parent=1 // pred_fallthru
      _
    // Predicated region
    $region62: #{qnet_forward.1} parent=1 // pred_check
      _
    $region63: #{qnet_forward.1} parent=1 // pred_check_branch
      %144 = sbr.rel (0) target = $region65
    $region64: #{qnet_forward.1} parent=1 // pred_region
      %145 = dma.done [#allocation3], 32
    $region65: #{qnet_forward.1} parent=1 // pred_fallthru
      _
    // Predicated region
    $region66: #{qnet_forward.1} parent=1 // pred_check
      _
    $region67: #{qnet_forward.1} parent=1 // pred_check_branch
      %147 = sbr.rel (0) target = $region69
    $region68: #{qnet_forward.1} parent=1 // pred_region
      %148 = dma.done [#allocation6], 87040
    $region69: #{qnet_forward.1} parent=1 // pred_fallthru
      _
    // Predicated region
    $region70: #{qnet_forward.1} parent=1 // pred_check
      _
    $region71: #{qnet_forward.1} parent=1 // pred_check_branch
      %150 = sbr.rel (0) target = $region73
    $region72: #{qnet_forward.1} parent=1 // pred_region
      %151 = dma.done [#allocation6], 128
    $region73: #{qnet_forward.1} parent=1 // pred_fallthru
      _
    // Predicated region
    $region74: #{qnet_forward.1} parent=1 // pred_check
      _
    $region75: #{qnet_forward.1} parent=1 // pred_check_branch
      %153 = sbr.rel (0) target = $region77
    $region76: #{qnet_forward.1} parent=1 // pred_region
      %154 = dma.done [#allocation9], 4864
    $region77: #{qnet_forward.1} parent=1 // pred_fallthru
      _
    // Predicated region
    $region78: #{qnet_forward.1} parent=1 // pred_check
      _
    $region79: #{qnet_forward.1} parent=1 // pred_check_branch
      %156 = sbr.rel (0) target = $region81
    $region80: #{qnet_forward.1} parent=1 // pred_region
      %157 = dma.done [#allocation9], 32
    $region81: #{qnet_forward.1} parent=1 // pred_fallthru
      _
    // Predicated region
    $region82: #{qnet_forward.1} parent=1 // pred_check
      _
    $region83: #{qnet_forward.1} parent=1 // pred_check_branch
      %159 = sbr.rel (0) target = $region85
    $region84: #{qnet_forward.1} parent=1 // pred_region
      %160 = dma.done [#allocation12], 2432
    $region85: #{qnet_forward.1} parent=1 // pred_fallthru
      _
    // Predicated region
    $region86: #{qnet_forward.1} parent=1 // pred_check
      _
    $region87: #{qnet_forward.1} parent=1 // pred_check_branch
      %162 = sbr.rel (0) target = $region89
    $region88: #{qnet_forward.1} parent=1 // pred_region
      %163 = dma.done [#allocation12], 64
    $region89: #{qnet_forward.1} parent=1 // pred_fallthru
      _
    // Predicated region
    $region90: #{qnet_forward.1} parent=1 // pred_check
      _
    $region91: #{qnet_forward.1} parent=1 // pred_check_branch
      %165 = sbr.rel (0) target = $region93
    $region92: #{qnet_forward.1} parent=1 // pred_region
      %166 = dma.done [#allocation15], 16
    $region93: #{qnet_forward.1} parent=1 // pred_fallthru
      _
    // Predicated region
    $region94: #{qnet_forward.1} parent=1 // pred_check
      _
    $region95: #{qnet_forward.1} parent=1 // pred_check_branch
      %168 = sbr.rel (0) target = $region97
    $region96: #{qnet_forward.1} parent=1 // pred_region
      %169 = dma.done [#allocation15], 16
    $region97: #{qnet_forward.1} parent=1 // pred_fallthru
      _
    // Predicated region
    $region98: #{qnet_forward.1} parent=1 // pred_check
      _
    $region99: #{qnet_forward.1} parent=1 // pred_check_branch
      %171 = sbr.rel (0) target = $region101
    $region100: #{qnet_forward.1} parent=1 // pred_region
      %172 = dma.done [#allocation18], 16
    $region101: #{qnet_forward.1} parent=1 // pred_fallthru
      _
    %v173 = vld [vmem:[%s0] sm:$0xff]
    %v174 = vld [vmem:[%s0 + $0x8] sm:$0xf]
    %v175 = vld [vmem:[#allocation5] sm:$0xff]
    %v176 = vld [vmem:[#allocation5 + $0x8] sm:$0xff]
    %v177 = vld [vmem:[#allocation5 + $0x10] sm:$0xff]
    %v178 = vld [vmem:[#allocation5 + $0x18] sm:$0xff]
    %v179 = vld [vmem:[#allocation5 + $0x20] sm:$0xff]
    %v180 = vld [vmem:[#allocation5 + $0x28] sm:$0xff]
    %v181 = vld [vmem:[#allocation5 + $0x30] sm:$0xff]
    %v182 = vld [vmem:[#allocation5 + $0x38] sm:$0xff]
    %v183 = vld [vmem:[#allocation5 + $0x40] sm:$0xff]
    %v184 = vld [vmem:[#allocation5 + $0x48] sm:$0xff]
    %v185 = vld [vmem:[#allocation5 + $0x50] sm:$0xff]
    %v186 = vld [vmem:[#allocation5 + $0x58] sm:$0xff]
    %v187 = vld [vmem:[#allocation5 + $0x60] sm:$0xff]
    %v188 = vld [vmem:[#allocation5 + $0x68] sm:$0xff]
    %v189 = vld [vmem:[#allocation5 + $0x70] sm:$0xff]
    %v190 = vld [vmem:[#allocation5 + $0x78] sm:$0xff]
    %v191 = vld [vmem:[#allocation5 + $0x80] sm:$0xff]
    %v192 = vld [vmem:[#allocation5 + $0x88] sm:$0xff]
    %v193 = vld [vmem:[#allocation5 + $0x90] sm:$0xff]
    %v194 = vld [vmem:[#allocation5 + $0x98] sm:$0xff]
    %v195 = vld [vmem:[#allocation5 + $0xa0] sm:$0xff]
    %v196 = vld [vmem:[#allocation5 + $0xa8] sm:$0xff]
    %v197 = vld [vmem:[#allocation5 + $0xb0] sm:$0xff]
    %v198 = vld [vmem:[#allocation5 + $0xb8] sm:$0xff]
    %v199 = vld [vmem:[#allocation5 + $0xc0] sm:$0xff]
    %v200 = vld [vmem:[#allocation5 + $0xc8] sm:$0xff]
    %v201 = vld [vmem:[#allocation5 + $0xd0] sm:$0xff]
    %v202 = vld [vmem:[#allocation5 + $0xd8] sm:$0xff]
    %v203 = vld [vmem:[#allocation5 + $0xe0] sm:$0xff]
    %v204 = vld [vmem:[#allocation5 + $0xe8] sm:$0xff]
    %v205 = vld [vmem:[#allocation5 + $0xf0] sm:$0xff]
    %v206 = vld [vmem:[#allocation5 + $0xf8] sm:$0xff]
    %v207 = vld [vmem:[#allocation5 + $0x100] sm:$0xff]
    %v208 = vld [vmem:[#allocation5 + $0x108] sm:$0xff]
    %v209 = vld [vmem:[#allocation5 + $0x110] sm:$0xff]
    %v210 = vld [vmem:[#allocation5 + $0x118] sm:$0xff]
    %v211 = vld [vmem:[#allocation5 + $0x120] sm:$0xff]
    %v212 = vld [vmem:[#allocation5 + $0x128] sm:$0xff]
    %v213 = vld [vmem:[#allocation5 + $0x130] sm:$0xff]
    %v214 = vld [vmem:[#allocation5 + $0x138] sm:$0xff]
    %v215 = vld [vmem:[#allocation5 + $0x140] sm:$0xff]
    %v216 = vld [vmem:[#allocation5 + $0x148] sm:$0xff]
    %v217 = vld [vmem:[#allocation5 + $0x150] sm:$0xff]
    %v218 = vld [vmem:[#allocation5 + $0x158] sm:$0xff]
    %v219 = vld [vmem:[#allocation5 + $0x160] sm:$0xff]
    %v220 = vld [vmem:[#allocation5 + $0x168] sm:$0xff]
    %v221 = vld [vmem:[#allocation5 + $0x170] sm:$0xff]
    %v222 = vld [vmem:[#allocation5 + $0x178] sm:$0xff]
    %v223 = vld [vmem:[#allocation5 + $0x180] sm:$0xff]
    %v224 = vld [vmem:[#allocation5 + $0x188] sm:$0xff]
    %v225 = vld [vmem:[#allocation5 + $0x190] sm:$0xff]
    %v226 = vld [vmem:[#allocation5 + $0x198] sm:$0xff]
    %v227 = vld [vmem:[#allocation5 + $0x1a0] sm:$0xff]
    %v228 = vld [vmem:[#allocation5 + $0x1a8] sm:$0xff]
    %v229 = vld [vmem:[#allocation5 + $0x1b0] sm:$0xff]
    %v230 = vld [vmem:[#allocation5 + $0x1b8] sm:$0xff]
    %v231 = vld [vmem:[#allocation5 + $0x1c0] sm:$0xff]
    %v232 = vld [vmem:[#allocation5 + $0x1c8] sm:$0xff]
    %v233 = vld [vmem:[#allocation5 + $0x1d0] sm:$0xff]
    %v234 = vld [vmem:[#allocation5 + $0x1d8] sm:$0xff]
    %v235 = vld [vmem:[#allocation5 + $0x1e0] sm:$0xff]
    %v236 = vld [vmem:[#allocation5 + $0x1e8] sm:$0xff]
    %v237 = vld [vmem:[#allocation5 + $0x1f0] sm:$0xff]
    %v238 = vld [vmem:[#allocation5 + $0x1f8] sm:$0xff]
    %v239 = vld [vmem:[#allocation5 + $0x200] sm:$0xff]
    %v240 = vld [vmem:[#allocation5 + $0x208] sm:$0xff]
    %v241 = vld [vmem:[#allocation5 + $0x210] sm:$0xff]
    %v242 = vld [vmem:[#allocation5 + $0x218] sm:$0xff]
    %v243 = vld [vmem:[#allocation5 + $0x220] sm:$0xff]
    %v244 = vld [vmem:[#allocation5 + $0x228] sm:$0xff]
    %v245 = vld [vmem:[#allocation5 + $0x230] sm:$0xff]
    %v246 = vld [vmem:[#allocation5 + $0x238] sm:$0xff]
    %v247 = vld [vmem:[#allocation5 + $0x240] sm:$0xff]
    %v248 = vld [vmem:[#allocation5 + $0x248] sm:$0xff]
    %v249 = vld [vmem:[#allocation5 + $0x250] sm:$0xff]
    %v250 = vld [vmem:[#allocation5 + $0x258] sm:$0xff]
    %v251 = vld [vmem:[#allocation5 + $0x260] sm:$0xff]
    %v252 = vld [vmem:[#allocation5 + $0x268] sm:$0xff]
    %v253 = vld [vmem:[#allocation5 + $0x270] sm:$0xff]
    %v254 = vld [vmem:[#allocation5 + $0x278] sm:$0xff]
    %v255 = vld [vmem:[#allocation5 + $0x280] sm:$0xff]
    %v256 = vld [vmem:[#allocation5 + $0x288] sm:$0xff]
    %v257 = vld [vmem:[#allocation5 + $0x290] sm:$0xff]
    %v258 = vld [vmem:[#allocation5 + $0x298] sm:$0xff]
    %v259 = vld [vmem:[#allocation5 + $0x2a0] sm:$0xff]
    %v260 = vld [vmem:[#allocation5 + $0x2a8] sm:$0xff]
    %v261 = vld [vmem:[#allocation5 + $0x2b0] sm:$0xff]
    %v262 = vld [vmem:[#allocation5 + $0x2b8] sm:$0xff]
    %v263 = vld [vmem:[#allocation5 + $0x2c0] sm:$0xff]
    %v264 = vld [vmem:[#allocation5 + $0x2c8] sm:$0xff]
    %v265 = vld [vmem:[#allocation5 + $0x2d0] sm:$0xff]
    %v266 = vld [vmem:[#allocation5 + $0x2d8] sm:$0xff]
    %v267 = vld [vmem:[#allocation5 + $0x2e0] sm:$0xff]
    %v268 = vld [vmem:[#allocation5 + $0x2e8] sm:$0xff]
    %v269 = vld [vmem:[#allocation5 + $0x2f0] sm:$0xff]
    %v270 = vld [vmem:[#allocation5 + $0x2f8] sm:$0xff]
    %v271 = vld [vmem:[#allocation5 + $0x300] sm:$0xff]
    %v272 = vld [vmem:[#allocation5 + $0x308] sm:$0xff]
    %v273 = vld [vmem:[#allocation5 + $0x310] sm:$0xff]
    %v274 = vld [vmem:[#allocation5 + $0x318] sm:$0xff]
    %v275 = vld [vmem:[#allocation5 + $0x320] sm:$0xff]
    %v276 = vld [vmem:[#allocation5 + $0x328] sm:$0xff]
    %v277 = vld [vmem:[#allocation5 + $0x330] sm:$0xff]
    %v278 = vld [vmem:[#allocation5 + $0x338] sm:$0xff]
    %v279 = vld [vmem:[#allocation5 + $0x340] sm:$0xff]
    %v280 = vld [vmem:[#allocation5 + $0x348] sm:$0xff]
    %v281 = vld [vmem:[#allocation5 + $0x350] sm:$0xff]
    %v282 = vld [vmem:[#allocation5 + $0x358] sm:$0xff]
    %v283 = vld [vmem:[#allocation5 + $0x360] sm:$0xff]
    %v284 = vld [vmem:[#allocation5 + $0x368] sm:$0xff]
    %v285 = vld [vmem:[#allocation5 + $0x370] sm:$0xff]
    %v286 = vld [vmem:[#allocation5 + $0x378] sm:$0xff]
    %v287 = vld [vmem:[#allocation5 + $0x380] sm:$0xff]
    %v288 = vld [vmem:[#allocation5 + $0x388] sm:$0xff]
    %v289 = vld [vmem:[#allocation5 + $0x390] sm:$0xff]
    %v290 = vld [vmem:[#allocation5 + $0x398] sm:$0xff]
    %v291 = vld [vmem:[#allocation5 + $0x3a0] sm:$0xff]
    %v292 = vld [vmem:[#allocation5 + $0x3a8] sm:$0xff]
    %v293 = vld [vmem:[#allocation5 + $0x3b0] sm:$0xff]
    %v294 = vld [vmem:[#allocation5 + $0x3b8] sm:$0xff]
    %v295 = vld [vmem:[#allocation5 + $0x3c0] sm:$0xff]
    %v296 = vld [vmem:[#allocation5 + $0x3c8] sm:$0xff]
    %v297 = vld [vmem:[#allocation5 + $0x3d0] sm:$0xff]
    %v298 = vld [vmem:[#allocation5 + $0x3d8] sm:$0xff]
    %v299 = vld [vmem:[#allocation5 + $0x3e0] sm:$0xff]
    %v300 = vld [vmem:[#allocation5 + $0x3e8] sm:$0xff]
    %v301 = vld [vmem:[#allocation5 + $0x3f0] sm:$0xff]
    %v302 = vld [vmem:[#allocation5 + $0x3f8] sm:$0xff]
    %v303 = vld [vmem:[#allocation5 + $0x400] sm:$0xff]
    %v304 = vld [vmem:[#allocation5 + $0x408] sm:$0xff]
    %v305 = vld [vmem:[#allocation5 + $0x410] sm:$0xff]
    %v306 = vld [vmem:[#allocation5 + $0x418] sm:$0xff]
    %v307 = vld [vmem:[#allocation5 + $0x420] sm:$0xff]
    %v308 = vld [vmem:[#allocation5 + $0x428] sm:$0xff]
    %v309 = vld [vmem:[#allocation5 + $0x430] sm:$0xff]
    %v310 = vld [vmem:[#allocation5 + $0x438] sm:$0xff]
    %v311 = vld [vmem:[#allocation5 + $0x440] sm:$0xff]
    %v312 = vld [vmem:[#allocation5 + $0x448] sm:$0xff]
    %v313 = vld [vmem:[#allocation5 + $0x450] sm:$0xff]
    %v314 = vld [vmem:[#allocation5 + $0x458] sm:$0xff]
    %v315 = vld [vmem:[#allocation5 + $0x460] sm:$0xff]
    %v316 = vld [vmem:[#allocation5 + $0x468] sm:$0xff]
    %v317 = vld [vmem:[#allocation5 + $0x470] sm:$0xff]
    %v318 = vld [vmem:[#allocation5 + $0x478] sm:$0xff]
    %v319 = vld [vmem:[#allocation5 + $0x480] sm:$0xff]
    %v320 = vld [vmem:[#allocation5 + $0x488] sm:$0xff]
    %v321 = vld [vmem:[#allocation5 + $0x490] sm:$0xff]
    %v322 = vld [vmem:[#allocation5 + $0x498] sm:$0xff]
    %v323 = vld [vmem:[#allocation5 + $0x4a0] sm:$0xff]
    %v324 = vld [vmem:[#allocation5 + $0x4a8] sm:$0xff]
    %v325 = vld [vmem:[#allocation5 + $0x4b0] sm:$0xff]
    %v326 = vld [vmem:[#allocation5 + $0x4b8] sm:$0xff]
    %v327 = vld [vmem:[#allocation5 + $0x4c0] sm:$0xff]
    %v328 = vld [vmem:[#allocation5 + $0x4c8] sm:$0xff]
    %v329 = vld [vmem:[#allocation5 + $0x4d0] sm:$0xff]
    %v330 = vld [vmem:[#allocation5 + $0x4d8] sm:$0xff]
    %v331 = vld [vmem:[#allocation5 + $0x4e0] sm:$0xff]
    %v332 = vld [vmem:[#allocation5 + $0x4e8] sm:$0xff]
    %v333 = vld [vmem:[#allocation5 + $0x4f0] sm:$0xff]
    %v334 = vld [vmem:[#allocation5 + $0x4f8] sm:$0xff]
    %v335 = vld [vmem:[#allocation5 + $0x500] sm:$0xff]
    %v336 = vld [vmem:[#allocation5 + $0x508] sm:$0xff]
    %v337 = vld [vmem:[#allocation5 + $0x510] sm:$0xff]
    %v338 = vld [vmem:[#allocation5 + $0x518] sm:$0xff]
    %v339 = vld [vmem:[#allocation5 + $0x520] sm:$0xff]
    %v340 = vld [vmem:[#allocation5 + $0x528] sm:$0xff]
    %v341 = vld [vmem:[#allocation5 + $0x530] sm:$0xff]
    %v342 = vld [vmem:[#allocation5 + $0x538] sm:$0xff]
    %v343 = vld [vmem:[#allocation5 + $0x540] sm:$0xff]
    %v344 = vld [vmem:[#allocation5 + $0x548] sm:$0xff]
    %v345 = vld [vmem:[#allocation5 + $0x550] sm:$0xff]
    %v346 = vld [vmem:[#allocation5 + $0x558] sm:$0xff]
    %v347 = vld [vmem:[#allocation5 + $0x560] sm:$0xff]
    %v348 = vld [vmem:[#allocation5 + $0x568] sm:$0xff]
    %v349 = vld [vmem:[#allocation5 + $0x570] sm:$0xff]
    %v350 = vld [vmem:[#allocation5 + $0x578] sm:$0xff]
    %v351 = vld [vmem:[#allocation5 + $0x580] sm:$0xff]
    %v352 = vld [vmem:[#allocation5 + $0x588] sm:$0xff]
    %v353 = vld [vmem:[#allocation5 + $0x590] sm:$0xff]
    %v354 = vld [vmem:[#allocation5 + $0x598] sm:$0xff]
    %v355 = vld [vmem:[#allocation5 + $0x5a0] sm:$0xff]
    %v356 = vld [vmem:[#allocation5 + $0x5a8] sm:$0xff]
    %v357 = vld [vmem:[#allocation5 + $0x5b0] sm:$0xff]
    %v358 = vld [vmem:[#allocation5 + $0x5b8] sm:$0xff]
    %v359 = vld [vmem:[#allocation5 + $0x5c0] sm:$0xff]
    %v360 = vld [vmem:[#allocation5 + $0x5c8] sm:$0xff]
    %v361 = vld [vmem:[#allocation5 + $0x5d0] sm:$0xff]
    %v362 = vld [vmem:[#allocation5 + $0x5d8] sm:$0xff]
    %v363 = vld [vmem:[#allocation5 + $0x5e0] sm:$0xff]
    %v364 = vld [vmem:[#allocation5 + $0x5e8] sm:$0xff]
    %v365 = vld [vmem:[#allocation5 + $0x5f0] sm:$0xff]
    %v366 = vld [vmem:[#allocation5 + $0x5f8] sm:$0xff]
    %v367 = vld [vmem:[#allocation5 + $0x600] sm:$0xff]
    %v368 = vld [vmem:[#allocation5 + $0x608] sm:$0xff]
    %v369 = vld [vmem:[#allocation5 + $0x610] sm:$0xff]
    %v370 = vld [vmem:[#allocation5 + $0x618] sm:$0xff]
    %v371 = vld [vmem:[#allocation5 + $0x620] sm:$0xff]
    %v372 = vld [vmem:[#allocation5 + $0x628] sm:$0xff]
    %v373 = vld [vmem:[#allocation5 + $0x630] sm:$0xff]
    %v374 = vld [vmem:[#allocation5 + $0x638] sm:$0xff]
    %v375 = vld [vmem:[#allocation5 + $0x640] sm:$0xff]
    %v376 = vld [vmem:[#allocation5 + $0x648] sm:$0xff]
    %v377 = vld [vmem:[#allocation5 + $0x650] sm:$0xff]
    %v378 = vld [vmem:[#allocation5 + $0x658] sm:$0xff]
    %v379 = vld [vmem:[#allocation5 + $0x660] sm:$0xff]
    %v380 = vld [vmem:[#allocation5 + $0x668] sm:$0xff]
    %v381 = vld [vmem:[#allocation5 + $0x670] sm:$0xff]
    %v382 = vld [vmem:[#allocation5 + $0x678] sm:$0xff]
    %v383 = vld [vmem:[#allocation5 + $0x680] sm:$0xff]
    %v384 = vld [vmem:[#allocation5 + $0x688] sm:$0xff]
    %v385 = vld [vmem:[#allocation5 + $0x690] sm:$0xff]
    %v386 = vld [vmem:[#allocation5 + $0x698] sm:$0xff]
    %v387 = vld [vmem:[#allocation5 + $0x6a0] sm:$0xff]
    %v388 = vld [vmem:[#allocation5 + $0x6a8] sm:$0xff]
    %v389 = vld [vmem:[#allocation5 + $0x6b0] sm:$0xff]
    %v390 = vld [vmem:[#allocation5 + $0x6b8] sm:$0xff]
    %v391 = vld [vmem:[#allocation5 + $0x6c0] sm:$0xff]
    %v392 = vld [vmem:[#allocation5 + $0x6c8] sm:$0xff]
    %v393 = vld [vmem:[#allocation5 + $0x6d0] sm:$0xff]
    %v394 = vld [vmem:[#allocation5 + $0x6d8] sm:$0xff]
    %v395 = vld [vmem:[#allocation5 + $0x6e0] sm:$0xff]
    %v396 = vld [vmem:[#allocation5 + $0x6e8] sm:$0xff]
    %v397 = vld [vmem:[#allocation5 + $0x6f0] sm:$0xff]
    %v398 = vld [vmem:[#allocation5 + $0x6f8] sm:$0xff]
    %v399 = vld [vmem:[#allocation5 + $0x700] sm:$0xff]
    %v400 = vld [vmem:[#allocation5 + $0x708] sm:$0xff]
    %v401 = vld [vmem:[#allocation5 + $0x710] sm:$0xff]
    %v402 = vld [vmem:[#allocation5 + $0x718] sm:$0xff]
    %v403 = vld [vmem:[#allocation5 + $0x720] sm:$0xff]
    %v404 = vld [vmem:[#allocation5 + $0x728] sm:$0xff]
    %v405 = vld [vmem:[#allocation5 + $0x730] sm:$0xff]
    %v406 = vld [vmem:[#allocation5 + $0x738] sm:$0xff]
    %v407 = vld [vmem:[#allocation5 + $0x740] sm:$0xff]
    %v408 = vld [vmem:[#allocation5 + $0x748] sm:$0xff]
    %v409 = vld [vmem:[#allocation5 + $0x750] sm:$0xff]
    %v410 = vld [vmem:[#allocation5 + $0x758] sm:$0xff]
    %v411 = vld [vmem:[#allocation5 + $0x760] sm:$0xff]
    %v412 = vld [vmem:[#allocation5 + $0x768] sm:$0xff]
    %v413 = vld [vmem:[#allocation5 + $0x770] sm:$0xff]
    %v414 = vld [vmem:[#allocation5 + $0x778] sm:$0xff]
    %v415 = vld [vmem:[#allocation5 + $0x780] sm:$0xff]
    %v416 = vld [vmem:[#allocation5 + $0x788] sm:$0xff]
    %v417 = vld [vmem:[#allocation5 + $0x790] sm:$0xff]
    %v418 = vld [vmem:[#allocation5 + $0x798] sm:$0xff]
    %v419 = vld [vmem:[#allocation5 + $0x7a0] sm:$0xff]
    %v420 = vld [vmem:[#allocation5 + $0x7a8] sm:$0xff]
    %v421 = vld [vmem:[#allocation5 + $0x7b0] sm:$0xff]
    %v422 = vld [vmem:[#allocation5 + $0x7b8] sm:$0xff]
    %v423 = vld [vmem:[#allocation5 + $0x7c0] sm:$0xff]
    %v424 = vld [vmem:[#allocation5 + $0x7c8] sm:$0xff]
    %v425 = vld [vmem:[#allocation5 + $0x7d0] sm:$0xff]
    %v426 = vld [vmem:[#allocation5 + $0x7d8] sm:$0xff]
    %v427 = vld [vmem:[#allocation5 + $0x7e0] sm:$0xff]
    %v428 = vld [vmem:[#allocation5 + $0x7e8] sm:$0xff]
    %v429 = vld [vmem:[#allocation5 + $0x7f0] sm:$0xff]
    %v430 = vld [vmem:[#allocation5 + $0x7f8] sm:$0xff]
    %v431 = vld [vmem:[#allocation5 + $0x800] sm:$0xff]
    %v432 = vld [vmem:[#allocation5 + $0x808] sm:$0xff]
    %v433 = vld [vmem:[#allocation5 + $0x810] sm:$0xff]
    %v434 = vld [vmem:[#allocation5 + $0x818] sm:$0xff]
    %v435 = vld [vmem:[#allocation5 + $0x820] sm:$0xff]
    %v436 = vld [vmem:[#allocation5 + $0x828] sm:$0xff]
    %v437 = vld [vmem:[#allocation5 + $0x830] sm:$0xff]
    %v438 = vld [vmem:[#allocation5 + $0x838] sm:$0xff]
    %v439 = vld [vmem:[#allocation5 + $0x840] sm:$0xff]
    %v440 = vld [vmem:[#allocation5 + $0x848] sm:$0xff]
    %v441 = vld [vmem:[#allocation5 + $0x850] sm:$0xff]
    %v442 = vld [vmem:[#allocation5 + $0x858] sm:$0xff]
    %v443 = vld [vmem:[#allocation5 + $0x860] sm:$0xff]
    %v444 = vld [vmem:[#allocation5 + $0x868] sm:$0xff]
    %v445 = vld [vmem:[#allocation5 + $0x870] sm:$0xff]
    %v446 = vld [vmem:[#allocation5 + $0x878] sm:$0xff]
    %v447 = vld [vmem:[#allocation5 + $0x880] sm:$0xff]
    %v448 = vld [vmem:[#allocation5 + $0x888] sm:$0xff]
    %v449 = vld [vmem:[#allocation5 + $0x890] sm:$0xff]
    %v450 = vld [vmem:[#allocation5 + $0x898] sm:$0xff]
    %v451 = vld [vmem:[#allocation5 + $0x8a0] sm:$0xff]
    %v452 = vld [vmem:[#allocation5 + $0x8a8] sm:$0xff]
    %v453 = vld [vmem:[#allocation5 + $0x8b0] sm:$0xff]
    %v454 = vld [vmem:[#allocation5 + $0x8b8] sm:$0xff]
    %v455 = vld [vmem:[#allocation5 + $0x8c0] sm:$0xff]
    %v456 = vld [vmem:[#allocation5 + $0x8c8] sm:$0xff]
    %v457 = vld [vmem:[#allocation5 + $0x8d0] sm:$0xff]
    %v458 = vld [vmem:[#allocation5 + $0x8d8] sm:$0xff]
    %v459 = vld [vmem:[#allocation5 + $0x8e0] sm:$0xff]
    %v460 = vld [vmem:[#allocation5 + $0x8e8] sm:$0xff]
    %v461 = vld [vmem:[#allocation5 + $0x8f0] sm:$0xff]
    %v462 = vld [vmem:[#allocation5 + $0x8f8] sm:$0xff]
    %v463 = vld [vmem:[#allocation5 + $0x900] sm:$0xff]
    %v464 = vld [vmem:[#allocation5 + $0x908] sm:$0xff]
    %v465 = vld [vmem:[#allocation5 + $0x910] sm:$0xff]
    %v466 = vld [vmem:[#allocation5 + $0x918] sm:$0xff]
    %v467 = vld [vmem:[#allocation5 + $0x920] sm:$0xff]
    %v468 = vld [vmem:[#allocation5 + $0x928] sm:$0xff]
    %v469 = vld [vmem:[#allocation5 + $0x930] sm:$0xff]
    %v470 = vld [vmem:[#allocation5 + $0x938] sm:$0xff]
    %v471 = vld [vmem:[#allocation5 + $0x940] sm:$0xff]
    %v472 = vld [vmem:[#allocation5 + $0x948] sm:$0xff]
    %v473 = vld [vmem:[#allocation5 + $0x950] sm:$0xff]
    %v474 = vld [vmem:[#allocation5 + $0x958] sm:$0xff]
    %v475 = vld [vmem:[#allocation5 + $0x960] sm:$0xff]
    %v476 = vld [vmem:[#allocation5 + $0x968] sm:$0xff]
    %v477 = vld [vmem:[#allocation5 + $0x970] sm:$0xff]
    %v478 = vld [vmem:[#allocation5 + $0x978] sm:$0xff]
    %v479 = vld [vmem:[#allocation5 + $0x980] sm:$0xff]
    %v480 = vld [vmem:[#allocation5 + $0x988] sm:$0xff]
    %v481 = vld [vmem:[#allocation5 + $0x990] sm:$0xff]
    %v482 = vld [vmem:[#allocation5 + $0x998] sm:$0xff]
    %v483 = vld [vmem:[#allocation5 + $0x9a0] sm:$0xff]
    %v484 = vld [vmem:[#allocation5 + $0x9a8] sm:$0xff]
    %v485 = vld [vmem:[#allocation5 + $0x9b0] sm:$0xff]
    %v486 = vld [vmem:[#allocation5 + $0x9b8] sm:$0xff]
    %v487 = vld [vmem:[#allocation5 + $0x9c0] sm:$0xff]
    %v488 = vld [vmem:[#allocation5 + $0x9c8] sm:$0xff]
    %v489 = vld [vmem:[#allocation5 + $0x9d0] sm:$0xff]
    %v490 = vld [vmem:[#allocation5 + $0x9d8] sm:$0xff]
    %v491 = vld [vmem:[#allocation5 + $0x9e0] sm:$0xff]
    %v492 = vld [vmem:[#allocation5 + $0x9e8] sm:$0xff]
    %v493 = vld [vmem:[#allocation5 + $0x9f0] sm:$0xff]
    %v494 = vld [vmem:[#allocation5 + $0x9f8] sm:$0xff]
    %v495 = vld [vmem:[#allocation5 + $0xa00] sm:$0xff]
    %v496 = vld [vmem:[#allocation5 + $0xa08] sm:$0xff]
    %v497 = vld [vmem:[#allocation5 + $0xa10] sm:$0xff]
    %v498 = vld [vmem:[#allocation5 + $0xa18] sm:$0xff]
    %v499 = vld [vmem:[#allocation5 + $0xa20] sm:$0xff]
    %v500 = vld [vmem:[#allocation5 + $0xa28] sm:$0xff]
    %v501 = vld [vmem:[#allocation5 + $0xa30] sm:$0xff]
    %v502 = vld [vmem:[#allocation5 + $0xa38] sm:$0xff]
    %v503 = vld [vmem:[#allocation5 + $0xa40] sm:$0xff]
    %v504 = vld [vmem:[#allocation5 + $0xa48] sm:$0xff]
    %v505 = vld [vmem:[#allocation5 + $0xa50] sm:$0xff]
    %v506 = vld [vmem:[#allocation5 + $0xa58] sm:$0xff]
    %v507 = vld [vmem:[#allocation5 + $0xa60] sm:$0xff]
    %v508 = vld [vmem:[#allocation5 + $0xa68] sm:$0xff]
    %v509 = vld [vmem:[#allocation5 + $0xa70] sm:$0xff]
    %v510 = vld [vmem:[#allocation5 + $0xa78] sm:$0xff]
    %v511 = vld [vmem:[#allocation5 + $0xa80] sm:$0xff]
    %v512 = vld [vmem:[#allocation5 + $0xa88] sm:$0xff]
    %v513 = vld [vmem:[#allocation5 + $0xa90] sm:$0xff]
    %v514 = vld [vmem:[#allocation5 + $0xa98] sm:$0xff]
    %v515 = vld [vmem:[#allocation5 + $0xaa0] sm:$0xff]
    %v516 = vld [vmem:[#allocation5 + $0xaa8] sm:$0xff]
    %v517 = vld [vmem:[#allocation5 + $0xab0] sm:$0xff]
    %v518 = vld [vmem:[#allocation5 + $0xab8] sm:$0xff]
    %v519 = vld [vmem:[#allocation5 + $0xac0] sm:$0xff]
    %v520 = vld [vmem:[#allocation5 + $0xac8] sm:$0xff]
    %v521 = vld [vmem:[#allocation5 + $0xad0] sm:$0xff]
    %v522 = vld [vmem:[#allocation5 + $0xad8] sm:$0xff]
    %v523 = vld [vmem:[#allocation5 + $0xae0] sm:$0xff]
    %v524 = vld [vmem:[#allocation5 + $0xae8] sm:$0xff]
    %v525 = vld [vmem:[#allocation5 + $0xaf0] sm:$0xff]
    %v526 = vld [vmem:[#allocation5 + $0xaf8] sm:$0xff]
    %v527 = vld [vmem:[#allocation5 + $0xb00] sm:$0xff]
    %v528 = vld [vmem:[#allocation5 + $0xb08] sm:$0xff]
    %v529 = vld [vmem:[#allocation5 + $0xb10] sm:$0xff]
    %v530 = vld [vmem:[#allocation5 + $0xb18] sm:$0xff]
    %v531 = vld [vmem:[#allocation5 + $0xb20] sm:$0xff]
    %v532 = vld [vmem:[#allocation5 + $0xb28] sm:$0xff]
    %v533 = vld [vmem:[#allocation5 + $0xb30] sm:$0xff]
    %v534 = vld [vmem:[#allocation5 + $0xb38] sm:$0xff]
    %v535 = vld [vmem:[#allocation5 + $0xb40] sm:$0xff]
    %v536 = vld [vmem:[#allocation5 + $0xb48] sm:$0xff]
    %v537 = vld [vmem:[#allocation5 + $0xb50] sm:$0xff]
    %v538 = vld [vmem:[#allocation5 + $0xb58] sm:$0xff]
    %v539 = vld [vmem:[#allocation5 + $0xb60] sm:$0xff]
    %v540 = vld [vmem:[#allocation5 + $0xb68] sm:$0xff]
    %v541 = vld [vmem:[#allocation5 + $0xb70] sm:$0xff]
    %v542 = vld [vmem:[#allocation5 + $0xb78] sm:$0xff]
    %v543 = vld [vmem:[#allocation5 + $0xb80] sm:$0xff]
    %v544 = vld [vmem:[#allocation5 + $0xb88] sm:$0xff]
    %v545 = vld [vmem:[#allocation5 + $0xb90] sm:$0xff]
    %v546 = vld [vmem:[#allocation5 + $0xb98] sm:$0xff]
    %v547 = vld [vmem:[#allocation5 + $0xba0] sm:$0xff]
    %v548 = vld [vmem:[#allocation5 + $0xba8] sm:$0xff]
    %v549 = vld [vmem:[#allocation5 + $0xbb0] sm:$0xff]
    %v550 = vld [vmem:[#allocation5 + $0xbb8] sm:$0xff]
    %v551 = vld [vmem:[#allocation5 + $0xbc0] sm:$0xff]
    %v552 = vld [vmem:[#allocation5 + $0xbc8] sm:$0xff]
    %v553 = vld [vmem:[#allocation5 + $0xbd0] sm:$0xff]
    %v554 = vld [vmem:[#allocation5 + $0xbd8] sm:$0xff]
    %v555 = vld [vmem:[#allocation5 + $0xbe0] sm:$0xff]
    %v556 = vld [vmem:[#allocation5 + $0xbe8] sm:$0xff]
    %v557 = vld [vmem:[#allocation5 + $0xbf0] sm:$0xff]
    %v558 = vld [vmem:[#allocation5 + $0xbf8] sm:$0xff]
    %v559 = vld [vmem:[#allocation5 + $0xc00] sm:$0xff]
    %v560 = vld [vmem:[#allocation5 + $0xc08] sm:$0xff]
    %v561 = vld [vmem:[#allocation5 + $0xc10] sm:$0xff]
    %v562 = vld [vmem:[#allocation5 + $0xc18] sm:$0xff]
    %v563 = vld [vmem:[#allocation5 + $0xc20] sm:$0xff]
    %v564 = vld [vmem:[#allocation5 + $0xc28] sm:$0xff]
    %v565 = vld [vmem:[#allocation5 + $0xc30] sm:$0xff]
    %v566 = vld [vmem:[#allocation5 + $0xc38] sm:$0xff]
    %v567 = vld [vmem:[#allocation5 + $0xc40] sm:$0xff]
    %v568 = vld [vmem:[#allocation5 + $0xc48] sm:$0xff]
    %v569 = vld [vmem:[#allocation5 + $0xc50] sm:$0xff]
    %v570 = vld [vmem:[#allocation5 + $0xc58] sm:$0xff]
    %v571 = vld [vmem:[#allocation5 + $0xc60] sm:$0xff]
    %v572 = vld [vmem:[#allocation5 + $0xc68] sm:$0xff]
    %v573 = vld [vmem:[#allocation5 + $0xc70] sm:$0xff]
    %v574 = vld [vmem:[#allocation5 + $0xc78] sm:$0xff]
    %v575 = vld [vmem:[#allocation5 + $0xc80] sm:$0xff]
    %v576 = vld [vmem:[#allocation5 + $0xc88] sm:$0xff]
    %v577 = vld [vmem:[#allocation5 + $0xc90] sm:$0xff]
    %v578 = vld [vmem:[#allocation5 + $0xc98] sm:$0xff]
    %v579 = vld [vmem:[#allocation5 + $0xca0] sm:$0xff]
    %v580 = vld [vmem:[#allocation5 + $0xca8] sm:$0xff]
    %v581 = vld [vmem:[#allocation5 + $0xcb0] sm:$0xff]
    %v582 = vld [vmem:[#allocation5 + $0xcb8] sm:$0xff]
    %v583 = vld [vmem:[#allocation5 + $0xcc0] sm:$0xff]
    %v584 = vld [vmem:[#allocation5 + $0xcc8] sm:$0xff]
    %v585 = vld [vmem:[#allocation5 + $0xcd0] sm:$0xff]
    %v586 = vld [vmem:[#allocation5 + $0xcd8] sm:$0xff]
    %v587 = vld [vmem:[#allocation5 + $0xce0] sm:$0xff]
    %v588 = vld [vmem:[#allocation5 + $0xce8] sm:$0xff]
    %v589 = vld [vmem:[#allocation5 + $0xcf0] sm:$0xff]
    %v590 = vld [vmem:[#allocation5 + $0xcf8] sm:$0xff]
    %v591 = vld [vmem:[#allocation5 + $0xd00] sm:$0xff]
    %v592 = vld [vmem:[#allocation5 + $0xd08] sm:$0xff]
    %v593 = vld [vmem:[#allocation5 + $0xd10] sm:$0xff]
    %v594 = vld [vmem:[#allocation5 + $0xd18] sm:$0xff]
    %v595 = vld [vmem:[#allocation5 + $0xd20] sm:$0xff]
    %v596 = vld [vmem:[#allocation5 + $0xd28] sm:$0xff]
    %v597 = vld [vmem:[#allocation5 + $0xd30] sm:$0xff]
    %v598 = vld [vmem:[#allocation5 + $0xd38] sm:$0xff]
    %v599 = vld [vmem:[#allocation5 + $0xd40] sm:$0xff]
    %v600 = vld [vmem:[#allocation5 + $0xd48] sm:$0xff]
    %v601 = vld [vmem:[#allocation5 + $0xd50] sm:$0xff]
    %v602 = vld [vmem:[#allocation5 + $0xd58] sm:$0xff]
    %v603 = vld [vmem:[#allocation5 + $0xd60] sm:$0xff]
    %v604 = vld [vmem:[#allocation5 + $0xd68] sm:$0xff]
    %v605 = vld [vmem:[#allocation5 + $0xd70] sm:$0xff]
    %v606 = vld [vmem:[#allocation5 + $0xd78] sm:$0xff]
    %v607 = vld [vmem:[#allocation5 + $0xd80] sm:$0xff]
    %v608 = vld [vmem:[#allocation5 + $0xd88] sm:$0xff]
    %v609 = vld [vmem:[#allocation5 + $0xd90] sm:$0xff]
    %v610 = vld [vmem:[#allocation5 + $0xd98] sm:$0xff]
    %v611 = vld [vmem:[#allocation5 + $0xda0] sm:$0xff]
    %v612 = vld [vmem:[#allocation5 + $0xda8] sm:$0xff]
    %v613 = vld [vmem:[#allocation5 + $0xdb0] sm:$0xff]
    %v614 = vld [vmem:[#allocation5 + $0xdb8] sm:$0xff]
    %v615 = vld [vmem:[#allocation5 + $0xdc0] sm:$0xff]
    %v616 = vld [vmem:[#allocation5 + $0xdc8] sm:$0xff]
    %v617 = vld [vmem:[#allocation5 + $0xdd0] sm:$0xff]
    %v618 = vld [vmem:[#allocation5 + $0xdd8] sm:$0xff]
    %v619 = vld [vmem:[#allocation5 + $0xde0] sm:$0xff]
    %v620 = vld [vmem:[#allocation5 + $0xde8] sm:$0xff]
    %v621 = vld [vmem:[#allocation5 + $0xdf0] sm:$0xff]
    %v622 = vld [vmem:[#allocation5 + $0xdf8] sm:$0xff]
    %v623 = vld [vmem:[#allocation5 + $0xe00] sm:$0xff]
    %v624 = vld [vmem:[#allocation5 + $0xe08] sm:$0xff]
    %v625 = vld [vmem:[#allocation5 + $0xe10] sm:$0xff]
    %v626 = vld [vmem:[#allocation5 + $0xe18] sm:$0xff]
    %v627 = vld [vmem:[#allocation5 + $0xe20] sm:$0xff]
    %v628 = vld [vmem:[#allocation5 + $0xe28] sm:$0xff]
    %v629 = vld [vmem:[#allocation5 + $0xe30] sm:$0xff]
    %v630 = vld [vmem:[#allocation5 + $0xe38] sm:$0xff]
    %v631 = vld [vmem:[#allocation5 + $0xe40] sm:$0xff]
    %v632 = vld [vmem:[#allocation5 + $0xe48] sm:$0xff]
    %v633 = vld [vmem:[#allocation5 + $0xe50] sm:$0xff]
    %v634 = vld [vmem:[#allocation5 + $0xe58] sm:$0xff]
    %v635 = vld [vmem:[#allocation5 + $0xe60] sm:$0xff]
    %v636 = vld [vmem:[#allocation5 + $0xe68] sm:$0xff]
    %v637 = vld [vmem:[#allocation5 + $0xe70] sm:$0xff]
    %v638 = vld [vmem:[#allocation5 + $0xe78] sm:$0xff]
    %v639 = vld [vmem:[#allocation5 + $0xe80] sm:$0xff]
    %v640 = vld [vmem:[#allocation5 + $0xe88] sm:$0xff]
    %v641 = vld [vmem:[#allocation5 + $0xe90] sm:$0xff]
    %v642 = vld [vmem:[#allocation5 + $0xe98] sm:$0xff]
    %v643 = vld [vmem:[#allocation5 + $0xea0] sm:$0xff]
    %v644 = vld [vmem:[#allocation5 + $0xea8] sm:$0xff]
    %v645 = vld [vmem:[#allocation5 + $0xeb0] sm:$0xff]
    %v646 = vld [vmem:[#allocation5 + $0xeb8] sm:$0xff]
    %v647 = vld [vmem:[#allocation5 + $0xec0] sm:$0xff]
    %v648 = vld [vmem:[#allocation5 + $0xec8] sm:$0xff]
    %v649 = vld [vmem:[#allocation5 + $0xed0] sm:$0xff]
    %v650 = vld [vmem:[#allocation5 + $0xed8] sm:$0xff]
    %v651 = vld [vmem:[#allocation5 + $0xee0] sm:$0xff]
    %v652 = vld [vmem:[#allocation5 + $0xee8] sm:$0xff]
    %v653 = vld [vmem:[#allocation5 + $0xef0] sm:$0xff]
    %v654 = vld [vmem:[#allocation5 + $0xef8] sm:$0xff]
    %v655 = vld [vmem:[#allocation5 + $0xf00] sm:$0xff]
    %v656 = vld [vmem:[#allocation5 + $0xf08] sm:$0xff]
    %v657 = vld [vmem:[#allocation5 + $0xf10] sm:$0xff]
    %v658 = vld [vmem:[#allocation5 + $0xf18] sm:$0xff]
    %v659 = vld [vmem:[#allocation5 + $0xf20] sm:$0xff]
    %v660 = vld [vmem:[#allocation5 + $0xf28] sm:$0xff]
    %v661 = vld [vmem:[#allocation5 + $0xf30] sm:$0xff]
    %v662 = vld [vmem:[#allocation5 + $0xf38] sm:$0xff]
    %v663 = vld [vmem:[#allocation5 + $0xf40] sm:$0xff]
    %v664 = vld [vmem:[#allocation5 + $0xf48] sm:$0xff]
    %v665 = vld [vmem:[#allocation5 + $0xf50] sm:$0xff]
    %v666 = vld [vmem:[#allocation5 + $0xf58] sm:$0xff]
    %v667 = vld [vmem:[#allocation5 + $0xf60] sm:$0xff]
    %v668 = vld [vmem:[#allocation5 + $0xf68] sm:$0xff]
    %v669 = vld [vmem:[#allocation5 + $0xf70] sm:$0xff]
    %v670 = vld [vmem:[#allocation5 + $0xf78] sm:$0xff]
    %v671 = vld [vmem:[#allocation5 + $0xf80] sm:$0xff]
    %v672 = vld [vmem:[#allocation5 + $0xf88] sm:$0xff]
    %v673 = vld [vmem:[#allocation5 + $0xf90] sm:$0xff]
    %v674 = vld [vmem:[#allocation5 + $0xf98] sm:$0xff]
    %v675 = vld [vmem:[#allocation5 + $0xfa0] sm:$0xff]
    %v676 = vld [vmem:[#allocation5 + $0xfa8] sm:$0xff]
    %v677 = vld [vmem:[#allocation5 + $0xfb0] sm:$0xff]
    %v678 = vld [vmem:[#allocation5 + $0xfb8] sm:$0xff]
    %v679 = vld [vmem:[#allocation5 + $0xfc0] sm:$0xff]
    %v680 = vld [vmem:[#allocation5 + $0xfc8] sm:$0xff]
    %v681 = vld [vmem:[#allocation5 + $0xfd0] sm:$0xff]
    %v682 = vld [vmem:[#allocation5 + $0xfd8] sm:$0xff]
    %v683 = vld [vmem:[#allocation5 + $0xfe0] sm:$0xff]
    %v684 = vld [vmem:[#allocation5 + $0xfe8] sm:$0xff]
    %v685 = vld [vmem:[#allocation5 + $0xff0] sm:$0xff]
    %v686 = vld [vmem:[#allocation5 + $0xff8] sm:$0xff]
    %v687 = vld [vmem:[#allocation5 + $0x1000] sm:$0xff]
    %v688 = vld [vmem:[#allocation5 + $0x1008] sm:$0xff]
    %v689 = vld [vmem:[#allocation5 + $0x1010] sm:$0xff]
    %v690 = vld [vmem:[#allocation5 + $0x1018] sm:$0xff]
    %v691 = vld [vmem:[#allocation5 + $0x1020] sm:$0xff]
    %v692 = vld [vmem:[#allocation5 + $0x1028] sm:$0xff]
    %v693 = vld [vmem:[#allocation5 + $0x1030] sm:$0xff]
    %v694 = vld [vmem:[#allocation5 + $0x1038] sm:$0xff]
    %v695 = vld [vmem:[#allocation5 + $0x1040] sm:$0xff]
    %v696 = vld [vmem:[#allocation5 + $0x1048] sm:$0xff]
    %v697 = vld [vmem:[#allocation5 + $0x1050] sm:$0xff]
    %v698 = vld [vmem:[#allocation5 + $0x1058] sm:$0xff]
    %v699 = vld [vmem:[#allocation5 + $0x1060] sm:$0xff]
    %v700 = vld [vmem:[#allocation5 + $0x1068] sm:$0xff]
    %v701 = vld [vmem:[#allocation5 + $0x1070] sm:$0xff]
    %v702 = vld [vmem:[#allocation5 + $0x1078] sm:$0xff]
    %v703 = vld [vmem:[#allocation5 + $0x1080] sm:$0xff]
    %v704 = vld [vmem:[#allocation5 + $0x1088] sm:$0xff]
    %v705 = vld [vmem:[#allocation5 + $0x1090] sm:$0xff]
    %v706 = vld [vmem:[#allocation5 + $0x1098] sm:$0xff]
    %v707 = vld [vmem:[#allocation5 + $0x10a0] sm:$0xff]
    %v708 = vld [vmem:[#allocation5 + $0x10a8] sm:$0xff]
    %v709 = vld [vmem:[#allocation5 + $0x10b0] sm:$0xff]
    %v710 = vld [vmem:[#allocation5 + $0x10b8] sm:$0xff]
    %v711 = vld [vmem:[#allocation5 + $0x10c0] sm:$0xff]
    %v712 = vld [vmem:[#allocation5 + $0x10c8] sm:$0xff]
    %v713 = vld [vmem:[#allocation5 + $0x10d0] sm:$0xff]
    %v714 = vld [vmem:[#allocation5 + $0x10d8] sm:$0xff]
    %v715 = vld [vmem:[#allocation5 + $0x10e0] sm:$0xff]
    %v716 = vld [vmem:[#allocation5 + $0x10e8] sm:$0xff]
    %v717 = vld [vmem:[#allocation5 + $0x10f0] sm:$0xff]
    %v718 = vld [vmem:[#allocation5 + $0x10f8] sm:$0xff]
    %v719 = vld [vmem:[#allocation5 + $0x1100] sm:$0xff]
    %v720 = vld [vmem:[#allocation5 + $0x1108] sm:$0xff]
    %v721 = vld [vmem:[#allocation5 + $0x1110] sm:$0xff]
    %v722 = vld [vmem:[#allocation5 + $0x1118] sm:$0xff]
    %v723 = vld [vmem:[#allocation5 + $0x1120] sm:$0xff]
    %v724 = vld [vmem:[#allocation5 + $0x1128] sm:$0xff]
    %v725 = vld [vmem:[#allocation5 + $0x1130] sm:$0xff]
    %v726 = vld [vmem:[#allocation5 + $0x1138] sm:$0xff]
    %v727 = vld [vmem:[#allocation5 + $0x1140] sm:$0xff]
    %v728 = vld [vmem:[#allocation5 + $0x1148] sm:$0xff]
    %v729 = vld [vmem:[#allocation5 + $0x1150] sm:$0xff]
    %v730 = vld [vmem:[#allocation5 + $0x1158] sm:$0xff]
    %v731 = vld [vmem:[#allocation5 + $0x1160] sm:$0xff]
    %v732 = vld [vmem:[#allocation5 + $0x1168] sm:$0xff]
    %v733 = vld [vmem:[#allocation5 + $0x1170] sm:$0xff]
    %v734 = vld [vmem:[#allocation5 + $0x1178] sm:$0xff]
    %v735 = vld [vmem:[#allocation5 + $0x1180] sm:$0xff]
    %v736 = vld [vmem:[#allocation5 + $0x1188] sm:$0xff]
    %v737 = vld [vmem:[#allocation5 + $0x1190] sm:$0xff]
    %v738 = vld [vmem:[#allocation5 + $0x1198] sm:$0xff]
    %v739 = vld [vmem:[#allocation5 + $0x11a0] sm:$0xff]
    %v740 = vld [vmem:[#allocation5 + $0x11a8] sm:$0xff]
    %v741 = vld [vmem:[#allocation5 + $0x11b0] sm:$0xff]
    %v742 = vld [vmem:[#allocation5 + $0x11b8] sm:$0xff]
    %v743 = vld [vmem:[#allocation5 + $0x11c0] sm:$0xff]
    %v744 = vld [vmem:[#allocation5 + $0x11c8] sm:$0xff]
    %v745 = vld [vmem:[#allocation5 + $0x11d0] sm:$0xff]
    %v746 = vld [vmem:[#allocation5 + $0x11d8] sm:$0xff]
    %v747 = vld [vmem:[#allocation5 + $0x11e0] sm:$0xff]
    %v748 = vld [vmem:[#allocation5 + $0x11e8] sm:$0xff]
    %v749 = vld [vmem:[#allocation5 + $0x11f0] sm:$0xff]
    %v750 = vld [vmem:[#allocation5 + $0x11f8] sm:$0xff]
    %v751 = vld [vmem:[#allocation5 + $0x1200] sm:$0xff]
    %v752 = vld [vmem:[#allocation5 + $0x1208] sm:$0xff]
    %v753 = vld [vmem:[#allocation5 + $0x1210] sm:$0xff]
    %v754 = vld [vmem:[#allocation5 + $0x1218] sm:$0xff]
    %v755 = vld [vmem:[#allocation5 + $0x1220] sm:$0xff]
    %v756 = vld [vmem:[#allocation5 + $0x1228] sm:$0xff]
    %v757 = vld [vmem:[#allocation5 + $0x1230] sm:$0xff]
    %v758 = vld [vmem:[#allocation5 + $0x1238] sm:$0xff]
    %v759 = vld [vmem:[#allocation5 + $0x1240] sm:$0xff]
    %v760 = vld [vmem:[#allocation5 + $0x1248] sm:$0xff]
    %v761 = vld [vmem:[#allocation5 + $0x1250] sm:$0xff]
    %v762 = vld [vmem:[#allocation5 + $0x1258] sm:$0xff]
    %v763 = vld [vmem:[#allocation5 + $0x1260] sm:$0xff]
    %v764 = vld [vmem:[#allocation5 + $0x1268] sm:$0xff]
    %v765 = vld [vmem:[#allocation5 + $0x1270] sm:$0xff]
    %v766 = vld [vmem:[#allocation5 + $0x1278] sm:$0xff]
    %v767 = vld [vmem:[#allocation5 + $0x1280] sm:$0xff]
    %v768 = vld [vmem:[#allocation5 + $0x1288] sm:$0xff]
    %v769 = vld [vmem:[#allocation5 + $0x1290] sm:$0xff]
    %v770 = vld [vmem:[#allocation5 + $0x1298] sm:$0xff]
    %v771 = vld [vmem:[#allocation5 + $0x12a0] sm:$0xff]
    %v772 = vld [vmem:[#allocation5 + $0x12a8] sm:$0xff]
    %v773 = vld [vmem:[#allocation5 + $0x12b0] sm:$0xff]
    %v774 = vld [vmem:[#allocation5 + $0x12b8] sm:$0xff]
    %v775 = vld [vmem:[#allocation5 + $0x12c0] sm:$0xff]
    %v776 = vld [vmem:[#allocation5 + $0x12c8] sm:$0xff]
    %v777 = vld [vmem:[#allocation5 + $0x12d0] sm:$0xff]
    %v778 = vld [vmem:[#allocation5 + $0x12d8] sm:$0xff]
    %v779 = vld [vmem:[#allocation5 + $0x12e0] sm:$0xff]
    %v780 = vld [vmem:[#allocation5 + $0x12e8] sm:$0xff]
    %v781 = vld [vmem:[#allocation5 + $0x12f0] sm:$0xff]
    %v782 = vld [vmem:[#allocation5 + $0x12f8] sm:$0xff]
    %v783 = vld [vmem:[#allocation5 + $0x1300] sm:$0xff]
    %v784 = vld [vmem:[#allocation5 + $0x1308] sm:$0xff]
    %v785 = vld [vmem:[#allocation5 + $0x1310] sm:$0xff]
    %v786 = vld [vmem:[#allocation5 + $0x1318] sm:$0xff]
    %v787 = vld [vmem:[#allocation5 + $0x1320] sm:$0xff]
    %v788 = vld [vmem:[#allocation5 + $0x1328] sm:$0xff]
    %v789 = vld [vmem:[#allocation5 + $0x1330] sm:$0xff]
    %v790 = vld [vmem:[#allocation5 + $0x1338] sm:$0xff]
    %v791 = vld [vmem:[#allocation5 + $0x1340] sm:$0xff]
    %v792 = vld [vmem:[#allocation5 + $0x1348] sm:$0xff]
    %v793 = vld [vmem:[#allocation5 + $0x1350] sm:$0xff]
    %v794 = vld [vmem:[#allocation5 + $0x1358] sm:$0xff]
    %v795 = vld [vmem:[#allocation5 + $0x1360] sm:$0xff]
    %v796 = vld [vmem:[#allocation5 + $0x1368] sm:$0xff]
    %v797 = vld [vmem:[#allocation5 + $0x1370] sm:$0xff]
    %v798 = vld [vmem:[#allocation5 + $0x1378] sm:$0xff]
    %v799 = vld [vmem:[#allocation5 + $0x1380] sm:$0xff]
    %v800 = vld [vmem:[#allocation5 + $0x1388] sm:$0xff]
    %v801 = vld [vmem:[#allocation5 + $0x1390] sm:$0xff]
    %v802 = vld [vmem:[#allocation5 + $0x1398] sm:$0xff]
    %v803 = vld [vmem:[#allocation5 + $0x13a0] sm:$0xff]
    %v804 = vld [vmem:[#allocation5 + $0x13a8] sm:$0xff]
    %v805 = vld [vmem:[#allocation5 + $0x13b0] sm:$0xff]
    %v806 = vld [vmem:[#allocation5 + $0x13b8] sm:$0xff]
    %v807 = vld [vmem:[#allocation5 + $0x13c0] sm:$0xff]
    %v808 = vld [vmem:[#allocation5 + $0x13c8] sm:$0xff]
    %v809 = vld [vmem:[#allocation5 + $0x13d0] sm:$0xff]
    %v810 = vld [vmem:[#allocation5 + $0x13d8] sm:$0xff]
    %v811 = vld [vmem:[#allocation5 + $0x13e0] sm:$0xff]
    %v812 = vld [vmem:[#allocation5 + $0x13e8] sm:$0xff]
    %v813 = vld [vmem:[#allocation5 + $0x13f0] sm:$0xff]
    %v814 = vld [vmem:[#allocation5 + $0x13f8] sm:$0xff]
    %v815 = vld [vmem:[#allocation5 + $0x1400] sm:$0xff]
    %v816 = vld [vmem:[#allocation5 + $0x1408] sm:$0xff]
    %v817 = vld [vmem:[#allocation5 + $0x1410] sm:$0xff]
    %v818 = vld [vmem:[#allocation5 + $0x1418] sm:$0xff]
    %v819 = vld [vmem:[#allocation5 + $0x1420] sm:$0xff]
    %v820 = vld [vmem:[#allocation5 + $0x1428] sm:$0xff]
    %v821 = vld [vmem:[#allocation5 + $0x1430] sm:$0xff]
    %v822 = vld [vmem:[#allocation5 + $0x1438] sm:$0xff]
    %v823 = vld [vmem:[#allocation5 + $0x1440] sm:$0xff]
    %v824 = vld [vmem:[#allocation5 + $0x1448] sm:$0xff]
    %v825 = vld [vmem:[#allocation5 + $0x1450] sm:$0xff]
    %v826 = vld [vmem:[#allocation5 + $0x1458] sm:$0xff]
    %v827 = vld [vmem:[#allocation5 + $0x1460] sm:$0xff]
    %v828 = vld [vmem:[#allocation5 + $0x1468] sm:$0xff]
    %v829 = vld [vmem:[#allocation5 + $0x1470] sm:$0xff]
    %v830 = vld [vmem:[#allocation5 + $0x1478] sm:$0xff]
    %v831 = vld [vmem:[#allocation5 + $0x1480] sm:$0xff]
    %v832 = vld [vmem:[#allocation5 + $0x1488] sm:$0xff]
    %v833 = vld [vmem:[#allocation5 + $0x1490] sm:$0xff]
    %v834 = vld [vmem:[#allocation5 + $0x1498] sm:$0xff]
    %v835 = vld [vmem:[#allocation5 + $0x14a0] sm:$0xff]
    %v836 = vld [vmem:[#allocation5 + $0x14a8] sm:$0xff]
    %v837 = vld [vmem:[#allocation5 + $0x14b0] sm:$0xff]
    %v838 = vld [vmem:[#allocation5 + $0x14b8] sm:$0xff]
    %v839 = vld [vmem:[#allocation5 + $0x14c0] sm:$0xff]
    %v840 = vld [vmem:[#allocation5 + $0x14c8] sm:$0xff]
    %v841 = vld [vmem:[#allocation5 + $0x14d0] sm:$0xff]
    %v842 = vld [vmem:[#allocation5 + $0x14d8] sm:$0xff]
    %v843 = vld [vmem:[#allocation5 + $0x14e0] sm:$0xff]
    %v844 = vld [vmem:[#allocation5 + $0x14e8] sm:$0xff]
    %v845 = vld [vmem:[#allocation5 + $0x14f0] sm:$0xff]
    %v846 = vld [vmem:[#allocation5 + $0x14f8] sm:$0xff]
    %v847 = vld [vmem:[#allocation5 + $0x1500] sm:$0x7]
    %v848 = vld [vmem:[#allocation5 + $0x1508] sm:$0x7]
    %v849 = vld [vmem:[#allocation5 + $0x1510] sm:$0x7]
    %v850 = vld [vmem:[#allocation5 + $0x1518] sm:$0x7]
    %v851 = vld [vmem:[#allocation5 + $0x1520] sm:$0x7]
    %v852 = vld [vmem:[#allocation5 + $0x1528] sm:$0x7]
    %v853 = vld [vmem:[#allocation5 + $0x1530] sm:$0x7]
    %v854 = vld [vmem:[#allocation5 + $0x1538] sm:$0x7]
    %v855 = vld [vmem:[#allocation7] sm:$0xff]
    %v857 = vlaneseq
    %v858 = vshrl.u32 %v857, 7
    %v859 = vsub.s32 0, %v858
    %v860 = vrot.slane %v855, %v859
    %v861 = vlaneseq
    %v862 = vshrl.u32 %v861, 7
    %v863 = vsub.s32 1, %v862
    %v864 = vrot.slane %v855, %v863
    %v865 = vlaneseq
    %v866 = vshrl.u32 %v865, 7
    %v867 = vsub.s32 2, %v866
    %v868 = vrot.slane %v855, %v867
    %v869 = vlaneseq
    %v870 = vshrl.u32 %v869, 7
    %v871 = vsub.s32 3, %v870
    %v872 = vrot.slane %v855, %v871
    %v873 = vlaneseq
    %v874 = vshrl.u32 %v873, 7
    %v875 = vsub.s32 4, %v874
    %v876 = vrot.slane %v855, %v875
    %v877 = vlaneseq
    %v878 = vshrl.u32 %v877, 7
    %v879 = vsub.s32 5, %v878
    %v880 = vrot.slane %v855, %v879
    %v881 = vlaneseq
    %v882 = vshrl.u32 %v881, 7
    %v883 = vsub.s32 6, %v882
    %v884 = vrot.slane %v855, %v883
    %v885 = vlaneseq
    %v886 = vshrl.u32 %v885, 7
    %v887 = vsub.s32 7, %v886
    %v888 = vrot.slane %v855, %v887
    %v899 = vcombine.high %v173, %v173
    %v901 = vunpack.c.l.s4 1983009808
    %v902 = vunpack.c.0.s8 %v901
    %v903 = vlaneseq
    %v904 = vshrl.u32 %v903, 7
    %v905 = vsub.s32 %v902, %v904
    %v906 = vrot.slane %v173, %v905
    %v908 = vunpack.c.l.s4 1983009808
    %v909 = vunpack.c.0.s8 %v908
    %v910 = vlaneseq
    %v911 = vshrl.u32 %v910, 7
    %v912 = vsub.s32 %v909, %v911
    %v913 = vrot.slane %v899, %v912
    %v914 = vcombine.high %v906, %v906
    %v915 = vcombine.high %v913, %v913
    %v917 = vunpack.c.l.s4 1983009808
    %v918 = vunpack.c.0.s8 %v917
    %v919 = vlaneseq
    %v920 = vshrl.u32 %v919, 7
    %v921 = vsub.s32 %v918, %v920
    %v922 = vrot.slane %v174, %v921
    %v923 = vcombine.high %v922, %v922
    %vm929 = vcmask 285696
    %v930 = vsel %vm929, %v923, 0
    %vm932 = vcmask 1042432
    %v934 = vsel %vm932, %v847, 0
    %v937 = vsel %vm932, %v848, 0
    %v940 = vsel %vm932, %v849, 0
    %v943 = vsel %vm932, %v850, 0
    %v946 = vsel %vm932, %v851, 0
    %v949 = vsel %vm932, %v852, 0
    %v952 = vsel %vm932, %v853, 0
    %v955 = vsel %vm932, %v854, 0
    %957 = vmatprep.subr.mxu0 %v296
    %958 = vmatpush1.msra.mxu0 %v295
    %959 = vmatprep.subr.mxu0 %v288
    %960 = vmatpush1.msra.mxu0 %v287
    %961 = vmatprep.subr.mxu0 %v280
    %962 = vmatpush1.msra.mxu0 %v279
    %963 = vmatprep.subr.mxu0 %v272
    %964 = vmatpush1.msra.mxu0 %v271
    %965 = vmatprep.subr.mxu0 %v264
    %966 = vmatpush1.msra.mxu0 %v263
    %967 = vmatprep.subr.mxu0 %v256
    %968 = vmatpush1.msra.mxu0 %v255
    %969 = vmatprep.subr.mxu0 %v248
    %970 = vmatpush1.msra.mxu0 %v247
    %971 = vmatprep.subr.mxu0 %v240
    %972 = vmatpush1.msra.mxu0 %v239
    %973 = vmatprep.subr.mxu0 %v232
    %974 = vmatpush1.msra.mxu0 %v231
    %975 = vmatprep.subr.mxu0 %v224
    %976 = vmatpush1.msra.mxu0 %v223
    %977 = vmatprep.subr.mxu0 %v216
    %978 = vmatpush1.msra.mxu0 %v215
    %979 = vmatprep.subr.mxu0 %v208
    %980 = vmatpush1.msra.mxu0 %v207
    %981 = vmatprep.subr.mxu0 %v200
    %982 = vmatpush1.msra.mxu0 %v199
    %983 = vmatprep.subr.mxu0 %v192
    %984 = vmatpush1.msra.mxu0 %v191
    %985 = vmatprep.subr.mxu0 %v184
    %986 = vmatpush1.msra.mxu0 %v183
    %987 = vmatprep.subr.mxu0 %v176
    %988 = vmatpush1.msra.mxu0 %v175
    %989 = vmatprep.subr.mxu0 %v424
    %990 = vmatpush2.msra.mxu0 %v423
    %991 = vmatprep.subr.mxu0 %v416
    %992 = vmatpush2.msra.mxu0 %v415
    %993 = vmatprep.subr.mxu0 %v408
    %994 = vmatpush2.msra.mxu0 %v407
    %995 = vmatprep.subr.mxu0 %v400
    %996 = vmatpush2.msra.mxu0 %v399
    %997 = vmatprep.subr.mxu0 %v392
    %998 = vmatpush2.msra.mxu0 %v391
    %999 = vmatprep.subr.mxu0 %v384
    %1000 = vmatpush2.msra.mxu0 %v383
    %1001 = vmatprep.subr.mxu0 %v376
    %1002 = vmatpush2.msra.mxu0 %v375
    %1003 = vmatprep.subr.mxu0 %v368
    %1004 = vmatpush2.msra.mxu0 %v367
    %1005 = vmatprep.subr.mxu0 %v360
    %1006 = vmatpush2.msra.mxu0 %v359
    %1007 = vmatprep.subr.mxu0 %v352
    %1008 = vmatpush2.msra.mxu0 %v351
    %1009 = vmatprep.subr.mxu0 %v344
    %1010 = vmatpush2.msra.mxu0 %v343
    %1011 = vmatprep.subr.mxu0 %v336
    %1012 = vmatpush2.msra.mxu0 %v335
    %1013 = vmatprep.subr.mxu0 %v328
    %1014 = vmatpush2.msra.mxu0 %v327
    %1015 = vmatprep.subr.mxu0 %v320
    %1016 = vmatpush2.msra.mxu0 %v319
    %1017 = vmatprep.subr.mxu0 %v312
    %1018 = vmatpush2.msra.mxu0 %v311
    %1019 = vmatprep.subr.mxu0 %v304
    %1020 = vmatpush2.msra.mxu0 %v303
    %1021 = vmatprep.mubr.f32.mxu0 %v914
    %1022 = vmatmul.mubr.f32.gmra.mxu0 %v906
    %v1023 = vpop.f32.mrf.mxu0
    %v1024 = vadd.f32 %v860, %v1023
    %v1025 = vpop.f32.mrf.mxu0
    %v1026 = vadd.f32 %v864, %v1025
    %1027 = vdwg.mxu0
    %1028 = vmatprep.subr.mxu0 %v552
    %1029 = vmatpush1.msra.mxu0 %v551
    %1030 = vmatprep.subr.mxu0 %v544
    %1031 = vmatpush1.msra.mxu0 %v543
    %1032 = vmatprep.subr.mxu0 %v536
    %1033 = vmatpush1.msra.mxu0 %v535
    %1034 = vmatprep.subr.mxu0 %v528
    %1035 = vmatpush1.msra.mxu0 %v527
    %1036 = vmatprep.subr.mxu0 %v520
    %1037 = vmatpush1.msra.mxu0 %v519
    %1038 = vmatprep.subr.mxu0 %v512
    %1039 = vmatpush1.msra.mxu0 %v511
    %1040 = vmatprep.subr.mxu0 %v504
    %1041 = vmatpush1.msra.mxu0 %v503
    %1042 = vmatprep.subr.mxu0 %v496
    %1043 = vmatpush1.msra.mxu0 %v495
    %1044 = vmatprep.subr.mxu0 %v488
    %1045 = vmatpush1.msra.mxu0 %v487
    %1046 = vmatprep.subr.mxu0 %v480
    %1047 = vmatpush1.msra.mxu0 %v479
    %1048 = vmatprep.subr.mxu0 %v472
    %1049 = vmatpush1.msra.mxu0 %v471
    %1050 = vmatprep.subr.mxu0 %v464
    %1051 = vmatpush1.msra.mxu0 %v463
    %1052 = vmatprep.subr.mxu0 %v456
    %1053 = vmatpush1.msra.mxu0 %v455
    %1054 = vmatprep.subr.mxu0 %v448
    %1055 = vmatpush1.msra.mxu0 %v447
    %1056 = vmatprep.subr.mxu0 %v440
    %1057 = vmatpush1.msra.mxu0 %v439
    %1058 = vmatprep.subr.mxu0 %v432
    %1059 = vmatpush1.msra.mxu0 %v431
    %1060 = vmatprep.subr.mxu0 %v680
    %1061 = vmatpush2.msra.mxu0 %v679
    %1062 = vmatprep.subr.mxu0 %v672
    %1063 = vmatpush2.msra.mxu0 %v671
    %1064 = vmatprep.subr.mxu0 %v664
    %1065 = vmatpush2.msra.mxu0 %v663
    %1066 = vmatprep.subr.mxu0 %v656
    %1067 = vmatpush2.msra.mxu0 %v655
    %1068 = vmatprep.subr.mxu0 %v648
    %1069 = vmatpush2.msra.mxu0 %v647
    %1070 = vmatprep.subr.mxu0 %v640
    %1071 = vmatpush2.msra.mxu0 %v639
    %1072 = vmatprep.subr.mxu0 %v632
    %1073 = vmatpush2.msra.mxu0 %v631
    %1074 = vmatprep.subr.mxu0 %v624
    %1075 = vmatpush2.msra.mxu0 %v623
    %1076 = vmatprep.subr.mxu0 %v616
    %1077 = vmatpush2.msra.mxu0 %v615
    %1078 = vmatprep.subr.mxu0 %v608
    %1079 = vmatpush2.msra.mxu0 %v607
    %1080 = vmatprep.subr.mxu0 %v600
    %1081 = vmatpush2.msra.mxu0 %v599
    %1082 = vmatprep.subr.mxu0 %v592
    %1083 = vmatpush2.msra.mxu0 %v591
    %1084 = vmatprep.subr.mxu0 %v584
    %1085 = vmatpush2.msra.mxu0 %v583
    %1086 = vmatprep.subr.mxu0 %v576
    %1087 = vmatpush2.msra.mxu0 %v575
    %1088 = vmatprep.subr.mxu0 %v568
    %1089 = vmatpush2.msra.mxu0 %v567
    %1090 = vmatprep.subr.mxu0 %v560
    %1091 = vmatpush2.msra.mxu0 %v559
    %1092 = vmatprep.mubr.f32.mxu0 %v915
    %1093 = vmatmul.mubr.f32.gmra.mxu0 %v913
    %v1094 = vpop.f32.mrf.mxu0
    %v1095 = vadd.f32 %v1024, %v1094
    %v1096 = vpop.f32.mrf.mxu0
    %v1097 = vadd.f32 %v1026, %v1096
    %1098 = vdwg.mxu0
    %1099 = vmatprep.subr.mxu0 %v808
    %1100 = vmatpush1.msra.mxu0 %v807
    %1101 = vmatprep.subr.mxu0 %v800
    %1102 = vmatpush1.msra.mxu0 %v799
    %1103 = vmatprep.subr.mxu0 %v792
    %1104 = vmatpush1.msra.mxu0 %v791
    %1105 = vmatprep.subr.mxu0 %v784
    %1106 = vmatpush1.msra.mxu0 %v783
    %1107 = vmatprep.subr.mxu0 %v776
    %1108 = vmatpush1.msra.mxu0 %v775
    %1109 = vmatprep.subr.mxu0 %v768
    %1110 = vmatpush1.msra.mxu0 %v767
    %1111 = vmatprep.subr.mxu0 %v760
    %1112 = vmatpush1.msra.mxu0 %v759
    %1113 = vmatprep.subr.mxu0 %v752
    %1114 = vmatpush1.msra.mxu0 %v751
    %1115 = vmatprep.subr.mxu0 %v744
    %1116 = vmatpush1.msra.mxu0 %v743
    %1117 = vmatprep.subr.mxu0 %v736
    %1118 = vmatpush1.msra.mxu0 %v735
    %1119 = vmatprep.subr.mxu0 %v728
    %1120 = vmatpush1.msra.mxu0 %v727
    %1121 = vmatprep.subr.mxu0 %v720
    %1122 = vmatpush1.msra.mxu0 %v719
    %1123 = vmatprep.subr.mxu0 %v712
    %1124 = vmatpush1.msra.mxu0 %v711
    %1125 = vmatprep.subr.mxu0 %v704
    %1126 = vmatpush1.msra.mxu0 %v703
    %1127 = vmatprep.subr.mxu0 %v696
    %1128 = vmatpush1.msra.mxu0 %v695
    %1129 = vmatprep.subr.mxu0 %v688
    %1130 = vmatpush1.msra.mxu0 %v687
    %1131 = vmatprep.subr.mxu0 0.0
    %1132 = vmatpush2.msra.mxu0 0.0
    %1133 = vmatprep.subr.mxu0 0.0
    %1134 = vmatpush2.msra.mxu0 0.0
    %1135 = vmatprep.subr.mxu0 0.0
    %1136 = vmatpush2.msra.mxu0 0.0
    %1137 = vmatprep.subr.mxu0 0.0
    %1138 = vmatpush2.msra.mxu0 0.0
    %1139 = vmatprep.subr.mxu0 0.0
    %1140 = vmatpush2.msra.mxu0 0.0
    %1141 = vmatprep.subr.mxu0 0.0
    %1142 = vmatpush2.msra.mxu0 0.0
    %1143 = vmatprep.subr.mxu0 0.0
    %1144 = vmatpush2.msra.mxu0 0.0
    %1145 = vmatprep.subr.mxu0 0.0
    %1146 = vmatpush2.msra.mxu0 0.0
    %1147 = vmatprep.subr.mxu0 0.0
    %1148 = vmatpush2.msra.mxu0 0.0
    %1149 = vmatprep.subr.mxu0 0.0
    %1150 = vmatpush2.msra.mxu0 0.0
    %1151 = vmatprep.subr.mxu0 0.0
    %1152 = vmatpush2.msra.mxu0 0.0
    %1153 = vmatprep.subr.mxu0 %v937
    %1154 = vmatpush2.msra.mxu0 %v934
    %1155 = vmatprep.subr.mxu0 %v840
    %1156 = vmatpush2.msra.mxu0 %v839
    %1157 = vmatprep.subr.mxu0 %v832
    %1158 = vmatpush2.msra.mxu0 %v831
    %1159 = vmatprep.subr.mxu0 %v824
    %1160 = vmatpush2.msra.mxu0 %v823
    %1161 = vmatprep.subr.mxu0 %v816
    %1162 = vmatpush2.msra.mxu0 %v815
    %1163 = vmatprep.mubr.f32.mxu0 %v930
    %1164 = vmatmul.mubr.f32.gmra.mxu0 %v922
    %v1165 = vpop.f32.mrf.mxu0
    %v1166 = vadd.f32 %v1095, %v1165
    %v1167 = vpop.f32.mrf.mxu0
    %v1168 = vadd.f32 %v1097, %v1167
    %1169 = vdwg.mxu0
    %1170 = vmatprep.subr.mxu0 %v298
    %1171 = vmatpush1.msra.mxu0 %v297
    %1172 = vmatprep.subr.mxu0 %v290
    %1173 = vmatpush1.msra.mxu0 %v289
    %1174 = vmatprep.subr.mxu0 %v282
    %1175 = vmatpush1.msra.mxu0 %v281
    %1176 = vmatprep.subr.mxu0 %v274
    %1177 = vmatpush1.msra.mxu0 %v273
    %1178 = vmatprep.subr.mxu0 %v266
    %1179 = vmatpush1.msra.mxu0 %v265
    %1180 = vmatprep.subr.mxu0 %v258
    %1181 = vmatpush1.msra.mxu0 %v257
    %1182 = vmatprep.subr.mxu0 %v250
    %1183 = vmatpush1.msra.mxu0 %v249
    %1184 = vmatprep.subr.mxu0 %v242
    %1185 = vmatpush1.msra.mxu0 %v241
    %1186 = vmatprep.subr.mxu0 %v234
    %1187 = vmatpush1.msra.mxu0 %v233
    %1188 = vmatprep.subr.mxu0 %v226
    %1189 = vmatpush1.msra.mxu0 %v225
    %1190 = vmatprep.subr.mxu0 %v218
    %1191 = vmatpush1.msra.mxu0 %v217
    %1192 = vmatprep.subr.mxu0 %v210
    %1193 = vmatpush1.msra.mxu0 %v209
    %1194 = vmatprep.subr.mxu0 %v202
    %1195 = vmatpush1.msra.mxu0 %v201
    %1196 = vmatprep.subr.mxu0 %v194
    %1197 = vmatpush1.msra.mxu0 %v193
    %1198 = vmatprep.subr.mxu0 %v186
    %1199 = vmatpush1.msra.mxu0 %v185
    %1200 = vmatprep.subr.mxu0 %v178
    %1201 = vmatpush1.msra.mxu0 %v177
    %1202 = vmatprep.subr.mxu0 %v426
    %1203 = vmatpush2.msra.mxu0 %v425
    %1204 = vmatprep.subr.mxu0 %v418
    %1205 = vmatpush2.msra.mxu0 %v417
    %1206 = vmatprep.subr.mxu0 %v410
    %1207 = vmatpush2.msra.mxu0 %v409
    %1208 = vmatprep.subr.mxu0 %v402
    %1209 = vmatpush2.msra.mxu0 %v401
    %1210 = vmatprep.subr.mxu0 %v394
    %1211 = vmatpush2.msra.mxu0 %v393
    %1212 = vmatprep.subr.mxu0 %v386
    %1213 = vmatpush2.msra.mxu0 %v385
    %1214 = vmatprep.subr.mxu0 %v378
    %1215 = vmatpush2.msra.mxu0 %v377
    %1216 = vmatprep.subr.mxu0 %v370
    %1217 = vmatpush2.msra.mxu0 %v369
    %1218 = vmatprep.subr.mxu0 %v362
    %1219 = vmatpush2.msra.mxu0 %v361
    %1220 = vmatprep.subr.mxu0 %v354
    %1221 = vmatpush2.msra.mxu0 %v353
    %1222 = vmatprep.subr.mxu0 %v346
    %1223 = vmatpush2.msra.mxu0 %v345
    %1224 = vmatprep.subr.mxu0 %v338
    %1225 = vmatpush2.msra.mxu0 %v337
    %1226 = vmatprep.subr.mxu0 %v330
    %1227 = vmatpush2.msra.mxu0 %v329
    %1228 = vmatprep.subr.mxu0 %v322
    %1229 = vmatpush2.msra.mxu0 %v321
    %1230 = vmatprep.subr.mxu0 %v314
    %1231 = vmatpush2.msra.mxu0 %v313
    %1232 = vmatprep.subr.mxu0 %v306
    %1233 = vmatpush2.msra.mxu0 %v305
    %1234 = vmatprep.mubr.f32.mxu0 %v914
    %1235 = vmatmul.mubr.f32.gmra.mxu0 %v906
    %v1236 = vpop.f32.mrf.mxu0
    %v1237 = vadd.f32 %v868, %v1236
    %v1238 = vpop.f32.mrf.mxu0
    %v1239 = vadd.f32 %v872, %v1238
    %1240 = vdwg.mxu0
    %1241 = vmatprep.subr.mxu0 %v554
    %1242 = vmatpush1.msra.mxu0 %v553
    %1243 = vmatprep.subr.mxu0 %v546
    %1244 = vmatpush1.msra.mxu0 %v545
    %1245 = vmatprep.subr.mxu0 %v538
    %1246 = vmatpush1.msra.mxu0 %v537
    %1247 = vmatprep.subr.mxu0 %v530
    %1248 = vmatpush1.msra.mxu0 %v529
    %1249 = vmatprep.subr.mxu0 %v522
    %1250 = vmatpush1.msra.mxu0 %v521
    %1251 = vmatprep.subr.mxu0 %v514
    %1252 = vmatpush1.msra.mxu0 %v513
    %1253 = vmatprep.subr.mxu0 %v506
    %1254 = vmatpush1.msra.mxu0 %v505
    %1255 = vmatprep.subr.mxu0 %v498
    %1256 = vmatpush1.msra.mxu0 %v497
    %1257 = vmatprep.subr.mxu0 %v490
    %1258 = vmatpush1.msra.mxu0 %v489
    %1259 = vmatprep.subr.mxu0 %v482
    %1260 = vmatpush1.msra.mxu0 %v481
    %1261 = vmatprep.subr.mxu0 %v474
    %1262 = vmatpush1.msra.mxu0 %v473
    %1263 = vmatprep.subr.mxu0 %v466
    %1264 = vmatpush1.msra.mxu0 %v465
    %1265 = vmatprep.subr.mxu0 %v458
    %1266 = vmatpush1.msra.mxu0 %v457
    %1267 = vmatprep.subr.mxu0 %v450
    %1268 = vmatpush1.msra.mxu0 %v449
    %1269 = vmatprep.subr.mxu0 %v442
    %1270 = vmatpush1.msra.mxu0 %v441
    %1271 = vmatprep.subr.mxu0 %v434
    %1272 = vmatpush1.msra.mxu0 %v433
    %1273 = vmatprep.subr.mxu0 %v682
    %1274 = vmatpush2.msra.mxu0 %v681
    %1275 = vmatprep.subr.mxu0 %v674
    %1276 = vmatpush2.msra.mxu0 %v673
    %1277 = vmatprep.subr.mxu0 %v666
    %1278 = vmatpush2.msra.mxu0 %v665
    %1279 = vmatprep.subr.mxu0 %v658
    %1280 = vmatpush2.msra.mxu0 %v657
    %1281 = vmatprep.subr.mxu0 %v650
    %1282 = vmatpush2.msra.mxu0 %v649
    %1283 = vmatprep.subr.mxu0 %v642
    %1284 = vmatpush2.msra.mxu0 %v641
    %1285 = vmatprep.subr.mxu0 %v634
    %1286 = vmatpush2.msra.mxu0 %v633
    %1287 = vmatprep.subr.mxu0 %v626
    %1288 = vmatpush2.msra.mxu0 %v625
    %1289 = vmatprep.subr.mxu0 %v618
    %1290 = vmatpush2.msra.mxu0 %v617
    %1291 = vmatprep.subr.mxu0 %v610
    %1292 = vmatpush2.msra.mxu0 %v609
    %1293 = vmatprep.subr.mxu0 %v602
    %1294 = vmatpush2.msra.mxu0 %v601
    %1295 = vmatprep.subr.mxu0 %v594
    %1296 = vmatpush2.msra.mxu0 %v593
    %1297 = vmatprep.subr.mxu0 %v586
    %1298 = vmatpush2.msra.mxu0 %v585
    %1299 = vmatprep.subr.mxu0 %v578
    %1300 = vmatpush2.msra.mxu0 %v577
    %1301 = vmatprep.subr.mxu0 %v570
    %1302 = vmatpush2.msra.mxu0 %v569
    %1303 = vmatprep.subr.mxu0 %v562
    %1304 = vmatpush2.msra.mxu0 %v561
    %1305 = vmatprep.mubr.f32.mxu0 %v915
    %1306 = vmatmul.mubr.f32.gmra.mxu0 %v913
    %v1307 = vpop.f32.mrf.mxu0
    %v1308 = vadd.f32 %v1237, %v1307
    %v1309 = vpop.f32.mrf.mxu0
    %v1310 = vadd.f32 %v1239, %v1309
    %1311 = vdwg.mxu0
    %1312 = vmatprep.subr.mxu0 %v810
    %1313 = vmatpush1.msra.mxu0 %v809
    %1314 = vmatprep.subr.mxu0 %v802
    %1315 = vmatpush1.msra.mxu0 %v801
    %1316 = vmatprep.subr.mxu0 %v794
    %1317 = vmatpush1.msra.mxu0 %v793
    %1318 = vmatprep.subr.mxu0 %v786
    %1319 = vmatpush1.msra.mxu0 %v785
    %1320 = vmatprep.subr.mxu0 %v778
    %1321 = vmatpush1.msra.mxu0 %v777
    %1322 = vmatprep.subr.mxu0 %v770
    %1323 = vmatpush1.msra.mxu0 %v769
    %1324 = vmatprep.subr.mxu0 %v762
    %1325 = vmatpush1.msra.mxu0 %v761
    %1326 = vmatprep.subr.mxu0 %v754
    %1327 = vmatpush1.msra.mxu0 %v753
    %1328 = vmatprep.subr.mxu0 %v746
    %1329 = vmatpush1.msra.mxu0 %v745
    %1330 = vmatprep.subr.mxu0 %v738
    %1331 = vmatpush1.msra.mxu0 %v737
    %1332 = vmatprep.subr.mxu0 %v730
    %1333 = vmatpush1.msra.mxu0 %v729
    %1334 = vmatprep.subr.mxu0 %v722
    %1335 = vmatpush1.msra.mxu0 %v721
    %1336 = vmatprep.subr.mxu0 %v714
    %1337 = vmatpush1.msra.mxu0 %v713
    %1338 = vmatprep.subr.mxu0 %v706
    %1339 = vmatpush1.msra.mxu0 %v705
    %1340 = vmatprep.subr.mxu0 %v698
    %1341 = vmatpush1.msra.mxu0 %v697
    %1342 = vmatprep.subr.mxu0 %v690
    %1343 = vmatpush1.msra.mxu0 %v689
    %1344 = vmatprep.subr.mxu0 0.0
    %1345 = vmatpush2.msra.mxu0 0.0
    %1346 = vmatprep.subr.mxu0 0.0
    %1347 = vmatpush2.msra.mxu0 0.0
    %1348 = vmatprep.subr.mxu0 0.0
    %1349 = vmatpush2.msra.mxu0 0.0
    %1350 = vmatprep.subr.mxu0 0.0
    %1351 = vmatpush2.msra.mxu0 0.0
    %1352 = vmatprep.subr.mxu0 0.0
    %1353 = vmatpush2.msra.mxu0 0.0
    %1354 = vmatprep.subr.mxu0 0.0
    %1355 = vmatpush2.msra.mxu0 0.0
    %1356 = vmatprep.subr.mxu0 0.0
    %1357 = vmatpush2.msra.mxu0 0.0
    %1358 = vmatprep.subr.mxu0 0.0
    %1359 = vmatpush2.msra.mxu0 0.0
    %1360 = vmatprep.subr.mxu0 0.0
    %1361 = vmatpush2.msra.mxu0 0.0
    %1362 = vmatprep.subr.mxu0 0.0
    %1363 = vmatpush2.msra.mxu0 0.0
    %1364 = vmatprep.subr.mxu0 0.0
    %1365 = vmatpush2.msra.mxu0 0.0
    %1366 = vmatprep.subr.mxu0 %v943
    %1367 = vmatpush2.msra.mxu0 %v940
    %1368 = vmatprep.subr.mxu0 %v842
    %1369 = vmatpush2.msra.mxu0 %v841
    %1370 = vmatprep.subr.mxu0 %v834
    %1371 = vmatpush2.msra.mxu0 %v833
    %1372 = vmatprep.subr.mxu0 %v826
    %1373 = vmatpush2.msra.mxu0 %v825
    %1374 = vmatprep.subr.mxu0 %v818
    %1375 = vmatpush2.msra.mxu0 %v817
    %1376 = vmatprep.mubr.f32.mxu0 %v930
    %1377 = vmatmul.mubr.f32.gmra.mxu0 %v922
    %v1378 = vpop.f32.mrf.mxu0
    %v1379 = vadd.f32 %v1308, %v1378
    %v1380 = vpop.f32.mrf.mxu0
    %v1381 = vadd.f32 %v1310, %v1380
    %1382 = vdwg.mxu0
    %1383 = vmatprep.subr.mxu0 %v300
    %1384 = vmatpush1.msra.mxu0 %v299
    %1385 = vmatprep.subr.mxu0 %v292
    %1386 = vmatpush1.msra.mxu0 %v291
    %1387 = vmatprep.subr.mxu0 %v284
    %1388 = vmatpush1.msra.mxu0 %v283
    %1389 = vmatprep.subr.mxu0 %v276
    %1390 = vmatpush1.msra.mxu0 %v275
    %1391 = vmatprep.subr.mxu0 %v268
    %1392 = vmatpush1.msra.mxu0 %v267
    %1393 = vmatprep.subr.mxu0 %v260
    %1394 = vmatpush1.msra.mxu0 %v259
    %1395 = vmatprep.subr.mxu0 %v252
    %1396 = vmatpush1.msra.mxu0 %v251
    %1397 = vmatprep.subr.mxu0 %v244
    %1398 = vmatpush1.msra.mxu0 %v243
    %1399 = vmatprep.subr.mxu0 %v236
    %1400 = vmatpush1.msra.mxu0 %v235
    %1401 = vmatprep.subr.mxu0 %v228
    %1402 = vmatpush1.msra.mxu0 %v227
    %1403 = vmatprep.subr.mxu0 %v220
    %1404 = vmatpush1.msra.mxu0 %v219
    %1405 = vmatprep.subr.mxu0 %v212
    %1406 = vmatpush1.msra.mxu0 %v211
    %1407 = vmatprep.subr.mxu0 %v204
    %1408 = vmatpush1.msra.mxu0 %v203
    %1409 = vmatprep.subr.mxu0 %v196
    %1410 = vmatpush1.msra.mxu0 %v195
    %1411 = vmatprep.subr.mxu0 %v188
    %1412 = vmatpush1.msra.mxu0 %v187
    %1413 = vmatprep.subr.mxu0 %v180
    %1414 = vmatpush1.msra.mxu0 %v179
    %1415 = vmatprep.subr.mxu0 %v428
    %1416 = vmatpush2.msra.mxu0 %v427
    %1417 = vmatprep.subr.mxu0 %v420
    %1418 = vmatpush2.msra.mxu0 %v419
    %1419 = vmatprep.subr.mxu0 %v412
    %1420 = vmatpush2.msra.mxu0 %v411
    %1421 = vmatprep.subr.mxu0 %v404
    %1422 = vmatpush2.msra.mxu0 %v403
    %1423 = vmatprep.subr.mxu0 %v396
    %1424 = vmatpush2.msra.mxu0 %v395
    %1425 = vmatprep.subr.mxu0 %v388
    %1426 = vmatpush2.msra.mxu0 %v387
    %1427 = vmatprep.subr.mxu0 %v380
    %1428 = vmatpush2.msra.mxu0 %v379
    %1429 = vmatprep.subr.mxu0 %v372
    %1430 = vmatpush2.msra.mxu0 %v371
    %1431 = vmatprep.subr.mxu0 %v364
    %1432 = vmatpush2.msra.mxu0 %v363
    %1433 = vmatprep.subr.mxu0 %v356
    %1434 = vmatpush2.msra.mxu0 %v355
    %1435 = vmatprep.subr.mxu0 %v348
    %1436 = vmatpush2.msra.mxu0 %v347
    %1437 = vmatprep.subr.mxu0 %v340
    %1438 = vmatpush2.msra.mxu0 %v339
    %1439 = vmatprep.subr.mxu0 %v332
    %1440 = vmatpush2.msra.mxu0 %v331
    %1441 = vmatprep.subr.mxu0 %v324
    %1442 = vmatpush2.msra.mxu0 %v323
    %1443 = vmatprep.subr.mxu0 %v316
    %1444 = vmatpush2.msra.mxu0 %v315
    %1445 = vmatprep.subr.mxu0 %v308
    %1446 = vmatpush2.msra.mxu0 %v307
    %1447 = vmatprep.mubr.f32.mxu0 %v914
    %1448 = vmatmul.mubr.f32.gmra.mxu0 %v906
    %v1449 = vpop.f32.mrf.mxu0
    %v1450 = vadd.f32 %v876, %v1449
    %v1451 = vpop.f32.mrf.mxu0
    %v1452 = vadd.f32 %v880, %v1451
    %1453 = vdwg.mxu0
    %1454 = vmatprep.subr.mxu0 %v556
    %1455 = vmatpush1.msra.mxu0 %v555
    %1456 = vmatprep.subr.mxu0 %v548
    %1457 = vmatpush1.msra.mxu0 %v547
    %1458 = vmatprep.subr.mxu0 %v540
    %1459 = vmatpush1.msra.mxu0 %v539
    %1460 = vmatprep.subr.mxu0 %v532
    %1461 = vmatpush1.msra.mxu0 %v531
    %1462 = vmatprep.subr.mxu0 %v524
    %1463 = vmatpush1.msra.mxu0 %v523
    %1464 = vmatprep.subr.mxu0 %v516
    %1465 = vmatpush1.msra.mxu0 %v515
    %1466 = vmatprep.subr.mxu0 %v508
    %1467 = vmatpush1.msra.mxu0 %v507
    %1468 = vmatprep.subr.mxu0 %v500
    %1469 = vmatpush1.msra.mxu0 %v499
    %1470 = vmatprep.subr.mxu0 %v492
    %1471 = vmatpush1.msra.mxu0 %v491
    %1472 = vmatprep.subr.mxu0 %v484
    %1473 = vmatpush1.msra.mxu0 %v483
    %1474 = vmatprep.subr.mxu0 %v476
    %1475 = vmatpush1.msra.mxu0 %v475
    %1476 = vmatprep.subr.mxu0 %v468
    %1477 = vmatpush1.msra.mxu0 %v467
    %1478 = vmatprep.subr.mxu0 %v460
    %1479 = vmatpush1.msra.mxu0 %v459
    %1480 = vmatprep.subr.mxu0 %v452
    %1481 = vmatpush1.msra.mxu0 %v451
    %1482 = vmatprep.subr.mxu0 %v444
    %1483 = vmatpush1.msra.mxu0 %v443
    %1484 = vmatprep.subr.mxu0 %v436
    %1485 = vmatpush1.msra.mxu0 %v435
    %1486 = vmatprep.subr.mxu0 %v684
    %1487 = vmatpush2.msra.mxu0 %v683
    %1488 = vmatprep.subr.mxu0 %v676
    %1489 = vmatpush2.msra.mxu0 %v675
    %1490 = vmatprep.subr.mxu0 %v668
    %1491 = vmatpush2.msra.mxu0 %v667
    %1492 = vmatprep.subr.mxu0 %v660
    %1493 = vmatpush2.msra.mxu0 %v659
    %1494 = vmatprep.subr.mxu0 %v652
    %1495 = vmatpush2.msra.mxu0 %v651
    %1496 = vmatprep.subr.mxu0 %v644
    %1497 = vmatpush2.msra.mxu0 %v643
    %1498 = vmatprep.subr.mxu0 %v636
    %1499 = vmatpush2.msra.mxu0 %v635
    %1500 = vmatprep.subr.mxu0 %v628
    %1501 = vmatpush2.msra.mxu0 %v627
    %1502 = vmatprep.subr.mxu0 %v620
    %1503 = vmatpush2.msra.mxu0 %v619
    %1504 = vmatprep.subr.mxu0 %v612
    %1505 = vmatpush2.msra.mxu0 %v611
    %1506 = vmatprep.subr.mxu0 %v604
    %1507 = vmatpush2.msra.mxu0 %v603
    %1508 = vmatprep.subr.mxu0 %v596
    %1509 = vmatpush2.msra.mxu0 %v595
    %1510 = vmatprep.subr.mxu0 %v588
    %1511 = vmatpush2.msra.mxu0 %v587
    %1512 = vmatprep.subr.mxu0 %v580
    %1513 = vmatpush2.msra.mxu0 %v579
    %1514 = vmatprep.subr.mxu0 %v572
    %1515 = vmatpush2.msra.mxu0 %v571
    %1516 = vmatprep.subr.mxu0 %v564
    %1517 = vmatpush2.msra.mxu0 %v563
    %1518 = vmatprep.mubr.f32.mxu0 %v915
    %1519 = vmatmul.mubr.f32.gmra.mxu0 %v913
    %v1520 = vpop.f32.mrf.mxu0
    %v1521 = vadd.f32 %v1450, %v1520
    %v1522 = vpop.f32.mrf.mxu0
    %v1523 = vadd.f32 %v1452, %v1522
    %1524 = vdwg.mxu0
    %1525 = vmatprep.subr.mxu0 %v812
    %1526 = vmatpush1.msra.mxu0 %v811
    %1527 = vmatprep.subr.mxu0 %v804
    %1528 = vmatpush1.msra.mxu0 %v803
    %1529 = vmatprep.subr.mxu0 %v796
    %1530 = vmatpush1.msra.mxu0 %v795
    %1531 = vmatprep.subr.mxu0 %v788
    %1532 = vmatpush1.msra.mxu0 %v787
    %1533 = vmatprep.subr.mxu0 %v780
    %1534 = vmatpush1.msra.mxu0 %v779
    %1535 = vmatprep.subr.mxu0 %v772
    %1536 = vmatpush1.msra.mxu0 %v771
    %1537 = vmatprep.subr.mxu0 %v764
    %1538 = vmatpush1.msra.mxu0 %v763
    %1539 = vmatprep.subr.mxu0 %v756
    %1540 = vmatpush1.msra.mxu0 %v755
    %1541 = vmatprep.subr.mxu0 %v748
    %1542 = vmatpush1.msra.mxu0 %v747
    %1543 = vmatprep.subr.mxu0 %v740
    %1544 = vmatpush1.msra.mxu0 %v739
    %1545 = vmatprep.subr.mxu0 %v732
    %1546 = vmatpush1.msra.mxu0 %v731
    %1547 = vmatprep.subr.mxu0 %v724
    %1548 = vmatpush1.msra.mxu0 %v723
    %1549 = vmatprep.subr.mxu0 %v716
    %1550 = vmatpush1.msra.mxu0 %v715
    %1551 = vmatprep.subr.mxu0 %v708
    %1552 = vmatpush1.msra.mxu0 %v707
    %1553 = vmatprep.subr.mxu0 %v700
    %1554 = vmatpush1.msra.mxu0 %v699
    %1555 = vmatprep.subr.mxu0 %v692
    %1556 = vmatpush1.msra.mxu0 %v691
    %1557 = vmatprep.subr.mxu0 0.0
    %1558 = vmatpush2.msra.mxu0 0.0
    %1559 = vmatprep.subr.mxu0 0.0
    %1560 = vmatpush2.msra.mxu0 0.0
    %1561 = vmatprep.subr.mxu0 0.0
    %1562 = vmatpush2.msra.mxu0 0.0
    %1563 = vmatprep.subr.mxu0 0.0
    %1564 = vmatpush2.msra.mxu0 0.0
    %1565 = vmatprep.subr.mxu0 0.0
    %1566 = vmatpush2.msra.mxu0 0.0
    %1567 = vmatprep.subr.mxu0 0.0
    %1568 = vmatpush2.msra.mxu0 0.0
    %1569 = vmatprep.subr.mxu0 0.0
    %1570 = vmatpush2.msra.mxu0 0.0
    %1571 = vmatprep.subr.mxu0 0.0
    %1572 = vmatpush2.msra.mxu0 0.0
    %1573 = vmatprep.subr.mxu0 0.0
    %1574 = vmatpush2.msra.mxu0 0.0
    %1575 = vmatprep.subr.mxu0 0.0
    %1576 = vmatpush2.msra.mxu0 0.0
    %1577 = vmatprep.subr.mxu0 0.0
    %1578 = vmatpush2.msra.mxu0 0.0
    %1579 = vmatprep.subr.mxu0 %v949
    %1580 = vmatpush2.msra.mxu0 %v946
    %1581 = vmatprep.subr.mxu0 %v844
    %1582 = vmatpush2.msra.mxu0 %v843
    %1583 = vmatprep.subr.mxu0 %v836
    %1584 = vmatpush2.msra.mxu0 %v835
    %1585 = vmatprep.subr.mxu0 %v828
    %1586 = vmatpush2.msra.mxu0 %v827
    %1587 = vmatprep.subr.mxu0 %v820
    %1588 = vmatpush2.msra.mxu0 %v819
    %1589 = vmatprep.mubr.f32.mxu0 %v930
    %1590 = vmatmul.mubr.f32.gmra.mxu0 %v922
    %v1591 = vpop.f32.mrf.mxu0
    %v1592 = vadd.f32 %v1521, %v1591
    %v1593 = vpop.f32.mrf.mxu0
    %v1594 = vadd.f32 %v1523, %v1593
    %1595 = vdwg.mxu0
    %1596 = vmatprep.subr.mxu0 %v302
    %1597 = vmatpush1.msra.mxu0 %v301
    %1598 = vmatprep.subr.mxu0 %v294
    %1599 = vmatpush1.msra.mxu0 %v293
    %1600 = vmatprep.subr.mxu0 %v286
    %1601 = vmatpush1.msra.mxu0 %v285
    %1602 = vmatprep.subr.mxu0 %v278
    %1603 = vmatpush1.msra.mxu0 %v277
    %1604 = vmatprep.subr.mxu0 %v270
    %1605 = vmatpush1.msra.mxu0 %v269
    %1606 = vmatprep.subr.mxu0 %v262
    %1607 = vmatpush1.msra.mxu0 %v261
    %1608 = vmatprep.subr.mxu0 %v254
    %1609 = vmatpush1.msra.mxu0 %v253
    %1610 = vmatprep.subr.mxu0 %v246
    %1611 = vmatpush1.msra.mxu0 %v245
    %1612 = vmatprep.subr.mxu0 %v238
    %1613 = vmatpush1.msra.mxu0 %v237
    %1614 = vmatprep.subr.mxu0 %v230
    %1615 = vmatpush1.msra.mxu0 %v229
    %1616 = vmatprep.subr.mxu0 %v222
    %1617 = vmatpush1.msra.mxu0 %v221
    %1618 = vmatprep.subr.mxu0 %v214
    %1619 = vmatpush1.msra.mxu0 %v213
    %1620 = vmatprep.subr.mxu0 %v206
    %1621 = vmatpush1.msra.mxu0 %v205
    %1622 = vmatprep.subr.mxu0 %v198
    %1623 = vmatpush1.msra.mxu0 %v197
    %1624 = vmatprep.subr.mxu0 %v190
    %1625 = vmatpush1.msra.mxu0 %v189
    %1626 = vmatprep.subr.mxu0 %v182
    %1627 = vmatpush1.msra.mxu0 %v181
    %1628 = vmatprep.subr.mxu0 %v430
    %1629 = vmatpush2.msra.mxu0 %v429
    %1630 = vmatprep.subr.mxu0 %v422
    %1631 = vmatpush2.msra.mxu0 %v421
    %1632 = vmatprep.subr.mxu0 %v414
    %1633 = vmatpush2.msra.mxu0 %v413
    %1634 = vmatprep.subr.mxu0 %v406
    %1635 = vmatpush2.msra.mxu0 %v405
    %1636 = vmatprep.subr.mxu0 %v398
    %1637 = vmatpush2.msra.mxu0 %v397
    %1638 = vmatprep.subr.mxu0 %v390
    %1639 = vmatpush2.msra.mxu0 %v389
    %1640 = vmatprep.subr.mxu0 %v382
    %1641 = vmatpush2.msra.mxu0 %v381
    %1642 = vmatprep.subr.mxu0 %v374
    %1643 = vmatpush2.msra.mxu0 %v373
    %1644 = vmatprep.subr.mxu0 %v366
    %1645 = vmatpush2.msra.mxu0 %v365
    %1646 = vmatprep.subr.mxu0 %v358
    %1647 = vmatpush2.msra.mxu0 %v357
    %1648 = vmatprep.subr.mxu0 %v350
    %1649 = vmatpush2.msra.mxu0 %v349
    %1650 = vmatprep.subr.mxu0 %v342
    %1651 = vmatpush2.msra.mxu0 %v341
    %1652 = vmatprep.subr.mxu0 %v334
    %1653 = vmatpush2.msra.mxu0 %v333
    %1654 = vmatprep.subr.mxu0 %v326
    %1655 = vmatpush2.msra.mxu0 %v325
    %1656 = vmatprep.subr.mxu0 %v318
    %1657 = vmatpush2.msra.mxu0 %v317
    %1658 = vmatprep.subr.mxu0 %v310
    %1659 = vmatpush2.msra.mxu0 %v309
    %1660 = vmatprep.mubr.f32.mxu0 %v914
    %1661 = vmatmul.mubr.f32.gmra.mxu0 %v906
    %v1662 = vpop.f32.mrf.mxu0
    %v1663 = vadd.f32 %v884, %v1662
    %v1664 = vpop.f32.mrf.mxu0
    %v1665 = vadd.f32 %v888, %v1664
    %1666 = vdwg.mxu0
    %1667 = vmatprep.subr.mxu0 %v558
    %1668 = vmatpush1.msra.mxu0 %v557
    %1669 = vmatprep.subr.mxu0 %v550
    %1670 = vmatpush1.msra.mxu0 %v549
    %1671 = vmatprep.subr.mxu0 %v542
    %1672 = vmatpush1.msra.mxu0 %v541
    %1673 = vmatprep.subr.mxu0 %v534
    %1674 = vmatpush1.msra.mxu0 %v533
    %1675 = vmatprep.subr.mxu0 %v526
    %1676 = vmatpush1.msra.mxu0 %v525
    %1677 = vmatprep.subr.mxu0 %v518
    %1678 = vmatpush1.msra.mxu0 %v517
    %1679 = vmatprep.subr.mxu0 %v510
    %1680 = vmatpush1.msra.mxu0 %v509
    %1681 = vmatprep.subr.mxu0 %v502
    %1682 = vmatpush1.msra.mxu0 %v501
    %1683 = vmatprep.subr.mxu0 %v494
    %1684 = vmatpush1.msra.mxu0 %v493
    %1685 = vmatprep.subr.mxu0 %v486
    %1686 = vmatpush1.msra.mxu0 %v485
    %1687 = vmatprep.subr.mxu0 %v478
    %1688 = vmatpush1.msra.mxu0 %v477
    %1689 = vmatprep.subr.mxu0 %v470
    %1690 = vmatpush1.msra.mxu0 %v469
    %1691 = vmatprep.subr.mxu0 %v462
    %1692 = vmatpush1.msra.mxu0 %v461
    %1693 = vmatprep.subr.mxu0 %v454
    %1694 = vmatpush1.msra.mxu0 %v453
    %1695 = vmatprep.subr.mxu0 %v446
    %1696 = vmatpush1.msra.mxu0 %v445
    %1697 = vmatprep.subr.mxu0 %v438
    %1698 = vmatpush1.msra.mxu0 %v437
    %1699 = vmatprep.subr.mxu0 %v686
    %1700 = vmatpush2.msra.mxu0 %v685
    %1701 = vmatprep.subr.mxu0 %v678
    %1702 = vmatpush2.msra.mxu0 %v677
    %1703 = vmatprep.subr.mxu0 %v670
    %1704 = vmatpush2.msra.mxu0 %v669
    %1705 = vmatprep.subr.mxu0 %v662
    %1706 = vmatpush2.msra.mxu0 %v661
    %1707 = vmatprep.subr.mxu0 %v654
    %1708 = vmatpush2.msra.mxu0 %v653
    %1709 = vmatprep.subr.mxu0 %v646
    %1710 = vmatpush2.msra.mxu0 %v645
    %1711 = vmatprep.subr.mxu0 %v638
    %1712 = vmatpush2.msra.mxu0 %v637
    %1713 = vmatprep.subr.mxu0 %v630
    %1714 = vmatpush2.msra.mxu0 %v629
    %1715 = vmatprep.subr.mxu0 %v622
    %1716 = vmatpush2.msra.mxu0 %v621
    %1717 = vmatprep.subr.mxu0 %v614
    %1718 = vmatpush2.msra.mxu0 %v613
    %1719 = vmatprep.subr.mxu0 %v606
    %1720 = vmatpush2.msra.mxu0 %v605
    %1721 = vmatprep.subr.mxu0 %v598
    %1722 = vmatpush2.msra.mxu0 %v597
    %1723 = vmatprep.subr.mxu0 %v590
    %1724 = vmatpush2.msra.mxu0 %v589
    %1725 = vmatprep.subr.mxu0 %v582
    %1726 = vmatpush2.msra.mxu0 %v581
    %1727 = vmatprep.subr.mxu0 %v574
    %1728 = vmatpush2.msra.mxu0 %v573
    %1729 = vmatprep.subr.mxu0 %v566
    %1730 = vmatpush2.msra.mxu0 %v565
    %1731 = vmatprep.mubr.f32.mxu0 %v915
    %1732 = vmatmul.mubr.f32.gmra.mxu0 %v913
    %v1733 = vpop.f32.mrf.mxu0
    %v1734 = vadd.f32 %v1663, %v1733
    %v1735 = vpop.f32.mrf.mxu0
    %v1736 = vadd.f32 %v1665, %v1735
    %1737 = vdwg.mxu0
    %1738 = vmatprep.subr.mxu0 %v814
    %1739 = vmatpush1.msra.mxu0 %v813
    %1740 = vmatprep.subr.mxu0 %v806
    %1741 = vmatpush1.msra.mxu0 %v805
    %1742 = vmatprep.subr.mxu0 %v798
    %1743 = vmatpush1.msra.mxu0 %v797
    %1744 = vmatprep.subr.mxu0 %v790
    %1745 = vmatpush1.msra.mxu0 %v789
    %1746 = vmatprep.subr.mxu0 %v782
    %1747 = vmatpush1.msra.mxu0 %v781
    %1748 = vmatprep.subr.mxu0 %v774
    %1749 = vmatpush1.msra.mxu0 %v773
    %1750 = vmatprep.subr.mxu0 %v766
    %1751 = vmatpush1.msra.mxu0 %v765
    %1752 = vmatprep.subr.mxu0 %v758
    %1753 = vmatpush1.msra.mxu0 %v757
    %1754 = vmatprep.subr.mxu0 %v750
    %1755 = vmatpush1.msra.mxu0 %v749
    %1756 = vmatprep.subr.mxu0 %v742
    %1757 = vmatpush1.msra.mxu0 %v741
    %1758 = vmatprep.subr.mxu0 %v734
    %1759 = vmatpush1.msra.mxu0 %v733
    %1760 = vmatprep.subr.mxu0 %v726
    %1761 = vmatpush1.msra.mxu0 %v725
    %1762 = vmatprep.subr.mxu0 %v718
    %1763 = vmatpush1.msra.mxu0 %v717
    %1764 = vmatprep.subr.mxu0 %v710
    %1765 = vmatpush1.msra.mxu0 %v709
    %1766 = vmatprep.subr.mxu0 %v702
    %1767 = vmatpush1.msra.mxu0 %v701
    %1768 = vmatprep.subr.mxu0 %v694
    %1769 = vmatpush1.msra.mxu0 %v693
    %1770 = vmatprep.subr.mxu0 0.0
    %1771 = vmatpush2.msra.mxu0 0.0
    %1772 = vmatprep.subr.mxu0 0.0
    %1773 = vmatpush2.msra.mxu0 0.0
    %1774 = vmatprep.subr.mxu0 0.0
    %1775 = vmatpush2.msra.mxu0 0.0
    %1776 = vmatprep.subr.mxu0 0.0
    %1777 = vmatpush2.msra.mxu0 0.0
    %1778 = vmatprep.subr.mxu0 0.0
    %1779 = vmatpush2.msra.mxu0 0.0
    %1780 = vmatprep.subr.mxu0 0.0
    %1781 = vmatpush2.msra.mxu0 0.0
    %1782 = vmatprep.subr.mxu0 0.0
    %1783 = vmatpush2.msra.mxu0 0.0
    %1784 = vmatprep.subr.mxu0 0.0
    %1785 = vmatpush2.msra.mxu0 0.0
    %1786 = vmatprep.subr.mxu0 0.0
    %1787 = vmatpush2.msra.mxu0 0.0
    %1788 = vmatprep.subr.mxu0 0.0
    %1789 = vmatpush2.msra.mxu0 0.0
    %1790 = vmatprep.subr.mxu0 0.0
    %1791 = vmatpush2.msra.mxu0 0.0
    %1792 = vmatprep.subr.mxu0 %v955
    %1793 = vmatpush2.msra.mxu0 %v952
    %1794 = vmatprep.subr.mxu0 %v846
    %1795 = vmatpush2.msra.mxu0 %v845
    %1796 = vmatprep.subr.mxu0 %v838
    %1797 = vmatpush2.msra.mxu0 %v837
    %1798 = vmatprep.subr.mxu0 %v830
    %1799 = vmatpush2.msra.mxu0 %v829
    %1800 = vmatprep.subr.mxu0 %v822
    %1801 = vmatpush2.msra.mxu0 %v821
    %1802 = vmatprep.mubr.f32.mxu0 %v930
    %1803 = vmatmul.mubr.f32.gmra.mxu0 %v922
    %v1804 = vpop.f32.mrf.mxu0
    %v1805 = vadd.f32 %v1734, %v1804
    %v1806 = vpop.f32.mrf.mxu0
    %v1807 = vadd.f32 %v1736, %v1806
    %1808 = vdwg.mxu0
    %v1809 = vmax.f32 %v1166, 0.0
    %v1810 = vmax.f32 %v1168, 0.0
    %v1811 = vmax.f32 %v1379, 0.0
    %v1812 = vmax.f32 %v1381, 0.0
    %v1813 = vmax.f32 %v1592, 0.0
    %v1814 = vmax.f32 %v1594, 0.0
    %v1815 = vmax.f32 %v1805, 0.0
    %v1816 = vmax.f32 %v1807, 0.0
    %v1817 = vld [vmem:[%s1] sm:$0xf]
    %v1818 = vld [vmem:[#allocation8] sm:$0xff]
    %v1819 = vld [vmem:[#allocation8 + $0x8] sm:$0xff]
    %v1820 = vld [vmem:[#allocation8 + $0x10] sm:$0xff]
    %v1821 = vld [vmem:[#allocation8 + $0x18] sm:$0xff]
    %v1822 = vld [vmem:[#allocation8 + $0x20] sm:$0xff]
    %v1823 = vld [vmem:[#allocation8 + $0x28] sm:$0xff]
    %v1824 = vld [vmem:[#allocation8 + $0x30] sm:$0xff]
    %v1825 = vld [vmem:[#allocation8 + $0x38] sm:$0xff]
    %v1826 = vld [vmem:[#allocation8 + $0x40] sm:$0xff]
    %v1827 = vld [vmem:[#allocation8 + $0x48] sm:$0xff]
    %v1828 = vld [vmem:[#allocation8 + $0x50] sm:$0xff]
    %v1829 = vld [vmem:[#allocation8 + $0x58] sm:$0xff]
    %v1830 = vld [vmem:[#allocation8 + $0x60] sm:$0xff]
    %v1831 = vld [vmem:[#allocation8 + $0x68] sm:$0xff]
    %v1832 = vld [vmem:[#allocation8 + $0x70] sm:$0xff]
    %v1833 = vld [vmem:[#allocation8 + $0x78] sm:$0xff]
    %v1834 = vld [vmem:[#allocation8 + $0x80] sm:$0xff]
    %v1835 = vld [vmem:[#allocation8 + $0x88] sm:$0xff]
    %v1836 = vld [vmem:[#allocation8 + $0x90] sm:$0xff]
    %v1837 = vld [vmem:[#allocation8 + $0x98] sm:$0xff]
    %v1838 = vld [vmem:[#allocation8 + $0xa0] sm:$0xff]
    %v1839 = vld [vmem:[#allocation8 + $0xa8] sm:$0xff]
    %v1840 = vld [vmem:[#allocation8 + $0xb0] sm:$0xff]
    %v1841 = vld [vmem:[#allocation8 + $0xb8] sm:$0xff]
    %v1842 = vld [vmem:[#allocation8 + $0xc0] sm:$0xff]
    %v1843 = vld [vmem:[#allocation8 + $0xc8] sm:$0xff]
    %v1844 = vld [vmem:[#allocation8 + $0xd0] sm:$0xff]
    %v1845 = vld [vmem:[#allocation8 + $0xd8] sm:$0xff]
    %v1846 = vld [vmem:[#allocation8 + $0xe0] sm:$0xff]
    %v1847 = vld [vmem:[#allocation8 + $0xe8] sm:$0xff]
    %v1848 = vld [vmem:[#allocation8 + $0xf0] sm:$0xff]
    %v1849 = vld [vmem:[#allocation8 + $0xf8] sm:$0xff]
    %v1850 = vld [vmem:[#allocation8 + $0x100] sm:$0xff]
    %v1851 = vld [vmem:[#allocation8 + $0x108] sm:$0xff]
    %v1852 = vld [vmem:[#allocation8 + $0x110] sm:$0xff]
    %v1853 = vld [vmem:[#allocation8 + $0x118] sm:$0xff]
    %v1854 = vld [vmem:[#allocation8 + $0x120] sm:$0x7]
    %v1855 = vld [vmem:[#allocation8 + $0x128] sm:$0x7]
    %v1856 = vld [vmem:[#allocation10] sm:$0x3]
    %v1858 = vlaneseq
    %v1859 = vshrl.u32 %v1858, 7
    %v1860 = vsub.s32 0, %v1859
    %v1861 = vrot.slane %v1856, %v1860
    %v1862 = vlaneseq
    %v1863 = vshrl.u32 %v1862, 7
    %v1864 = vsub.s32 1, %v1863
    %v1865 = vrot.slane %v1856, %v1864
    %v1870 = vunpack.c.l.s4 1983009808
    %v1871 = vunpack.c.0.s8 %v1870
    %v1872 = vlaneseq
    %v1873 = vshrl.u32 %v1872, 7
    %v1874 = vsub.s32 %v1871, %v1873
    %v1875 = vrot.slane %v1817, %v1874
    %v1876 = vcombine.high %v1875, %v1875
    %vm1878 = vcmask 154624
    %v1879 = vsel %vm1878, %v1876, 0
    %v1882 = vsel %vm932, %v1854, 0
    %v1885 = vsel %vm932, %v1855, 0
    %1887 = vmatprep.subr.mxu0 %v1849
    %1888 = vmatpush1.msra.mxu0 %v1848
    %1889 = vmatprep.subr.mxu0 %v1847
    %1890 = vmatpush1.msra.mxu0 %v1846
    %1891 = vmatprep.subr.mxu0 %v1845
    %1892 = vmatpush1.msra.mxu0 %v1844
    %1893 = vmatprep.subr.mxu0 %v1843
    %1894 = vmatpush1.msra.mxu0 %v1842
    %1895 = vmatprep.subr.mxu0 %v1841
    %1896 = vmatpush1.msra.mxu0 %v1840
    %1897 = vmatprep.subr.mxu0 %v1839
    %1898 = vmatpush1.msra.mxu0 %v1838
    %1899 = vmatprep.subr.mxu0 %v1837
    %1900 = vmatpush1.msra.mxu0 %v1836
    %1901 = vmatprep.subr.mxu0 %v1835
    %1902 = vmatpush1.msra.mxu0 %v1834
    %1903 = vmatprep.subr.mxu0 %v1833
    %1904 = vmatpush1.msra.mxu0 %v1832
    %1905 = vmatprep.subr.mxu0 %v1831
    %1906 = vmatpush1.msra.mxu0 %v1830
    %1907 = vmatprep.subr.mxu0 %v1829
    %1908 = vmatpush1.msra.mxu0 %v1828
    %1909 = vmatprep.subr.mxu0 %v1827
    %1910 = vmatpush1.msra.mxu0 %v1826
    %1911 = vmatprep.subr.mxu0 %v1825
    %1912 = vmatpush1.msra.mxu0 %v1824
    %1913 = vmatprep.subr.mxu0 %v1823
    %1914 = vmatpush1.msra.mxu0 %v1822
    %1915 = vmatprep.subr.mxu0 %v1821
    %1916 = vmatpush1.msra.mxu0 %v1820
    %1917 = vmatprep.subr.mxu0 %v1819
    %1918 = vmatpush1.msra.mxu0 %v1818
    %1919 = vmatprep.subr.mxu0 0.0
    %1920 = vmatpush2.msra.mxu0 0.0
    %1921 = vmatprep.subr.mxu0 0.0
    %1922 = vmatpush2.msra.mxu0 0.0
    %1923 = vmatprep.subr.mxu0 0.0
    %1924 = vmatpush2.msra.mxu0 0.0
    %1925 = vmatprep.subr.mxu0 0.0
    %1926 = vmatpush2.msra.mxu0 0.0
    %1927 = vmatprep.subr.mxu0 0.0
    %1928 = vmatpush2.msra.mxu0 0.0
    %1929 = vmatprep.subr.mxu0 0.0
    %1930 = vmatpush2.msra.mxu0 0.0
    %1931 = vmatprep.subr.mxu0 0.0
    %1932 = vmatpush2.msra.mxu0 0.0
    %1933 = vmatprep.subr.mxu0 0.0
    %1934 = vmatpush2.msra.mxu0 0.0
    %1935 = vmatprep.subr.mxu0 0.0
    %1936 = vmatpush2.msra.mxu0 0.0
    %1937 = vmatprep.subr.mxu0 0.0
    %1938 = vmatpush2.msra.mxu0 0.0
    %1939 = vmatprep.subr.mxu0 0.0
    %1940 = vmatpush2.msra.mxu0 0.0
    %1941 = vmatprep.subr.mxu0 0.0
    %1942 = vmatpush2.msra.mxu0 0.0
    %1943 = vmatprep.subr.mxu0 0.0
    %1944 = vmatpush2.msra.mxu0 0.0
    %1945 = vmatprep.subr.mxu0 %v1885
    %1946 = vmatpush2.msra.mxu0 %v1882
    %1947 = vmatprep.subr.mxu0 %v1853
    %1948 = vmatpush2.msra.mxu0 %v1852
    %1949 = vmatprep.subr.mxu0 %v1851
    %1950 = vmatpush2.msra.mxu0 %v1850
    %1951 = vmatprep.mubr.f32.mxu0 %v1879
    %1952 = vmatmul.mubr.f32.gmra.mxu0 %v1875
    %v1953 = vpop.f32.mrf.mxu0
    %v1954 = vadd.f32 %v1861, %v1953
    %v1955 = vpop.f32.mrf.mxu0
    %v1956 = vadd.f32 %v1865, %v1955
    %1957 = vdwg.mxu0
    %v1958 = vmax.f32 %v1954, 0.0
    %v1959 = vmax.f32 %v1956, 0.0
    %v1960 = vld [vmem:[%s7] sm:$0xff]
    %v1961 = vld [vmem:[%s7 + $0x8] sm:$0xff]
    %v1962 = vld [vmem:[%s7 + $0x10] sm:$0xff]
    %v1963 = vld [vmem:[%s7 + $0x18] sm:$0xff]
    %v1964 = vld [vmem:[%s7 + $0x20] sm:$0xff]
    %v1965 = vld [vmem:[%s7 + $0x28] sm:$0xff]
    %v1966 = vld [vmem:[%s7 + $0x30] sm:$0xff]
    %v1967 = vld [vmem:[%s7 + $0x38] sm:$0xff]
    %v1968 = vld [vmem:[%s7 + $0x40] sm:$0xff]
    %v1969 = vld [vmem:[%s7 + $0x48] sm:$0xff]
    %v1970 = vld [vmem:[%s7 + $0x50] sm:$0xff]
    %v1971 = vld [vmem:[%s7 + $0x58] sm:$0xff]
    %v1972 = vld [vmem:[%s7 + $0x60] sm:$0xff]
    %v1973 = vld [vmem:[%s7 + $0x68] sm:$0xff]
    %v1974 = vld [vmem:[%s7 + $0x70] sm:$0xff]
    %v1975 = vld [vmem:[%s7 + $0x78] sm:$0xff]
    %v1976 = vld [vmem:[%s7 + $0x80] sm:$0xff]
    %v1977 = vld [vmem:[%s7 + $0x88] sm:$0xff]
    %v1978 = vld [vmem:[%s7 + $0x90] sm:$0xff]
    %v1979 = vld [vmem:[%s7 + $0x98] sm:$0xff]
    %v1980 = vld [vmem:[%s7 + $0xa0] sm:$0xff]
    %v1981 = vld [vmem:[%s7 + $0xa8] sm:$0xff]
    %v1982 = vld [vmem:[%s7 + $0xb0] sm:$0xff]
    %v1983 = vld [vmem:[%s7 + $0xb8] sm:$0xff]
    %v1984 = vld [vmem:[%s7 + $0xc0] sm:$0xff]
    %v1985 = vld [vmem:[%s7 + $0xc8] sm:$0xff]
    %v1986 = vld [vmem:[%s7 + $0xd0] sm:$0xff]
    %v1987 = vld [vmem:[%s7 + $0xd8] sm:$0xff]
    %v1988 = vld [vmem:[%s7 + $0xe0] sm:$0xff]
    %v1989 = vld [vmem:[%s7 + $0xe8] sm:$0xff]
    %v1990 = vld [vmem:[%s7 + $0xf0] sm:$0xff]
    %v1991 = vld [vmem:[%s7 + $0xf8] sm:$0xff]
    %v1992 = vld [vmem:[%s7 + $0x100] sm:$0xff]
    %v1993 = vld [vmem:[%s7 + $0x108] sm:$0xff]
    %v1994 = vld [vmem:[%s7 + $0x110] sm:$0xff]
    %v1995 = vld [vmem:[%s7 + $0x118] sm:$0xff]
    %v1996 = vld [vmem:[%s7 + $0x120] sm:$0xff]
    %v1997 = vld [vmem:[%s7 + $0x128] sm:$0xff]
    %v1998 = vld [vmem:[%s7 + $0x130] sm:$0xff]
    %v1999 = vld [vmem:[%s7 + $0x138] sm:$0xff]
    %v2000 = vld [vmem:[%s7 + $0x140] sm:$0xff]
    %v2001 = vld [vmem:[%s7 + $0x148] sm:$0xff]
    %v2002 = vld [vmem:[%s7 + $0x150] sm:$0xff]
    %v2003 = vld [vmem:[%s7 + $0x158] sm:$0xff]
    %v2004 = vld [vmem:[%s7 + $0x160] sm:$0xff]
    %v2005 = vld [vmem:[%s7 + $0x168] sm:$0xff]
    %v2006 = vld [vmem:[%s7 + $0x170] sm:$0xff]
    %v2007 = vld [vmem:[%s7 + $0x178] sm:$0xff]
    %v2008 = vld [vmem:[%s7 + $0x180] sm:$0xff]
    %v2009 = vld [vmem:[%s7 + $0x188] sm:$0xff]
    %v2010 = vld [vmem:[%s7 + $0x190] sm:$0xff]
    %v2011 = vld [vmem:[%s7 + $0x198] sm:$0xff]
    %v2012 = vld [vmem:[%s7 + $0x1a0] sm:$0xff]
    %v2013 = vld [vmem:[%s7 + $0x1a8] sm:$0xff]
    %v2014 = vld [vmem:[%s7 + $0x1b0] sm:$0xff]
    %v2015 = vld [vmem:[%s7 + $0x1b8] sm:$0xff]
    %v2016 = vld [vmem:[%s7 + $0x1c0] sm:$0xff]
    %v2017 = vld [vmem:[%s7 + $0x1c8] sm:$0xff]
    %v2018 = vld [vmem:[%s7 + $0x1d0] sm:$0xff]
    %v2019 = vld [vmem:[%s7 + $0x1d8] sm:$0xff]
    %v2020 = vld [vmem:[%s7 + $0x1e0] sm:$0xff]
    %v2021 = vld [vmem:[%s7 + $0x1e8] sm:$0xff]
    %v2022 = vld [vmem:[%s7 + $0x1f0] sm:$0xff]
    %v2023 = vld [vmem:[%s7 + $0x1f8] sm:$0xff]
    %v2024 = vld [vmem:[%s7 + $0x200] sm:$0xff]
    %v2025 = vld [vmem:[%s7 + $0x208] sm:$0xff]
    %v2026 = vld [vmem:[%s7 + $0x210] sm:$0xff]
    %v2027 = vld [vmem:[%s7 + $0x218] sm:$0xff]
    %v2028 = vld [vmem:[%s7 + $0x220] sm:$0xff]
    %v2029 = vld [vmem:[%s7 + $0x228] sm:$0xff]
    %v2030 = vld [vmem:[%s7 + $0x230] sm:$0xff]
    %v2031 = vld [vmem:[%s7 + $0x238] sm:$0xff]
    %v2032 = vld [vmem:[%s7 + $0x240] sm:$0xff]
    %v2033 = vld [vmem:[%s7 + $0x248] sm:$0xff]
    %v2034 = vld [vmem:[%s7 + $0x250] sm:$0xff]
    %v2035 = vld [vmem:[%s7 + $0x258] sm:$0xff]
    %v2036 = vld [vmem:[%s7 + $0x260] sm:$0xff]
    %v2037 = vld [vmem:[%s7 + $0x268] sm:$0xff]
    %v2038 = vld [vmem:[%s7 + $0x270] sm:$0xff]
    %v2039 = vld [vmem:[%s7 + $0x278] sm:$0xff]
    %v2040 = vld [vmem:[%s7 + $0x280] sm:$0xff]
    %v2041 = vld [vmem:[%s7 + $0x288] sm:$0xff]
    %v2042 = vld [vmem:[%s7 + $0x290] sm:$0xff]
    %v2043 = vld [vmem:[%s7 + $0x298] sm:$0xff]
    %v2044 = vld [vmem:[%s7 + $0x2a0] sm:$0xff]
    %v2045 = vld [vmem:[%s7 + $0x2a8] sm:$0xff]
    %v2046 = vld [vmem:[%s7 + $0x2b0] sm:$0xff]
    %v2047 = vld [vmem:[%s7 + $0x2b8] sm:$0xff]
    %v2048 = vld [vmem:[%s7 + $0x2c0] sm:$0xff]
    %v2049 = vld [vmem:[%s7 + $0x2c8] sm:$0xff]
    %v2050 = vld [vmem:[%s7 + $0x2d0] sm:$0xff]
    %v2051 = vld [vmem:[%s7 + $0x2d8] sm:$0xff]
    %v2052 = vld [vmem:[%s7 + $0x2e0] sm:$0xff]
    %v2053 = vld [vmem:[%s7 + $0x2e8] sm:$0xff]
    %v2054 = vld [vmem:[%s7 + $0x2f0] sm:$0xff]
    %v2055 = vld [vmem:[%s7 + $0x2f8] sm:$0xff]
    %v2056 = vld [vmem:[%s7 + $0x300] sm:$0xff]
    %v2057 = vld [vmem:[%s7 + $0x308] sm:$0xff]
    %v2058 = vld [vmem:[%s7 + $0x310] sm:$0xff]
    %v2059 = vld [vmem:[%s7 + $0x318] sm:$0xff]
    %v2060 = vld [vmem:[%s7 + $0x320] sm:$0xff]
    %v2061 = vld [vmem:[%s7 + $0x328] sm:$0xff]
    %v2062 = vld [vmem:[%s7 + $0x330] sm:$0xff]
    %v2063 = vld [vmem:[%s7 + $0x338] sm:$0xff]
    %v2064 = vld [vmem:[%s7 + $0x340] sm:$0xff]
    %v2065 = vld [vmem:[%s7 + $0x348] sm:$0xff]
    %v2066 = vld [vmem:[%s7 + $0x350] sm:$0xff]
    %v2067 = vld [vmem:[%s7 + $0x358] sm:$0xff]
    %v2068 = vld [vmem:[%s7 + $0x360] sm:$0xff]
    %v2069 = vld [vmem:[%s7 + $0x368] sm:$0xff]
    %v2070 = vld [vmem:[%s7 + $0x370] sm:$0xff]
    %v2071 = vld [vmem:[%s7 + $0x378] sm:$0xff]
    %v2072 = vld [vmem:[%s7 + $0x380] sm:$0xff]
    %v2073 = vld [vmem:[%s7 + $0x388] sm:$0xff]
    %v2074 = vld [vmem:[%s7 + $0x390] sm:$0xff]
    %v2075 = vld [vmem:[%s7 + $0x398] sm:$0xff]
    %v2076 = vld [vmem:[%s7 + $0x3a0] sm:$0xff]
    %v2077 = vld [vmem:[%s7 + $0x3a8] sm:$0xff]
    %v2078 = vld [vmem:[%s7 + $0x3b0] sm:$0xff]
    %v2079 = vld [vmem:[%s7 + $0x3b8] sm:$0xff]
    %v2080 = vld [vmem:[%s7 + $0x3c0] sm:$0xff]
    %v2081 = vld [vmem:[%s7 + $0x3c8] sm:$0xff]
    %v2082 = vld [vmem:[%s7 + $0x3d0] sm:$0xff]
    %v2083 = vld [vmem:[%s7 + $0x3d8] sm:$0xff]
    %v2084 = vld [vmem:[%s7 + $0x3e0] sm:$0xff]
    %v2085 = vld [vmem:[%s7 + $0x3e8] sm:$0xff]
    %v2086 = vld [vmem:[%s7 + $0x3f0] sm:$0x3f]
    %v2087 = vld [vmem:[#allocation11] sm:$0xff]
    %v2088 = vld [vmem:[#allocation11 + $0x8] sm:$0xff]
    %v2089 = vld [vmem:[#allocation11 + $0x10] sm:$0xff]
    %v2090 = vld [vmem:[#allocation11 + $0x18] sm:$0xff]
    %v2091 = vld [vmem:[#allocation11 + $0x20] sm:$0xff]
    %v2092 = vld [vmem:[#allocation11 + $0x28] sm:$0xff]
    %v2093 = vld [vmem:[#allocation11 + $0x30] sm:$0xff]
    %v2094 = vld [vmem:[#allocation11 + $0x38] sm:$0xff]
    %v2095 = vld [vmem:[#allocation11 + $0x40] sm:$0xff]
    %v2096 = vld [vmem:[#allocation11 + $0x48] sm:$0xff]
    %v2097 = vld [vmem:[#allocation11 + $0x50] sm:$0xff]
    %v2098 = vld [vmem:[#allocation11 + $0x58] sm:$0xff]
    %v2099 = vld [vmem:[#allocation11 + $0x60] sm:$0xff]
    %v2100 = vld [vmem:[#allocation11 + $0x68] sm:$0xff]
    %v2101 = vld [vmem:[#allocation11 + $0x70] sm:$0xff]
    %v2102 = vld [vmem:[#allocation11 + $0x78] sm:$0xff]
    %v2103 = vld [vmem:[#allocation11 + $0x80] sm:$0xff]
    %v2104 = vld [vmem:[#allocation11 + $0x88] sm:$0xff]
    %v2105 = vld [vmem:[#allocation11 + $0x90] sm:$0x3f]
    %vm2106 = vcmask 179200
    %v2108 = vsel %vm2106, %v1959, 0
    %vm2110 = vcmask 1045504
    %v2112 = vsel %vm2110, %v2105, 0
    %2114 = vmatprep.subr.mxu0 0.0
    %2115 = vmatpush1.msra.mxu0 %v2102
    %2116 = vmatprep.subr.mxu0 0.0
    %2117 = vmatpush1.msra.mxu0 %v2101
    %2118 = vmatprep.subr.mxu0 0.0
    %2119 = vmatpush1.msra.mxu0 %v2100
    %2120 = vmatprep.subr.mxu0 0.0
    %2121 = vmatpush1.msra.mxu0 %v2099
    %2122 = vmatprep.subr.mxu0 0.0
    %2123 = vmatpush1.msra.mxu0 %v2098
    %2124 = vmatprep.subr.mxu0 0.0
    %2125 = vmatpush1.msra.mxu0 %v2097
    %2126 = vmatprep.subr.mxu0 0.0
    %2127 = vmatpush1.msra.mxu0 %v2096
    %2128 = vmatprep.subr.mxu0 0.0
    %2129 = vmatpush1.msra.mxu0 %v2095
    %2130 = vmatprep.subr.mxu0 0.0
    %2131 = vmatpush1.msra.mxu0 %v2094
    %2132 = vmatprep.subr.mxu0 0.0
    %2133 = vmatpush1.msra.mxu0 %v2093
    %2134 = vmatprep.subr.mxu0 0.0
    %2135 = vmatpush1.msra.mxu0 %v2092
    %2136 = vmatprep.subr.mxu0 0.0
    %2137 = vmatpush1.msra.mxu0 %v2091
    %2138 = vmatprep.subr.mxu0 0.0
    %2139 = vmatpush1.msra.mxu0 %v2090
    %2140 = vmatprep.subr.mxu0 0.0
    %2141 = vmatpush1.msra.mxu0 %v2089
    %2142 = vmatprep.subr.mxu0 0.0
    %2143 = vmatpush1.msra.mxu0 %v2088
    %2144 = vmatprep.subr.mxu0 0.0
    %2145 = vmatpush1.msra.mxu0 %v2087
    %2146 = vmatprep.subr.mxu0 0.0
    %2147 = vmatpush2.msra.mxu0 0.0
    %2148 = vmatprep.subr.mxu0 0.0
    %2149 = vmatpush2.msra.mxu0 0.0
    %2150 = vmatprep.subr.mxu0 0.0
    %2151 = vmatpush2.msra.mxu0 0.0
    %2152 = vmatprep.subr.mxu0 0.0
    %2153 = vmatpush2.msra.mxu0 0.0
    %2154 = vmatprep.subr.mxu0 0.0
    %2155 = vmatpush2.msra.mxu0 0.0
    %2156 = vmatprep.subr.mxu0 0.0
    %2157 = vmatpush2.msra.mxu0 0.0
    %2158 = vmatprep.subr.mxu0 0.0
    %2159 = vmatpush2.msra.mxu0 0.0
    %2160 = vmatprep.subr.mxu0 0.0
    %2161 = vmatpush2.msra.mxu0 0.0
    %2162 = vmatprep.subr.mxu0 0.0
    %2163 = vmatpush2.msra.mxu0 0.0
    %2164 = vmatprep.subr.mxu0 0.0
    %2165 = vmatpush2.msra.mxu0 0.0
    %2166 = vmatprep.subr.mxu0 0.0
    %2167 = vmatpush2.msra.mxu0 0.0
    %2168 = vmatprep.subr.mxu0 0.0
    %2169 = vmatpush2.msra.mxu0 0.0
    %2170 = vmatprep.subr.mxu0 0.0
    %2171 = vmatpush2.msra.mxu0 0.0
    %2172 = vmatprep.subr.mxu0 0.0
    %2173 = vmatpush2.msra.mxu0 %v2112
    %2174 = vmatprep.subr.mxu0 0.0
    %2175 = vmatpush2.msra.mxu0 %v2104
    %2176 = vmatprep.subr.mxu0 0.0
    %2177 = vmatpush2.msra.mxu0 %v2103
    %2178 = vmatprep.mubr.f32.mxu0 %v2108
    %2179 = vmatmul.mubr.f32.gmra.mxu0 %v1958
    %v2180 = vpop.f32.mrf.mxu0
    %v2181 = vadd.f32 0.0, %v2180
    %v2182 = vpop.f32.mrf.mxu0
    %2183 = vdwg.mxu0
    %vm2184 = vcmask 965632
    %v2186 = vsel %vm2184, %v1816, 0
    %v2189 = vsel %vm2110, %v2086, 0
    %2191 = vmatprep.subr.mxu0 0.0
    %2192 = vmatpush1.msra.mxu0 %v1975
    %2193 = vmatprep.subr.mxu0 0.0
    %2194 = vmatpush1.msra.mxu0 %v1974
    %2195 = vmatprep.subr.mxu0 0.0
    %2196 = vmatpush1.msra.mxu0 %v1973
    %2197 = vmatprep.subr.mxu0 0.0
    %2198 = vmatpush1.msra.mxu0 %v1972
    %2199 = vmatprep.subr.mxu0 0.0
    %2200 = vmatpush1.msra.mxu0 %v1971
    %2201 = vmatprep.subr.mxu0 0.0
    %2202 = vmatpush1.msra.mxu0 %v1970
    %2203 = vmatprep.subr.mxu0 0.0
    %2204 = vmatpush1.msra.mxu0 %v1969
    %2205 = vmatprep.subr.mxu0 0.0
    %2206 = vmatpush1.msra.mxu0 %v1968
    %2207 = vmatprep.subr.mxu0 0.0
    %2208 = vmatpush1.msra.mxu0 %v1967
    %2209 = vmatprep.subr.mxu0 0.0
    %2210 = vmatpush1.msra.mxu0 %v1966
    %2211 = vmatprep.subr.mxu0 0.0
    %2212 = vmatpush1.msra.mxu0 %v1965
    %2213 = vmatprep.subr.mxu0 0.0
    %2214 = vmatpush1.msra.mxu0 %v1964
    %2215 = vmatprep.subr.mxu0 0.0
    %2216 = vmatpush1.msra.mxu0 %v1963
    %2217 = vmatprep.subr.mxu0 0.0
    %2218 = vmatpush1.msra.mxu0 %v1962
    %2219 = vmatprep.subr.mxu0 0.0
    %2220 = vmatpush1.msra.mxu0 %v1961
    %2221 = vmatprep.subr.mxu0 0.0
    %2222 = vmatpush1.msra.mxu0 %v1960
    %2223 = vmatprep.subr.mxu0 0.0
    %2224 = vmatpush2.msra.mxu0 %v1991
    %2225 = vmatprep.subr.mxu0 0.0
    %2226 = vmatpush2.msra.mxu0 %v1990
    %2227 = vmatprep.subr.mxu0 0.0
    %2228 = vmatpush2.msra.mxu0 %v1989
    %2229 = vmatprep.subr.mxu0 0.0
    %2230 = vmatpush2.msra.mxu0 %v1988
    %2231 = vmatprep.subr.mxu0 0.0
    %2232 = vmatpush2.msra.mxu0 %v1987
    %2233 = vmatprep.subr.mxu0 0.0
    %2234 = vmatpush2.msra.mxu0 %v1986
    %2235 = vmatprep.subr.mxu0 0.0
    %2236 = vmatpush2.msra.mxu0 %v1985
    %2237 = vmatprep.subr.mxu0 0.0
    %2238 = vmatpush2.msra.mxu0 %v1984
    %2239 = vmatprep.subr.mxu0 0.0
    %2240 = vmatpush2.msra.mxu0 %v1983
    %2241 = vmatprep.subr.mxu0 0.0
    %2242 = vmatpush2.msra.mxu0 %v1982
    %2243 = vmatprep.subr.mxu0 0.0
    %2244 = vmatpush2.msra.mxu0 %v1981
    %2245 = vmatprep.subr.mxu0 0.0
    %2246 = vmatpush2.msra.mxu0 %v1980
    %2247 = vmatprep.subr.mxu0 0.0
    %2248 = vmatpush2.msra.mxu0 %v1979
    %2249 = vmatprep.subr.mxu0 0.0
    %2250 = vmatpush2.msra.mxu0 %v1978
    %2251 = vmatprep.subr.mxu0 0.0
    %2252 = vmatpush2.msra.mxu0 %v1977
    %2253 = vmatprep.subr.mxu0 0.0
    %2254 = vmatpush2.msra.mxu0 %v1976
    %2255 = vmatprep.mubr.f32.mxu0 %v1810
    %2256 = vmatmul.mubr.f32.gmra.mxu0 %v1809
    %v2257 = vpop.f32.mrf.mxu0
    %v2258 = vadd.f32 %v2181, %v2257
    %v2259 = vpop.f32.mrf.mxu0
    %2260 = vdwg.mxu0
    %2261 = vmatprep.subr.mxu0 0.0
    %2262 = vmatpush1.msra.mxu0 %v2007
    %2263 = vmatprep.subr.mxu0 0.0
    %2264 = vmatpush1.msra.mxu0 %v2006
    %2265 = vmatprep.subr.mxu0 0.0
    %2266 = vmatpush1.msra.mxu0 %v2005
    %2267 = vmatprep.subr.mxu0 0.0
    %2268 = vmatpush1.msra.mxu0 %v2004
    %2269 = vmatprep.subr.mxu0 0.0
    %2270 = vmatpush1.msra.mxu0 %v2003
    %2271 = vmatprep.subr.mxu0 0.0
    %2272 = vmatpush1.msra.mxu0 %v2002
    %2273 = vmatprep.subr.mxu0 0.0
    %2274 = vmatpush1.msra.mxu0 %v2001
    %2275 = vmatprep.subr.mxu0 0.0
    %2276 = vmatpush1.msra.mxu0 %v2000
    %2277 = vmatprep.subr.mxu0 0.0
    %2278 = vmatpush1.msra.mxu0 %v1999
    %2279 = vmatprep.subr.mxu0 0.0
    %2280 = vmatpush1.msra.mxu0 %v1998
    %2281 = vmatprep.subr.mxu0 0.0
    %2282 = vmatpush1.msra.mxu0 %v1997
    %2283 = vmatprep.subr.mxu0 0.0
    %2284 = vmatpush1.msra.mxu0 %v1996
    %2285 = vmatprep.subr.mxu0 0.0
    %2286 = vmatpush1.msra.mxu0 %v1995
    %2287 = vmatprep.subr.mxu0 0.0
    %2288 = vmatpush1.msra.mxu0 %v1994
    %2289 = vmatprep.subr.mxu0 0.0
    %2290 = vmatpush1.msra.mxu0 %v1993
    %2291 = vmatprep.subr.mxu0 0.0
    %2292 = vmatpush1.msra.mxu0 %v1992
    %2293 = vmatprep.subr.mxu0 0.0
    %2294 = vmatpush2.msra.mxu0 %v2023
    %2295 = vmatprep.subr.mxu0 0.0
    %2296 = vmatpush2.msra.mxu0 %v2022
    %2297 = vmatprep.subr.mxu0 0.0
    %2298 = vmatpush2.msra.mxu0 %v2021
    %2299 = vmatprep.subr.mxu0 0.0
    %2300 = vmatpush2.msra.mxu0 %v2020
    %2301 = vmatprep.subr.mxu0 0.0
    %2302 = vmatpush2.msra.mxu0 %v2019
    %2303 = vmatprep.subr.mxu0 0.0
    %2304 = vmatpush2.msra.mxu0 %v2018
    %2305 = vmatprep.subr.mxu0 0.0
    %2306 = vmatpush2.msra.mxu0 %v2017
    %2307 = vmatprep.subr.mxu0 0.0
    %2308 = vmatpush2.msra.mxu0 %v2016
    %2309 = vmatprep.subr.mxu0 0.0
    %2310 = vmatpush2.msra.mxu0 %v2015
    %2311 = vmatprep.subr.mxu0 0.0
    %2312 = vmatpush2.msra.mxu0 %v2014
    %2313 = vmatprep.subr.mxu0 0.0
    %2314 = vmatpush2.msra.mxu0 %v2013
    %2315 = vmatprep.subr.mxu0 0.0
    %2316 = vmatpush2.msra.mxu0 %v2012
    %2317 = vmatprep.subr.mxu0 0.0
    %2318 = vmatpush2.msra.mxu0 %v2011
    %2319 = vmatprep.subr.mxu0 0.0
    %2320 = vmatpush2.msra.mxu0 %v2010
    %2321 = vmatprep.subr.mxu0 0.0
    %2322 = vmatpush2.msra.mxu0 %v2009
    %2323 = vmatprep.subr.mxu0 0.0
    %2324 = vmatpush2.msra.mxu0 %v2008
    %2325 = vmatprep.mubr.f32.mxu0 %v1812
    %2326 = vmatmul.mubr.f32.gmra.mxu0 %v1811
    %v2327 = vpop.f32.mrf.mxu0
    %v2328 = vadd.f32 %v2258, %v2327
    %v2329 = vpop.f32.mrf.mxu0
    %2330 = vdwg.mxu0
    %2331 = vmatprep.subr.mxu0 0.0
    %2332 = vmatpush1.msra.mxu0 %v2039
    %2333 = vmatprep.subr.mxu0 0.0
    %2334 = vmatpush1.msra.mxu0 %v2038
    %2335 = vmatprep.subr.mxu0 0.0
    %2336 = vmatpush1.msra.mxu0 %v2037
    %2337 = vmatprep.subr.mxu0 0.0
    %2338 = vmatpush1.msra.mxu0 %v2036
    %2339 = vmatprep.subr.mxu0 0.0
    %2340 = vmatpush1.msra.mxu0 %v2035
    %2341 = vmatprep.subr.mxu0 0.0
    %2342 = vmatpush1.msra.mxu0 %v2034
    %2343 = vmatprep.subr.mxu0 0.0
    %2344 = vmatpush1.msra.mxu0 %v2033
    %2345 = vmatprep.subr.mxu0 0.0
    %2346 = vmatpush1.msra.mxu0 %v2032
    %2347 = vmatprep.subr.mxu0 0.0
    %2348 = vmatpush1.msra.mxu0 %v2031
    %2349 = vmatprep.subr.mxu0 0.0
    %2350 = vmatpush1.msra.mxu0 %v2030
    %2351 = vmatprep.subr.mxu0 0.0
    %2352 = vmatpush1.msra.mxu0 %v2029
    %2353 = vmatprep.subr.mxu0 0.0
    %2354 = vmatpush1.msra.mxu0 %v2028
    %2355 = vmatprep.subr.mxu0 0.0
    %2356 = vmatpush1.msra.mxu0 %v2027
    %2357 = vmatprep.subr.mxu0 0.0
    %2358 = vmatpush1.msra.mxu0 %v2026
    %2359 = vmatprep.subr.mxu0 0.0
    %2360 = vmatpush1.msra.mxu0 %v2025
    %2361 = vmatprep.subr.mxu0 0.0
    %2362 = vmatpush1.msra.mxu0 %v2024
    %2363 = vmatprep.subr.mxu0 0.0
    %2364 = vmatpush2.msra.mxu0 %v2055
    %2365 = vmatprep.subr.mxu0 0.0
    %2366 = vmatpush2.msra.mxu0 %v2054
    %2367 = vmatprep.subr.mxu0 0.0
    %2368 = vmatpush2.msra.mxu0 %v2053
    %2369 = vmatprep.subr.mxu0 0.0
    %2370 = vmatpush2.msra.mxu0 %v2052
    %2371 = vmatprep.subr.mxu0 0.0
    %2372 = vmatpush2.msra.mxu0 %v2051
    %2373 = vmatprep.subr.mxu0 0.0
    %2374 = vmatpush2.msra.mxu0 %v2050
    %2375 = vmatprep.subr.mxu0 0.0
    %2376 = vmatpush2.msra.mxu0 %v2049
    %2377 = vmatprep.subr.mxu0 0.0
    %2378 = vmatpush2.msra.mxu0 %v2048
    %2379 = vmatprep.subr.mxu0 0.0
    %2380 = vmatpush2.msra.mxu0 %v2047
    %2381 = vmatprep.subr.mxu0 0.0
    %2382 = vmatpush2.msra.mxu0 %v2046
    %2383 = vmatprep.subr.mxu0 0.0
    %2384 = vmatpush2.msra.mxu0 %v2045
    %2385 = vmatprep.subr.mxu0 0.0
    %2386 = vmatpush2.msra.mxu0 %v2044
    %2387 = vmatprep.subr.mxu0 0.0
    %2388 = vmatpush2.msra.mxu0 %v2043
    %2389 = vmatprep.subr.mxu0 0.0
    %2390 = vmatpush2.msra.mxu0 %v2042
    %2391 = vmatprep.subr.mxu0 0.0
    %2392 = vmatpush2.msra.mxu0 %v2041
    %2393 = vmatprep.subr.mxu0 0.0
    %2394 = vmatpush2.msra.mxu0 %v2040
    %2395 = vmatprep.mubr.f32.mxu0 %v1814
    %2396 = vmatmul.mubr.f32.gmra.mxu0 %v1813
    %v2397 = vpop.f32.mrf.mxu0
    %v2398 = vadd.f32 %v2328, %v2397
    %v2399 = vpop.f32.mrf.mxu0
    %2400 = vdwg.mxu0
    %2401 = vmatprep.subr.mxu0 0.0
    %2402 = vmatpush1.msra.mxu0 %v2071
    %2403 = vmatprep.subr.mxu0 0.0
    %2404 = vmatpush1.msra.mxu0 %v2070
    %2405 = vmatprep.subr.mxu0 0.0
    %2406 = vmatpush1.msra.mxu0 %v2069
    %2407 = vmatprep.subr.mxu0 0.0
    %2408 = vmatpush1.msra.mxu0 %v2068
    %2409 = vmatprep.subr.mxu0 0.0
    %2410 = vmatpush1.msra.mxu0 %v2067
    %2411 = vmatprep.subr.mxu0 0.0
    %2412 = vmatpush1.msra.mxu0 %v2066
    %2413 = vmatprep.subr.mxu0 0.0
    %2414 = vmatpush1.msra.mxu0 %v2065
    %2415 = vmatprep.subr.mxu0 0.0
    %2416 = vmatpush1.msra.mxu0 %v2064
    %2417 = vmatprep.subr.mxu0 0.0
    %2418 = vmatpush1.msra.mxu0 %v2063
    %2419 = vmatprep.subr.mxu0 0.0
    %2420 = vmatpush1.msra.mxu0 %v2062
    %2421 = vmatprep.subr.mxu0 0.0
    %2422 = vmatpush1.msra.mxu0 %v2061
    %2423 = vmatprep.subr.mxu0 0.0
    %2424 = vmatpush1.msra.mxu0 %v2060
    %2425 = vmatprep.subr.mxu0 0.0
    %2426 = vmatpush1.msra.mxu0 %v2059
    %2427 = vmatprep.subr.mxu0 0.0
    %2428 = vmatpush1.msra.mxu0 %v2058
    %2429 = vmatprep.subr.mxu0 0.0
    %2430 = vmatpush1.msra.mxu0 %v2057
    %2431 = vmatprep.subr.mxu0 0.0
    %2432 = vmatpush1.msra.mxu0 %v2056
    %2433 = vmatprep.subr.mxu0 0.0
    %2434 = vmatpush2.msra.mxu0 0.0
    %2435 = vmatprep.subr.mxu0 0.0
    %2436 = vmatpush2.msra.mxu0 %v2189
    %2437 = vmatprep.subr.mxu0 0.0
    %2438 = vmatpush2.msra.mxu0 %v2085
    %2439 = vmatprep.subr.mxu0 0.0
    %2440 = vmatpush2.msra.mxu0 %v2084
    %2441 = vmatprep.subr.mxu0 0.0
    %2442 = vmatpush2.msra.mxu0 %v2083
    %2443 = vmatprep.subr.mxu0 0.0
    %2444 = vmatpush2.msra.mxu0 %v2082
    %2445 = vmatprep.subr.mxu0 0.0
    %2446 = vmatpush2.msra.mxu0 %v2081
    %2447 = vmatprep.subr.mxu0 0.0
    %2448 = vmatpush2.msra.mxu0 %v2080
    %2449 = vmatprep.subr.mxu0 0.0
    %2450 = vmatpush2.msra.mxu0 %v2079
    %2451 = vmatprep.subr.mxu0 0.0
    %2452 = vmatpush2.msra.mxu0 %v2078
    %2453 = vmatprep.subr.mxu0 0.0
    %2454 = vmatpush2.msra.mxu0 %v2077
    %2455 = vmatprep.subr.mxu0 0.0
    %2456 = vmatpush2.msra.mxu0 %v2076
    %2457 = vmatprep.subr.mxu0 0.0
    %2458 = vmatpush2.msra.mxu0 %v2075
    %2459 = vmatprep.subr.mxu0 0.0
    %2460 = vmatpush2.msra.mxu0 %v2074
    %2461 = vmatprep.subr.mxu0 0.0
    %2462 = vmatpush2.msra.mxu0 %v2073
    %2463 = vmatprep.subr.mxu0 0.0
    %2464 = vmatpush2.msra.mxu0 %v2072
    %2465 = vmatprep.mubr.f32.mxu0 %v2186
    %2466 = vmatmul.mubr.f32.gmra.mxu0 %v1815
    %v2467 = vpop.f32.mrf.mxu0
    %v2468 = vadd.f32 %v2398, %v2467
    %v2469 = vpop.f32.mrf.mxu0
    %2470 = vdwg.mxu0
    %v2471 = vld [vmem:[#allocation2] sm:$0x3]
    %v2472 = vld [vmem:[#allocation13] sm:$0xf]
    %vm2473 = vcmask 31744
    %v2475 = vsel %vm2473, %v2471, 0
    %vm2477 = vcmask 1043456
    %v2479 = vsel %vm2477, %v2472, 0
    %2481 = vmatprep.subr.mxu0 0.0
    %2482 = vmatpush1.msra.mxu0 0.0
    %2483 = vmatprep.subr.mxu0 0.0
    %2484 = vmatpush1.msra.mxu0 0.0
    %2485 = vmatprep.subr.mxu0 0.0
    %2486 = vmatpush1.msra.mxu0 0.0
    %2487 = vmatprep.subr.mxu0 0.0
    %2488 = vmatpush1.msra.mxu0 0.0
    %2489 = vmatprep.subr.mxu0 0.0
    %2490 = vmatpush1.msra.mxu0 0.0
    %2491 = vmatprep.subr.mxu0 0.0
    %2492 = vmatpush1.msra.mxu0 0.0
    %2493 = vmatprep.subr.mxu0 0.0
    %2494 = vmatpush1.msra.mxu0 0.0
    %2495 = vmatprep.subr.mxu0 0.0
    %2496 = vmatpush1.msra.mxu0 0.0
    %2497 = vmatprep.subr.mxu0 0.0
    %2498 = vmatpush1.msra.mxu0 0.0
    %2499 = vmatprep.subr.mxu0 0.0
    %2500 = vmatpush1.msra.mxu0 0.0
    %2501 = vmatprep.subr.mxu0 0.0
    %2502 = vmatpush1.msra.mxu0 0.0
    %2503 = vmatprep.subr.mxu0 0.0
    %2504 = vmatpush1.msra.mxu0 0.0
    %2505 = vmatprep.subr.mxu0 0.0
    %2506 = vmatpush1.msra.mxu0 0.0
    %2507 = vmatprep.subr.mxu0 0.0
    %2508 = vmatpush1.msra.mxu0 0.0
    %2509 = vmatprep.subr.mxu0 0.0
    %2510 = vmatpush1.msra.mxu0 0.0
    %2511 = vmatprep.subr.mxu0 0.0
    %2512 = vmatpush1.msra.mxu0 %v2479
    %2513 = vmatprep.subr.mxu0 0.0
    %2514 = vmatpush2.msra.mxu0 0.0
    %2515 = vmatprep.subr.mxu0 0.0
    %2516 = vmatpush2.msra.mxu0 0.0
    %2517 = vmatprep.subr.mxu0 0.0
    %2518 = vmatpush2.msra.mxu0 0.0
    %2519 = vmatprep.subr.mxu0 0.0
    %2520 = vmatpush2.msra.mxu0 0.0
    %2521 = vmatprep.subr.mxu0 0.0
    %2522 = vmatpush2.msra.mxu0 0.0
    %2523 = vmatprep.subr.mxu0 0.0
    %2524 = vmatpush2.msra.mxu0 0.0
    %2525 = vmatprep.subr.mxu0 0.0
    %2526 = vmatpush2.msra.mxu0 0.0
    %2527 = vmatprep.subr.mxu0 0.0
    %2528 = vmatpush2.msra.mxu0 0.0
    %2529 = vmatprep.subr.mxu0 0.0
    %2530 = vmatpush2.msra.mxu0 0.0
    %2531 = vmatprep.subr.mxu0 0.0
    %2532 = vmatpush2.msra.mxu0 0.0
    %2533 = vmatprep.subr.mxu0 0.0
    %2534 = vmatpush2.msra.mxu0 0.0
    %2535 = vmatprep.subr.mxu0 0.0
    %2536 = vmatpush2.msra.mxu0 0.0
    %2537 = vmatprep.subr.mxu0 0.0
    %2538 = vmatpush2.msra.mxu0 0.0
    %2539 = vmatprep.subr.mxu0 0.0
    %2540 = vmatpush2.msra.mxu0 0.0
    %2541 = vmatprep.subr.mxu0 0.0
    %2542 = vmatpush2.msra.mxu0 0.0
    %2543 = vmatprep.subr.mxu0 0.0
    %2544 = vmatpush2.msra.mxu0 0.0
    %2545 = vmatprep.mubr.f32.mxu0 0.0
    %2546 = vmatmul.mubr.f32.gmra.mxu0 %v2475
    %v2547 = vpop.f32.mrf.mxu0
    %v2548 = vadd.f32 0.0, %v2547
    %v2549 = vpop.f32.mrf.mxu0
    %2550 = vdwg.mxu0
    %v2551 = vadd.f32 %v2468, %v2548
    %v2552 = vld [vmem:[#allocation14] sm:$0x1]
    %v2554 = vlaneseq
    %v2555 = vshrl.u32 %v2554, 7
    %v2556 = vsub.s32 0, %v2555
    %v2557 = vrot.slane %v2552, %v2556
    %v2559 = vadd.f32 %v2551, %v2557
    %v2560 = vmax.f32 %v2559, 0.0
    %v2561 = vld [vmem:[%s11] sm:$0xff]
    %v2562 = vld [vmem:[%s11 + $0x8] sm:$0xff]
    %v2563 = vld [vmem:[%s11 + $0x10] sm:$0xff]
    %v2564 = vld [vmem:[%s11 + $0x18] sm:$0xff]
    %v2565 = vld [vmem:[%s11 + $0x20] sm:$0xff]
    %v2566 = vld [vmem:[%s11 + $0x28] sm:$0xff]
    %v2567 = vld [vmem:[%s11 + $0x30] sm:$0xff]
    %v2568 = vld [vmem:[%s11 + $0x38] sm:$0xff]
    %v2569 = vld [vmem:[%s11 + $0x40] sm:$0xff]
    %v2570 = vld [vmem:[%s11 + $0x48] sm:$0xff]
    %v2571 = vld [vmem:[%s11 + $0x50] sm:$0xff]
    %v2572 = vld [vmem:[%s11 + $0x58] sm:$0xff]
    %v2573 = vld [vmem:[#allocation16] sm:$0x1]
    %v2575 = vlaneseq
    %v2576 = vshrl.u32 %v2575, 7
    %v2577 = vsub.s32 0, %v2576
    %v2578 = vrot.slane %v2573, %v2577
    %vm2580 = vcmask 785408
    %v2582 = vsel %vm2580, %v2560, 0
    %2584 = vmatprep.subr.mxu0 0.0
    %2585 = vmatpush1.msra.mxu0 0.0
    %2586 = vmatprep.subr.mxu0 0.0
    %2587 = vmatpush1.msra.mxu0 0.0
    %2588 = vmatprep.subr.mxu0 0.0
    %2589 = vmatpush1.msra.mxu0 0.0
    %2590 = vmatprep.subr.mxu0 0.0
    %2591 = vmatpush1.msra.mxu0 0.0
    %2592 = vmatprep.subr.mxu0 0.0
    %2593 = vmatpush1.msra.mxu0 %v2572
    %2594 = vmatprep.subr.mxu0 0.0
    %2595 = vmatpush1.msra.mxu0 %v2571
    %2596 = vmatprep.subr.mxu0 0.0
    %2597 = vmatpush1.msra.mxu0 %v2570
    %2598 = vmatprep.subr.mxu0 0.0
    %2599 = vmatpush1.msra.mxu0 %v2569
    %2600 = vmatprep.subr.mxu0 0.0
    %2601 = vmatpush1.msra.mxu0 %v2568
    %2602 = vmatprep.subr.mxu0 0.0
    %2603 = vmatpush1.msra.mxu0 %v2567
    %2604 = vmatprep.subr.mxu0 0.0
    %2605 = vmatpush1.msra.mxu0 %v2566
    %2606 = vmatprep.subr.mxu0 0.0
    %2607 = vmatpush1.msra.mxu0 %v2565
    %2608 = vmatprep.subr.mxu0 0.0
    %2609 = vmatpush1.msra.mxu0 %v2564
    %2610 = vmatprep.subr.mxu0 0.0
    %2611 = vmatpush1.msra.mxu0 %v2563
    %2612 = vmatprep.subr.mxu0 0.0
    %2613 = vmatpush1.msra.mxu0 %v2562
    %2614 = vmatprep.subr.mxu0 0.0
    %2615 = vmatpush1.msra.mxu0 %v2561
    %2616 = vmatprep.subr.mxu0 0.0
    %2617 = vmatpush2.msra.mxu0 0.0
    %2618 = vmatprep.subr.mxu0 0.0
    %2619 = vmatpush2.msra.mxu0 0.0
    %2620 = vmatprep.subr.mxu0 0.0
    %2621 = vmatpush2.msra.mxu0 0.0
    %2622 = vmatprep.subr.mxu0 0.0
    %2623 = vmatpush2.msra.mxu0 0.0
    %2624 = vmatprep.subr.mxu0 0.0
    %2625 = vmatpush2.msra.mxu0 0.0
    %2626 = vmatprep.subr.mxu0 0.0
    %2627 = vmatpush2.msra.mxu0 0.0
    %2628 = vmatprep.subr.mxu0 0.0
    %2629 = vmatpush2.msra.mxu0 0.0
    %2630 = vmatprep.subr.mxu0 0.0
    %2631 = vmatpush2.msra.mxu0 0.0
    %2632 = vmatprep.subr.mxu0 0.0
    %2633 = vmatpush2.msra.mxu0 0.0
    %2634 = vmatprep.subr.mxu0 0.0
    %2635 = vmatpush2.msra.mxu0 0.0
    %2636 = vmatprep.subr.mxu0 0.0
    %2637 = vmatpush2.msra.mxu0 0.0
    %2638 = vmatprep.subr.mxu0 0.0
    %2639 = vmatpush2.msra.mxu0 0.0
    %2640 = vmatprep.subr.mxu0 0.0
    %2641 = vmatpush2.msra.mxu0 0.0
    %2642 = vmatprep.subr.mxu0 0.0
    %2643 = vmatpush2.msra.mxu0 0.0
    %2644 = vmatprep.subr.mxu0 0.0
    %2645 = vmatpush2.msra.mxu0 0.0
    %2646 = vmatprep.subr.mxu0 0.0
    %2647 = vmatpush2.msra.mxu0 0.0
    %2648 = vmatprep.mubr.f32.mxu0 0.0
    %2649 = vmatmul.mubr.f32.gmra.mxu0 %v2582
    %v2650 = vpop.f32.mrf.mxu0
    %v2651 = vadd.f32 %v2578, %v2650
    %v2652 = vpop.f32.mrf.mxu0
    %2653 = vdwg.mxu0
    %v2654 = vmax.f32 %v2651, 0.0
    %v2655 = vld [vmem:[%s13] sm:$0xff]
    %v2656 = vld [vmem:[%s13 + $0x8] sm:$0xff]
    %v2657 = vld [vmem:[%s13 + $0x10] sm:$0xff]
    %v2658 = vld [vmem:[%s13 + $0x18] sm:$0xff]
    %v2659 = vld [vmem:[#allocation17] sm:$0x1]
    %v2661 = vlaneseq
    %v2662 = vshrl.u32 %v2661, 7
    %v2663 = vsub.s32 0, %v2662
    %v2664 = vrot.slane %v2659, %v2663
    %vm2666 = vcmask 261120
    %v2668 = vsel %vm2666, %v2654, 0
    %2670 = vmatprep.subr.mxu0 0.0
    %2671 = vmatpush1.msra.mxu0 0.0
    %2672 = vmatprep.subr.mxu0 0.0
    %2673 = vmatpush1.msra.mxu0 0.0
    %2674 = vmatprep.subr.mxu0 0.0
    %2675 = vmatpush1.msra.mxu0 0.0
    %2676 = vmatprep.subr.mxu0 0.0
    %2677 = vmatpush1.msra.mxu0 0.0
    %2678 = vmatprep.subr.mxu0 0.0
    %2679 = vmatpush1.msra.mxu0 0.0
    %2680 = vmatprep.subr.mxu0 0.0
    %2681 = vmatpush1.msra.mxu0 0.0
    %2682 = vmatprep.subr.mxu0 0.0
    %2683 = vmatpush1.msra.mxu0 0.0
    %2684 = vmatprep.subr.mxu0 0.0
    %2685 = vmatpush1.msra.mxu0 0.0
    %2686 = vmatprep.subr.mxu0 0.0
    %2687 = vmatpush1.msra.mxu0 0.0
    %2688 = vmatprep.subr.mxu0 0.0
    %2689 = vmatpush1.msra.mxu0 0.0
    %2690 = vmatprep.subr.mxu0 0.0
    %2691 = vmatpush1.msra.mxu0 0.0
    %2692 = vmatprep.subr.mxu0 0.0
    %2693 = vmatpush1.msra.mxu0 0.0
    %2694 = vmatprep.subr.mxu0 0.0
    %2695 = vmatpush1.msra.mxu0 %v2658
    %2696 = vmatprep.subr.mxu0 0.0
    %2697 = vmatpush1.msra.mxu0 %v2657
    %2698 = vmatprep.subr.mxu0 0.0
    %2699 = vmatpush1.msra.mxu0 %v2656
    %2700 = vmatprep.subr.mxu0 0.0
    %2701 = vmatpush1.msra.mxu0 %v2655
    %2702 = vmatprep.subr.mxu0 0.0
    %2703 = vmatpush2.msra.mxu0 0.0
    %2704 = vmatprep.subr.mxu0 0.0
    %2705 = vmatpush2.msra.mxu0 0.0
    %2706 = vmatprep.subr.mxu0 0.0
    %2707 = vmatpush2.msra.mxu0 0.0
    %2708 = vmatprep.subr.mxu0 0.0
    %2709 = vmatpush2.msra.mxu0 0.0
    %2710 = vmatprep.subr.mxu0 0.0
    %2711 = vmatpush2.msra.mxu0 0.0
    %2712 = vmatprep.subr.mxu0 0.0
    %2713 = vmatpush2.msra.mxu0 0.0
    %2714 = vmatprep.subr.mxu0 0.0
    %2715 = vmatpush2.msra.mxu0 0.0
    %2716 = vmatprep.subr.mxu0 0.0
    %2717 = vmatpush2.msra.mxu0 0.0
    %2718 = vmatprep.subr.mxu0 0.0
    %2719 = vmatpush2.msra.mxu0 0.0
    %2720 = vmatprep.subr.mxu0 0.0
    %2721 = vmatpush2.msra.mxu0 0.0
    %2722 = vmatprep.subr.mxu0 0.0
    %2723 = vmatpush2.msra.mxu0 0.0
    %2724 = vmatprep.subr.mxu0 0.0
    %2725 = vmatpush2.msra.mxu0 0.0
    %2726 = vmatprep.subr.mxu0 0.0
    %2727 = vmatpush2.msra.mxu0 0.0
    %2728 = vmatprep.subr.mxu0 0.0
    %2729 = vmatpush2.msra.mxu0 0.0
    %2730 = vmatprep.subr.mxu0 0.0
    %2731 = vmatpush2.msra.mxu0 0.0
    %2732 = vmatprep.subr.mxu0 0.0
    %2733 = vmatpush2.msra.mxu0 0.0
    %2734 = vmatprep.mubr.f32.mxu0 0.0
    %2735 = vmatmul.mubr.f32.gmra.mxu0 %v2668
    %v2736 = vpop.f32.mrf.mxu0
    %v2737 = vadd.f32 %v2664, %v2736
    %v2738 = vpop.f32.mrf.mxu0
    %2739 = vdwg.mxu0
    %vm2740 = vcmask 58368
    %2741 = vst.msk [vmem:[#allocation19] sm:$0x3] %vm2740, %v2737
    // Predicated region
    $region102: #{qnet_forward.1} parent=1 // pred_check
      _
    $region103: #{qnet_forward.1} parent=1 // pred_check_branch
      %2743 = sbr.rel (0) target = $region105
    $region104: #{qnet_forward.1} parent=1 // pred_region
      %s2745 = ssub.s32 32, 32
      %2746 = vsyncadd [#allocation4], %s2745
      %s2748 = sshll.u32 [#allocation19], 4
      %s2749 = int_to_ptr.vmem [resolvable:$true] %s2748
      %2751 = dma.vmem_to_hbm [thread:$0]  %s2749, 32, %s15, [#allocation4]
    $region105: #{qnet_forward.1} parent=1 // pred_fallthru
      _
    // Predicated region
    $region106: #{qnet_forward.1} parent=1 // pred_check
      _
    $region107: #{qnet_forward.1} parent=1 // pred_check_branch
      %2753 = sbr.rel (0) target = $region109
    $region108: #{qnet_forward.1} parent=1 // pred_region
      %2754 = dma.done [#allocation4], 32
    $region109: #{qnet_forward.1} parent=1 // pred_fallthru
      _
    %2755 = vsyncpa [#allocation3], 1
    %2756 = vsyncpa [#allocation6], 1
    %2757 = vsyncpa [#allocation9], 1
    %2758 = vsyncpa [#allocation12], 1
    %2759 = vsyncpa [#allocation15], 1
    %2760 = vsyncpa [#allocation18], 1
    %2761 = vsyncpa [#allocation4], 1

</llo_original>
